<compile_context>
chip_gen: v7x
topology: tpu7x:2x2x1
jax: 0.10.0
libtpu: 0.0.40
codegen_flags: <defaults>
</compile_context>

<pallas_src>
import functools

import jax
import jax.numpy as jnp
from jax.experimental import pallas as pl
from jax.experimental.pallas import tpu as pltpu

LEAKY_SLOPE = 0.2
BN_EPS = 1e-5


def _round_up(x, m):
    return ((x + m - 1) // m) * m


def _pick_batch_tile(n):
    # Keep the per-call grid >= 2 steps (two TensorCores on v7x) while
    # amortizing per-step overhead over several images when the batch allows.
    for bt in (8, 4, 2):
        if n % bt == 0 and n // bt >= 2:
            return bt
    return 1


# ---------------------------------------------------------------------------
# Pallas kernel: 4x4 / stride-2 / pad-1 conv of `btile` images.
#   planes_ref : (btile, 4, cin_p, PL)   bf16 parity planes of the padded input
#   w_ref      : (cout, 16*cin_p)        bf16 resident weights (tap-major rows)
#   b_ref      : (cout, 1)               f32 bias
#   mask_ref   : (1, lcomp)              f32 1.0 on valid output lanes
#   o_ref      : (btile, cout, lcomp)    f32 raw conv output (lane-dense raster)
#   sum_ref/sq_ref : (1, cout, 1)        f32 per-step BN partial statistics
#   rhs_ref    : (16*cin_p, lcomp)       bf16 VMEM im2col scratch
# ---------------------------------------------------------------------------
def _conv4x4_s2_kernel(planes_ref, w_ref, b_ref, mask_ref,
                       o_ref, sum_ref, sq_ref, rhs_ref,
                       *, btile, cin_p, pw, lcomp):
    w = w_ref[...]                       # (cout, 16*cin_p) bf16, resident
    bias = b_ref[...]                    # (cout, 1) f32
    mask = mask_ref[...]                 # (1, lcomp) f32
    cout = w.shape[0]

    s_acc = jnp.zeros((cout, 1), jnp.float32)
    q_acc = jnp.zeros((cout, 1), jnp.float32)

    for b in range(btile):
        # ---- big-K im2col: 16 contiguous constant-shift slices of the 4
        #      parity planes, packed at 8-aligned sublane offsets.  No strided
        #      reads, no gathers, no scratch zeroing (every row is written).
        for p in range(2):
            for q in range(2):
                plane = planes_ref[b, 2 * p + q, :, :]        # (cin_p, PL)
                for sh in range(2):
                    for sw in range(2):
                        kh = 2 * sh + p
                        kw = 2 * sw + q
                        tap = kh * 4 + kw
                        delta = sh * pw + sw
                        rhs_ref[pl.ds(tap * cin_p, cin_p), :] = (
                            plane[:, delta:delta + lcomp])

        # ---- single MXU matmul per image (bf16 x bf16 -> f32 accumulation).
        y = jnp.dot(w, rhs_ref[...], preferred_element_type=jnp.float32)
        y = y + bias                                           # (cout, lcomp)

        # ---- lane-dense store of the raw conv output (garbage raster lanes
        #      included; the XLA glue strips them during the repack).
        o_ref[b, :, :] = y.astype(o_ref.dtype)

        # ---- BatchNorm partial statistics over the valid output lanes.
        yv = y * mask
        s_acc = s_acc + jnp.sum(yv, axis=1, keepdims=True)
        q_acc = q_acc + jnp.sum(yv * yv, axis=1, keepdims=True)

    sum_ref[0, :, :] = s_acc
    sq_ref[0, :, :] = q_acc


# ---------------------------------------------------------------------------
# Host-side helpers (tiny XLA glue).
# ---------------------------------------------------------------------------
def _to_planes(a, cin_p, pl_store):
    """(N, C, H, W) f32 activated input -> (N, 4, cin_p, pl_store) bf16 parity
    planes of the zero-padded (pad=1) input, flattened along lanes."""
    n, c, h, w = a.shape
    ph, pw = h // 2 + 1, w // 2 + 1
    ap = jnp.pad(a, ((0, 0), (0, 0), (1, 1), (1, 1)))
    planes = [ap[:, :, p::2, q::2].reshape(n, c, ph * pw)
              for p in range(2) for q in range(2)]
    pk = jnp.stack(planes, axis=1)                           # (N, 4, C, ph*pw)
    pk = jnp.pad(pk, ((0, 0), (0, 0), (0, cin_p - c), (0, pl_store - ph * pw)))
    return pk.astype(jnp.bfloat16)


def _weights_to_mat(w_oihw, cin_p):
    """(Cout, Cin, 4, 4) -> (Cout, 16*cin_p) bf16, rows ordered (kh, kw, cin)."""
    cout, cin = w_oihw.shape[0], w_oihw.shape[1]
    wt = jnp.transpose(w_oihw, (2, 3, 1, 0))                 # (4, 4, Cin, Cout)
    wt = jnp.pad(wt, ((0, 0), (0, 0), (0, cin_p - cin), (0, 0)))
    return wt.reshape(16 * cin_p, cout).T.astype(jnp.bfloat16)


def _conv4x4_s2(x_act, w_oihw, b):
    """4x4 / stride-2 / pad-1 conv (+bias) of an already-activated input.

    Returns (y, chan_sum, chan_sumsq):
      y          : (N, Cout, OH, OW) f32 raw conv output
      chan_sum   : (Cout,) f32 sum   of y over (N, OH, OW)  [for BatchNorm]
      chan_sumsq : (Cout,) f32 sum of y^2 over (N, OH, OW)
    """
    n, cin, h, wdt = x_act.shape
    assert h % 2 == 0 and wdt % 2 == 0, (h, wdt)
    cout = w_oihw.shape[0]
    oh, ow = h // 2, wdt // 2
    pw = ow + 1                                   # parity-plane raster width
    lcomp = _round_up(oh * pw, 128)               # computed output lanes
    pl_store = _round_up(lcomp + pw, 128)         # stored plane lanes (w/ slack)
    cin_p = max(8, _round_up(cin, 8))
    k = 16 * cin_p

    planes = _to_planes(x_act, cin_p, pl_store)
    wmat = _weights_to_mat(w_oihw, cin_p)
    bcol = b.reshape(cout, 1).astype(jnp.float32)
    lane = jnp.arange(lcomp, dtype=jnp.int32)
    mask = ((lane < oh * pw) & (lane % pw < ow)).astype(jnp.float32)
    mask = mask.reshape(1, lcomp)

    btile = _pick_batch_tile(n)
    g = n // btile
    kernel = functools.partial(_conv4x4_s2_kernel, btile=btile, cin_p=cin_p,
                               pw=pw, lcomp=lcomp)

    y_raster, sums, sqs = pl.pallas_call(
        kernel,
        out_shape=(
            jax.ShapeDtypeStruct((n, cout, lcomp), jnp.float32),
            jax.ShapeDtypeStruct((g, cout, 1), jnp.float32),
            jax.ShapeDtypeStruct((g, cout, 1), jnp.float32),
        ),
        grid=(g,),
        in_specs=[
            pl.BlockSpec((btile, 4, cin_p, pl_store), lambda i: (i, 0, 0, 0)),
            pl.BlockSpec((cout, k), lambda i: (0, 0)),        # resident weights
            pl.BlockSpec((cout, 1), lambda i: (0, 0)),
            pl.BlockSpec((1, lcomp), lambda i: (0, 0)),
        ],
        out_specs=(
            pl.BlockSpec((btile, cout, lcomp), lambda i: (i, 0, 0)),
            pl.BlockSpec((1, cout, 1), lambda i: (i, 0, 0)),
            pl.BlockSpec((1, cout, 1), lambda i: (i, 0, 0)),
        ),
        scratch_shapes=[pltpu.VMEM((k, lcomp), jnp.bfloat16)],
        compiler_params=pltpu.CompilerParams(
            dimension_semantics=("parallel",),
            vmem_limit_bytes=32 * 1024 * 1024),
        cost_estimate=pl.CostEstimate(
            flops=2 * n * cout * k * lcomp, transcendentals=0,
            bytes_accessed=(planes.size * 2 + wmat.size * 2
                            + n * cout * lcomp * 4)),
    )(planes, wmat, bcol, mask)

    # Strip the (OW+1)-wide raster's padding column / tail lanes (tiny glue).
    y = y_raster[:, :, :oh * pw].reshape(n, cout, oh, pw)[:, :, :, :ow]
    chan_sum = jnp.sum(sums, axis=0)[:, 0]
    chan_sq = jnp.sum(sqs, axis=0)[:, 0]
    return y, chan_sum, chan_sq


def _bn_affine(chan_sum, chan_sq, count, gamma, beta):
    """Training-mode (biased) batch stats -> per-channel scale/shift."""
    mean = chan_sum / count
    var = jnp.maximum(chan_sq / count - mean * mean, 0.0)
    scale = gamma / jnp.sqrt(var + BN_EPS)
    shift = beta - mean * scale
    return scale, shift


def _leaky(v):
    return jnp.where(v >= 0.0, v, LEAKY_SLOPE * v)


# ---------------------------------------------------------------------------
# Model.
# ---------------------------------------------------------------------------
def init_params(key, inD, d):
    def conv_param(k, cout, cin, ks):
        w = 0.02 * jax.random.normal(k, (cout, cin, ks, ks), jnp.float32)
        b = jnp.zeros((cout,), jnp.float32)
        return w, b

    keys = jax.random.split(key, 5)
    return {
        "conv1": conv_param(keys[0], d, inD, 4),
        "conv2": conv_param(keys[1], d * 2, d, 4),
        "conv3": conv_param(keys[2], d * 4, d * 2, 4),
        "conv4": conv_param(keys[3], d * 8, d * 4, 4),
        "conv5": conv_param(keys[4], 1, d * 8, 4),
        "bn2": (jnp.ones((d * 2,), jnp.float32), jnp.zeros((d * 2,), jnp.float32)),
        "bn3": (jnp.ones((d * 4,), jnp.float32), jnp.zeros((d * 4,), jnp.float32)),
        "bn4": (jnp.ones((d * 8,), jnp.float32), jnp.zeros((d * 8,), jnp.float32)),
    }


def rec_discriminator_forward(params, input1_nchw, input2_nchw):
    x = jnp.concatenate([input1_nchw, input2_nchw], axis=1).astype(jnp.float32)
    n = x.shape[0]

    # conv1 (no BN): leaky applied in the (fused) repack glue of the next layer.
    y1, _, _ = _conv4x4_s2(x, *params["conv1"])
    a1 = _leaky(y1)

    y2, s2, q2 = _conv4x4_s2(a1, *params["conv2"])
    sc2, sh2 = _bn_affine(s2, q2, n * y2.shape[2] * y2.shape[3], *params["bn2"])
    a2 = _leaky(y2 * sc2[None, :, None, None] + sh2[None, :, None, None])

    y3, s3, q3 = _conv4x4_s2(a2, *params["conv3"])
    sc3, sh3 = _bn_affine(s3, q3, n * y3.shape[2] * y3.shape[3], *params["bn3"])
    a3 = _leaky(y3 * sc3[None, :, None, None] + sh3[None, :, None, None])

    y4, s4, q4 = _conv4x4_s2(a3, *params["conv4"])
    sc4, sh4 = _bn_affine(s4, q4, n * y4.shape[2] * y4.shape[3], *params["bn4"])
    a4 = _leaky(y4 * sc4[None, :, None, None] + sh4[None, :, None, None])

    # conv5: 4x4 / stride-1 / valid conv with a single output channel (1x1
    # spatial output for the canonical 64x64 input) + sigmoid -> plain XLA.
    w5, b5 = params["conv5"]
    logits = jax.lax.conv_general_dilated(
        a4, w5, (1, 1), "VALID",
        dimension_numbers=("NCHW", "OIHW", "NCHW"),
        precision=jax.lax.Precision.HIGHEST)
    logits = logits + b5[None, :, None, None]
    return jax.nn.sigmoid(logits.reshape(-1, 1))    # matches .view(-1, 1)


# ---------------------------------------------------------------------------
# Pure-XLA f32 reference (matches the PyTorch module, training-mode BN).
# ---------------------------------------------------------------------------
def _reference_forward(params, input1_nchw, input2_nchw):
    def conv(x, w, b, stride, pad):
        y = jax.lax.conv_general_dilated(
            x, w, (stride, stride), [(pad, pad), (pad, pad)],
            dimension_numbers=("NCHW", "OIHW", "NCHW"),
            precision=jax.lax.Precision.HIGHEST)
        return y + b[None, :, None, None]

    def bn(x, gamma, beta):
        mean = jnp.mean(x, axis=(0, 2, 3), keepdims=True)
        var = jnp.mean((x - mean) ** 2, axis=(0, 2, 3), keepdims=True)
        xn = (x - mean) / jnp.sqrt(var + BN_EPS)
        return xn * gamma[None, :, None, None] + beta[None, :, None, None]

    lrelu = lambda v: jnp.where(v >= 0.0, v, LEAKY_SLOPE * v)

    x = jnp.concatenate([input1_nchw, input2_nchw], axis=1)
    x = lrelu(conv(x, *params["conv1"], 2, 1))
    x = lrelu(bn(conv(x, *params["conv2"], 2, 1), *params["bn2"]))
    x = lrelu(bn(conv(x, *params["conv3"], 2, 1), *params["bn3"]))
    x = lrelu(bn(conv(x, *params["conv4"], 2, 1), *params["bn4"]))
    x = conv(x, *params["conv5"], 1, 0)
    return jax.nn.sigmoid(x.reshape(-1, 1))


if __name__ == "__main__":
    key = jax.random.PRNGKey(0)
    k1, k2, kp = jax.random.split(key, 3)
    # Each input has 2 channels -> concatenated inD = 4, d = 8, spatial 64x64
    # (the smallest resolution for which conv5's 4x4 valid conv sees a 4x4 map).
    batch, c_half, hw, d = 2, 2, 64, 8
    inD = 2 * c_half
    input1 = jax.random.normal(k1, (batch, c_half, hw, hw), jnp.float32)
    input2 = jax.random.normal(k2, (batch, c_half, hw, hw), jnp.float32)
    params = init_params(kp, inD, d)

    fwd = jax.jit(rec_discriminator_forward)
    out = jax.block_until_ready(fwd(params, input1, input2))

    assert out.shape == (batch, 1), out.shape
    assert bool(jnp.all(jnp.isfinite(out)))
    assert bool(jnp.all((out >= 0.0) & (out <= 1.0)))

    ref = _reference_forward(params, input1, input2)
    err = float(jnp.max(jnp.abs(out.astype(jnp.float32) - ref)))
    assert err < 5e-2, f"mismatch vs XLA reference: max abs err = {err}"
    print("KERNEL_OK")
</pallas_src>

<mosaic_0001>
module attributes {stable_mosaic.version = 11 : i64} {
  func.func @_conv4x4_s2_kernel(%arg0: i32, %arg1: memref<1x4x8x1280xbf16, #tpu.memory_space<vmem>>, %arg2: memref<8x128xbf16, #tpu.memory_space<vmem>>, %arg3: memref<8x1xf32, #tpu.memory_space<vmem>>, %arg4: memref<1x1152xf32, #tpu.memory_space<vmem>>, %arg5: memref<1x8x1152xf32, #tpu.memory_space<vmem>>, %arg6: memref<1x8x1xf32, #tpu.memory_space<vmem>>, %arg7: memref<1x8x1xf32, #tpu.memory_space<vmem>>, %arg8: memref<128x1152xbf16, #tpu.memory_space<vmem>>) attributes {dimension_semantics = [#tpu.dimension_semantics<parallel>], iteration_bounds = array<i64: 2>, scalar_prefetch = 0 : i64, scratch_operands = 1 : i64, tpu.core_type = #tpu.core_type<tc>, window_params = [{transform_indices = @transform_0, window_bounds = array<i64: 1, 4, 8, 1280>}, {pipeline_mode = #tpu.pipeline_mode<synchronous>, transform_indices = @transform_1, window_bounds = array<i64: 8, 128>}, {pipeline_mode = #tpu.pipeline_mode<synchronous>, transform_indices = @transform_2, window_bounds = array<i64: 8, 1>}, {pipeline_mode = #tpu.pipeline_mode<synchronous>, transform_indices = @transform_3, window_bounds = array<i64: 1, 1152>}, {transform_indices = @transform_4, window_bounds = array<i64: 1, 8, 1152>}, {transform_indices = @transform_5, window_bounds = array<i64: 1, 8, 1>}, {transform_indices = @transform_6, window_bounds = array<i64: 1, 8, 1>}]} {
    %c0 = arith.constant 0 : index
    %c0_0 = arith.constant 0 : index
    %0 = vector.load %arg2[%c0, %c0_0] : memref<8x128xbf16, #tpu.memory_space<vmem>>, vector<8x128xbf16>
    %c0_1 = arith.constant 0 : index
    %c0_2 = arith.constant 0 : index
    %1 = vector.load %arg3[%c0_1, %c0_2] : memref<8x1xf32, #tpu.memory_space<vmem>>, vector<8x1xf32>
    %c0_3 = arith.constant 0 : index
    %c0_4 = arith.constant 0 : index
    %2 = vector.load %arg4[%c0_3, %c0_4] : memref<1x1152xf32, #tpu.memory_space<vmem>>, vector<1x1152xf32>
    %cst = arith.constant 0.000000e+00 : f32
    %3 = vector.broadcast %cst : f32 to vector<8x1xf32>
    %cst_5 = arith.constant 0.000000e+00 : f32
    %4 = vector.broadcast %cst_5 : f32 to vector<8x1xf32>
    %c0_6 = arith.constant 0 : index
    %c0_7 = arith.constant 0 : index
    %c0_8 = arith.constant 0 : index
    %c0_9 = arith.constant 0 : index
    %5 = vector.load %arg1[%c0_6, %c0_7, %c0_8, %c0_9] : memref<1x4x8x1280xbf16, #tpu.memory_space<vmem>>, vector<1x1x8x1280xbf16>
    %6 = vector.shape_cast %5 : vector<1x1x8x1280xbf16> to vector<8x1280xbf16>
    %7 = vector.extract_strided_slice %6 {offsets = [0, 0], sizes = [8, 1152], strides = [1, 1]} : vector<8x1280xbf16> to vector<8x1152xbf16>
    %c0_10 = arith.constant 0 : index
    %c0_11 = arith.constant 0 : index
    %8 = vector.load %arg8[%c0_10, %c0_11] : memref<128x1152xbf16, #tpu.memory_space<vmem>>, vector<8x1152xbf16>
    tpu.vector_store %arg8[%c0_10, %c0_11], %7 {strides = array<i32>} : memref<128x1152xbf16, #tpu.memory_space<vmem>>, vector<8x1152xbf16>,
    %9 = vector.extract_strided_slice %6 {offsets = [0, 1], sizes = [8, 1152], strides = [1, 1]} : vector<8x1280xbf16> to vector<8x1152xbf16>
    %c16 = arith.constant 16 : index
    %c0_12 = arith.constant 0 : index
    %10 = vector.load %arg8[%c16, %c0_12] : memref<128x1152xbf16, #tpu.memory_space<vmem>>, vector<8x1152xbf16>
    tpu.vector_store %arg8[%c16, %c0_12], %9 {strides = array<i32>} : memref<128x1152xbf16, #tpu.memory_space<vmem>>, vector<8x1152xbf16>,
    %11 = vector.extract_strided_slice %6 {offsets = [0, 33], sizes = [8, 1152], strides = [1, 1]} : vector<8x1280xbf16> to vector<8x1152xbf16>
    %c64 = arith.constant 64 : index
    %c0_13 = arith.constant 0 : index
    %12 = vector.load %arg8[%c64, %c0_13] : memref<128x1152xbf16, #tpu.memory_space<vmem>>, vector<8x1152xbf16>
    tpu.vector_store %arg8[%c64, %c0_13], %11 {strides = array<i32>} : memref<128x1152xbf16, #tpu.memory_space<vmem>>, vector<8x1152xbf16>,
    %13 = vector.extract_strided_slice %6 {offsets = [0, 34], sizes = [8, 1152], strides = [1, 1]} : vector<8x1280xbf16> to vector<8x1152xbf16>
    %c80 = arith.constant 80 : index
    %c0_14 = arith.constant 0 : index
    %14 = vector.load %arg8[%c80, %c0_14] : memref<128x1152xbf16, #tpu.memory_space<vmem>>, vector<8x1152xbf16>
    tpu.vector_store %arg8[%c80, %c0_14], %13 {strides = array<i32>} : memref<128x1152xbf16, #tpu.memory_space<vmem>>, vector<8x1152xbf16>,
    %c0_15 = arith.constant 0 : index
    %c1 = arith.constant 1 : index
    %c0_16 = arith.constant 0 : index
    %c0_17 = arith.constant 0 : index
    %15 = vector.load %arg1[%c0_15, %c1, %c0_16, %c0_17] : memref<1x4x8x1280xbf16, #tpu.memory_space<vmem>>, vector<1x1x8x1280xbf16>
    %16 = vector.shape_cast %15 : vector<1x1x8x1280xbf16> to vector<8x1280xbf16>
    %17 = vector.extract_strided_slice %16 {offsets = [0, 0], sizes = [8, 1152], strides = [1, 1]} : vector<8x1280xbf16> to vector<8x1152xbf16>
    %c8 = arith.constant 8 : index
    %c0_18 = arith.constant 0 : index
    %18 = vector.load %arg8[%c8, %c0_18] : memref<128x1152xbf16, #tpu.memory_space<vmem>>, vector<8x1152xbf16>
    tpu.vector_store %arg8[%c8, %c0_18], %17 {strides = array<i32>} : memref<128x1152xbf16, #tpu.memory_space<vmem>>, vector<8x1152xbf16>,
    %19 = vector.extract_strided_slice %16 {offsets = [0, 1], sizes = [8, 1152], strides = [1, 1]} : vector<8x1280xbf16> to vector<8x1152xbf16>
    %c24 = arith.constant 24 : index
    %c0_19 = arith.constant 0 : index
    %20 = vector.load %arg8[%c24, %c0_19] : memref<128x1152xbf16, #tpu.memory_space<vmem>>, vector<8x1152xbf16>
    tpu.vector_store %arg8[%c24, %c0_19], %19 {strides = array<i32>} : memref<128x1152xbf16, #tpu.memory_space<vmem>>, vector<8x1152xbf16>,
    %21 = vector.extract_strided_slice %16 {offsets = [0, 33], sizes = [8, 1152], strides = [1, 1]} : vector<8x1280xbf16> to vector<8x1152xbf16>
    %c72 = arith.constant 72 : index
    %c0_20 = arith.constant 0 : index
    %22 = vector.load %arg8[%c72, %c0_20] : memref<128x1152xbf16, #tpu.memory_space<vmem>>, vector<8x1152xbf16>
    tpu.vector_store %arg8[%c72, %c0_20], %21 {strides = array<i32>} : memref<128x1152xbf16, #tpu.memory_space<vmem>>, vector<8x1152xbf16>,
    %23 = vector.extract_strided_slice %16 {offsets = [0, 34], sizes = [8, 1152], strides = [1, 1]} : vector<8x1280xbf16> to vector<8x1152xbf16>
    %c88 = arith.constant 88 : index
    %c0_21 = arith.constant 0 : index
    %24 = vector.load %arg8[%c88, %c0_21] : memref<128x1152xbf16, #tpu.memory_space<vmem>>, vector<8x1152xbf16>
    tpu.vector_store %arg8[%c88, %c0_21], %23 {strides = array<i32>} : memref<128x1152xbf16, #tpu.memory_space<vmem>>, vector<8x1152xbf16>,
    %c0_22 = arith.constant 0 : index
    %c2 = arith.constant 2 : index
    %c0_23 = arith.constant 0 : index
    %c0_24 = arith.constant 0 : index
    %25 = vector.load %arg1[%c0_22, %c2, %c0_23, %c0_24] : memref<1x4x8x1280xbf16, #tpu.memory_space<vmem>>, vector<1x1x8x1280xbf16>
    %26 = vector.shape_cast %25 : vector<1x1x8x1280xbf16> to vector<8x1280xbf16>
    %27 = vector.extract_strided_slice %26 {offsets = [0, 0], sizes = [8, 1152], strides = [1, 1]} : vector<8x1280xbf16> to vector<8x1152xbf16>
    %c32 = arith.constant 32 : index
    %c0_25 = arith.constant 0 : index
    %28 = vector.load %arg8[%c32, %c0_25] : memref<128x1152xbf16, #tpu.memory_space<vmem>>, vector<8x1152xbf16>
    tpu.vector_store %arg8[%c32, %c0_25], %27 {strides = array<i32>} : memref<128x1152xbf16, #tpu.memory_space<vmem>>, vector<8x1152xbf16>,
    %29 = vector.extract_strided_slice %26 {offsets = [0, 1], sizes = [8, 1152], strides = [1, 1]} : vector<8x1280xbf16> to vector<8x1152xbf16>
    %c48 = arith.constant 48 : index
    %c0_26 = arith.constant 0 : index
    %30 = vector.load %arg8[%c48, %c0_26] : memref<128x1152xbf16, #tpu.memory_space<vmem>>, vector<8x1152xbf16>
    tpu.vector_store %arg8[%c48, %c0_26], %29 {strides = array<i32>} : memref<128x1152xbf16, #tpu.memory_space<vmem>>, vector<8x1152xbf16>,
    %31 = vector.extract_strided_slice %26 {offsets = [0, 33], sizes = [8, 1152], strides = [1, 1]} : vector<8x1280xbf16> to vector<8x1152xbf16>
    %c96 = arith.constant 96 : index
    %c0_27 = arith.constant 0 : index
    %32 = vector.load %arg8[%c96, %c0_27] : memref<128x1152xbf16, #tpu.memory_space<vmem>>, vector<8x1152xbf16>
    tpu.vector_store %arg8[%c96, %c0_27], %31 {strides = array<i32>} : memref<128x1152xbf16, #tpu.memory_space<vmem>>, vector<8x1152xbf16>,
    %33 = vector.extract_strided_slice %26 {offsets = [0, 34], sizes = [8, 1152], strides = [1, 1]} : vector<8x1280xbf16> to vector<8x1152xbf16>
    %c112 = arith.constant 112 : index
    %c0_28 = arith.constant 0 : index
    %34 = vector.load %arg8[%c112, %c0_28] : memref<128x1152xbf16, #tpu.memory_space<vmem>>, vector<8x1152xbf16>
    tpu.vector_store %arg8[%c112, %c0_28], %33 {strides = array<i32>} : memref<128x1152xbf16, #tpu.memory_space<vmem>>, vector<8x1152xbf16>,
    %c0_29 = arith.constant 0 : index
    %c3 = arith.constant 3 : index
    %c0_30 = arith.constant 0 : index
    %c0_31 = arith.constant 0 : index
    %35 = vector.load %arg1[%c0_29, %c3, %c0_30, %c0_31] : memref<1x4x8x1280xbf16, #tpu.memory_space<vmem>>, vector<1x1x8x1280xbf16>
    %36 = vector.shape_cast %35 : vector<1x1x8x1280xbf16> to vector<8x1280xbf16>
    %37 = vector.extract_strided_slice %36 {offsets = [0, 0], sizes = [8, 1152], strides = [1, 1]} : vector<8x1280xbf16> to vector<8x1152xbf16>
    %c40 = arith.constant 40 : index
    %c0_32 = arith.constant 0 : index
    %38 = vector.load %arg8[%c40, %c0_32] : memref<128x1152xbf16, #tpu.memory_space<vmem>>, vector<8x1152xbf16>
    tpu.vector_store %arg8[%c40, %c0_32], %37 {strides = array<i32>} : memref<128x1152xbf16, #tpu.memory_space<vmem>>, vector<8x1152xbf16>,
    %39 = vector.extract_strided_slice %36 {offsets = [0, 1], sizes = [8, 1152], strides = [1, 1]} : vector<8x1280xbf16> to vector<8x1152xbf16>
    %c56 = arith.constant 56 : index
    %c0_33 = arith.constant 0 : index
    %40 = vector.load %arg8[%c56, %c0_33] : memref<128x1152xbf16, #tpu.memory_space<vmem>>, vector<8x1152xbf16>
    tpu.vector_store %arg8[%c56, %c0_33], %39 {strides = array<i32>} : memref<128x1152xbf16, #tpu.memory_space<vmem>>, vector<8x1152xbf16>,
    %41 = vector.extract_strided_slice %36 {offsets = [0, 33], sizes = [8, 1152], strides = [1, 1]} : vector<8x1280xbf16> to vector<8x1152xbf16>
    %c104 = arith.constant 104 : index
    %c0_34 = arith.constant 0 : index
    %42 = vector.load %arg8[%c104, %c0_34] : memref<128x1152xbf16, #tpu.memory_space<vmem>>, vector<8x1152xbf16>
    tpu.vector_store %arg8[%c104, %c0_34], %41 {strides = array<i32>} : memref<128x1152xbf16, #tpu.memory_space<vmem>>, vector<8x1152xbf16>,
    %43 = vector.extract_strided_slice %36 {offsets = [0, 34], sizes = [8, 1152], strides = [1, 1]} : vector<8x1280xbf16> to vector<8x1152xbf16>
    %c120 = arith.constant 120 : index
    %c0_35 = arith.constant 0 : index
    %44 = vector.load %arg8[%c120, %c0_35] : memref<128x1152xbf16, #tpu.memory_space<vmem>>, vector<8x1152xbf16>
    tpu.vector_store %arg8[%c120, %c0_35], %43 {strides = array<i32>} : memref<128x1152xbf16, #tpu.memory_space<vmem>>, vector<8x1152xbf16>,
    %c0_36 = arith.constant 0 : index
    %c0_37 = arith.constant 0 : index
    %45 = vector.load %arg8[%c0_36, %c0_37] : memref<128x1152xbf16, #tpu.memory_space<vmem>>, vector<128x1152xbf16>
    %cst_38 = arith.constant dense<0.000000e+00> : vector<8x1152xf32>
    %46 = tpu.matmul %0, %45, %cst_38 {dimension_numbers = #tpu.dot_dimension_numbers<[1], [0], [0], [1], [0, 0, 1, 1], [], []>} : vector<8x128xbf16>, vector<128x1152xbf16>, vector<8x1152xf32> -> vector<8x1152xf32>
    %47 = vector.broadcast %1 : vector<8x1xf32> to vector<8x1152xf32>
    %48 = arith.addf %46, %47 : vector<8x1152xf32>
    %c0_39 = arith.constant 0 : index
    %c0_40 = arith.constant 0 : index
    %c0_41 = arith.constant 0 : index
    %49 = vector.load %arg5[%c0_39, %c0_40, %c0_41] : memref<1x8x1152xf32, #tpu.memory_space<vmem>>, vector<1x8x1152xf32>
    %50 = vector.shape_cast %49 : vector<1x8x1152xf32> to vector<8x1152xf32>
    %51 = vector.shape_cast %48 : vector<8x1152xf32> to vector<1x8x1152xf32>
    tpu.vector_store %arg5[%c0_39, %c0_40, %c0_41], %51 {strides = array<i32>} : memref<1x8x1152xf32, #tpu.memory_space<vmem>>, vector<1x8x1152xf32>,
    %52 = vector.broadcast %2 : vector<1x1152xf32> to vector<8x1152xf32>
    %53 = arith.mulf %48, %52 : vector<8x1152xf32>
    %cst_42 = arith.constant dense<0.000000e+00> : vector<8xf32>
    %54 = vector.multi_reduction <add>, %53, %cst_42 [1] : vector<8x1152xf32> to vector<8xf32>
    %55 = vector.shape_cast %54 : vector<8xf32> to vector<8x1xf32>
    %56 = arith.addf %3, %55 : vector<8x1xf32>
    %57 = arith.mulf %53, %53 : vector<8x1152xf32>
    %cst_43 = arith.constant dense<0.000000e+00> : vector<8xf32>
    %58 = vector.multi_reduction <add>, %57, %cst_43 [1] : vector<8x1152xf32> to vector<8xf32>
    %59 = vector.shape_cast %58 : vector<8xf32> to vector<8x1xf32>
    %60 = arith.addf %4, %59 : vector<8x1xf32>
    %c0_44 = arith.constant 0 : index
    %c0_45 = arith.constant 0 : index
    %c0_46 = arith.constant 0 : index
    %61 = vector.load %arg6[%c0_44, %c0_45, %c0_46] : memref<1x8x1xf32, #tpu.memory_space<vmem>>, vector<1x8x1xf32>
    %62 = vector.shape_cast %61 : vector<1x8x1xf32> to vector<8x1xf32>
    %63 = vector.shape_cast %56 : vector<8x1xf32> to vector<1x8x1xf32>
    tpu.vector_store %arg6[%c0_44, %c0_45, %c0_46], %63 {strides = array<i32>} : memref<1x8x1xf32, #tpu.memory_space<vmem>>, vector<1x8x1xf32>,
    %c0_47 = arith.constant 0 : index
    %c0_48 = arith.constant 0 : index
    %c0_49 = arith.constant 0 : index
    %64 = vector.load %arg7[%c0_47, %c0_48, %c0_49] : memref<1x8x1xf32, #tpu.memory_space<vmem>>, vector<1x8x1xf32>
    %65 = vector.shape_cast %64 : vector<1x8x1xf32> to vector<8x1xf32>
    %66 = vector.shape_cast %60 : vector<8x1xf32> to vector<1x8x1xf32>
    tpu.vector_store %arg7[%c0_47, %c0_48, %c0_49], %66 {strides = array<i32>} : memref<1x8x1xf32, #tpu.memory_space<vmem>>, vector<1x8x1xf32>,
    return
  }
  func.func @transform_0(%arg0: i32) -> (i32, i32, i32, i32) {
    %c0_i32 = arith.constant 0 : i32
    %c0_i32_0 = arith.constant 0 : i32
    %c0_i32_1 = arith.constant 0 : i32
    %c0_i32_2 = arith.constant 0 : i32
    return %arg0, %c0_i32, %c0_i32_0, %c0_i32_1 : i32, i32, i32, i32
  }
  func.func @transform_1(%arg0: i32) -> (i32, i32) {
    %c0_i32 = arith.constant 0 : i32
    %c0_i32_0 = arith.constant 0 : i32
    %c0_i32_1 = arith.constant 0 : i32
    return %c0_i32, %c0_i32_0 : i32, i32
  }
  func.func @transform_2(%arg0: i32) -> (i32, i32) {
    %c0_i32 = arith.constant 0 : i32
    %c0_i32_0 = arith.constant 0 : i32
    %c0_i32_1 = arith.constant 0 : i32
    return %c0_i32, %c0_i32_0 : i32, i32
  }
  func.func @transform_3(%arg0: i32) -> (i32, i32) {
    %c0_i32 = arith.constant 0 : i32
    %c0_i32_0 = arith.constant 0 : i32
    %c0_i32_1 = arith.constant 0 : i32
    return %c0_i32, %c0_i32_0 : i32, i32
  }
  func.func @transform_4(%arg0: i32) -> (i32, i32, i32) {
    %c0_i32 = arith.constant 0 : i32
    %c0_i32_0 = arith.constant 0 : i32
    %c0_i32_1 = arith.constant 0 : i32
    return %arg0, %c0_i32, %c0_i32_0 : i32, i32, i32
  }
  func.func @transform_5(%arg0: i32) -> (i32, i32, i32) {
    %c0_i32 = arith.constant 0 : i32
    %c0_i32_0 = arith.constant 0 : i32
    %c0_i32_1 = arith.constant 0 : i32
    return %arg0, %c0_i32, %c0_i32_0 : i32, i32, i32
  }
  func.func @transform_6(%arg0: i32) -> (i32, i32, i32) {
    %c0_i32 = arith.constant 0 : i32
    %c0_i32_0 = arith.constant 0 : i32
    %c0_i32_1 = arith.constant 0 : i32
    return %arg0, %c0_i32, %c0_i32_0 : i32, i32, i32
  }
}

module attributes {stable_mosaic.version = 11 : i64} {
  func.func @_conv4x4_s2_kernel(%arg0: i32, %arg1: memref<1x4x8x512xbf16, #tpu.memory_space<vmem>>, %arg2: memref<16x128xbf16, #tpu.memory_space<vmem>>, %arg3: memref<16x1xf32, #tpu.memory_space<vmem>>, %arg4: memref<1x384xf32, #tpu.memory_space<vmem>>, %arg5: memref<1x16x384xf32, #tpu.memory_space<vmem>>, %arg6: memref<1x16x1xf32, #tpu.memory_space<vmem>>, %arg7: memref<1x16x1xf32, #tpu.memory_space<vmem>>, %arg8: memref<128x384xbf16, #tpu.memory_space<vmem>>) attributes {dimension_semantics = [#tpu.dimension_semantics<parallel>], iteration_bounds = array<i64: 2>, scalar_prefetch = 0 : i64, scratch_operands = 1 : i64, tpu.core_type = #tpu.core_type<tc>, window_params = [{transform_indices = @transform_0, window_bounds = array<i64: 1, 4, 8, 512>}, {pipeline_mode = #tpu.pipeline_mode<synchronous>, transform_indices = @transform_1, window_bounds = array<i64: 16, 128>}, {pipeline_mode = #tpu.pipeline_mode<synchronous>, transform_indices = @transform_2, window_bounds = array<i64: 16, 1>}, {pipeline_mode = #tpu.pipeline_mode<synchronous>, transform_indices = @transform_3, window_bounds = array<i64: 1, 384>}, {transform_indices = @transform_4, window_bounds = array<i64: 1, 16, 384>}, {transform_indices = @transform_5, window_bounds = array<i64: 1, 16, 1>}, {transform_indices = @transform_6, window_bounds = array<i64: 1, 16, 1>}]} {
    %c0 = arith.constant 0 : index
    %c0_0 = arith.constant 0 : index
    %0 = vector.load %arg2[%c0, %c0_0] : memref<16x128xbf16, #tpu.memory_space<vmem>>, vector<16x128xbf16>
    %c0_1 = arith.constant 0 : index
    %c0_2 = arith.constant 0 : index
    %1 = vector.load %arg3[%c0_1, %c0_2] : memref<16x1xf32, #tpu.memory_space<vmem>>, vector<16x1xf32>
    %c0_3 = arith.constant 0 : index
    %c0_4 = arith.constant 0 : index
    %2 = vector.load %arg4[%c0_3, %c0_4] : memref<1x384xf32, #tpu.memory_space<vmem>>, vector<1x384xf32>
    %cst = arith.constant 0.000000e+00 : f32
    %3 = vector.broadcast %cst : f32 to vector<16x1xf32>
    %cst_5 = arith.constant 0.000000e+00 : f32
    %4 = vector.broadcast %cst_5 : f32 to vector<16x1xf32>
    %c0_6 = arith.constant 0 : index
    %c0_7 = arith.constant 0 : index
    %c0_8 = arith.constant 0 : index
    %c0_9 = arith.constant 0 : index
    %5 = vector.load %arg1[%c0_6, %c0_7, %c0_8, %c0_9] : memref<1x4x8x512xbf16, #tpu.memory_space<vmem>>, vector<1x1x8x512xbf16>
    %6 = vector.shape_cast %5 : vector<1x1x8x512xbf16> to vector<8x512xbf16>
    %7 = vector.extract_strided_slice %6 {offsets = [0, 0], sizes = [8, 384], strides = [1, 1]} : vector<8x512xbf16> to vector<8x384xbf16>
    %c0_10 = arith.constant 0 : index
    %c0_11 = arith.constant 0 : index
    %8 = vector.load %arg8[%c0_10, %c0_11] : memref<128x384xbf16, #tpu.memory_space<vmem>>, vector<8x384xbf16>
    tpu.vector_store %arg8[%c0_10, %c0_11], %7 {strides = array<i32>} : memref<128x384xbf16, #tpu.memory_space<vmem>>, vector<8x384xbf16>,
    %9 = vector.extract_strided_slice %6 {offsets = [0, 1], sizes = [8, 384], strides = [1, 1]} : vector<8x512xbf16> to vector<8x384xbf16>
    %c16 = arith.constant 16 : index
    %c0_12 = arith.constant 0 : index
    %10 = vector.load %arg8[%c16, %c0_12] : memref<128x384xbf16, #tpu.memory_space<vmem>>, vector<8x384xbf16>
    tpu.vector_store %arg8[%c16, %c0_12], %9 {strides = array<i32>} : memref<128x384xbf16, #tpu.memory_space<vmem>>, vector<8x384xbf16>,
    %11 = vector.extract_strided_slice %6 {offsets = [0, 17], sizes = [8, 384], strides = [1, 1]} : vector<8x512xbf16> to vector<8x384xbf16>
    %c64 = arith.constant 64 : index
    %c0_13 = arith.constant 0 : index
    %12 = vector.load %arg8[%c64, %c0_13] : memref<128x384xbf16, #tpu.memory_space<vmem>>, vector<8x384xbf16>
    tpu.vector_store %arg8[%c64, %c0_13], %11 {strides = array<i32>} : memref<128x384xbf16, #tpu.memory_space<vmem>>, vector<8x384xbf16>,
    %13 = vector.extract_strided_slice %6 {offsets = [0, 18], sizes = [8, 384], strides = [1, 1]} : vector<8x512xbf16> to vector<8x384xbf16>
    %c80 = arith.constant 80 : index
    %c0_14 = arith.constant 0 : index
    %14 = vector.load %arg8[%c80, %c0_14] : memref<128x384xbf16, #tpu.memory_space<vmem>>, vector<8x384xbf16>
    tpu.vector_store %arg8[%c80, %c0_14], %13 {strides = array<i32>} : memref<128x384xbf16, #tpu.memory_space<vmem>>, vector<8x384xbf16>,
    %c0_15 = arith.constant 0 : index
    %c1 = arith.constant 1 : index
    %c0_16 = arith.constant 0 : index
    %c0_17 = arith.constant 0 : index
    %15 = vector.load %arg1[%c0_15, %c1, %c0_16, %c0_17] : memref<1x4x8x512xbf16, #tpu.memory_space<vmem>>, vector<1x1x8x512xbf16>
    %16 = vector.shape_cast %15 : vector<1x1x8x512xbf16> to vector<8x512xbf16>
    %17 = vector.extract_strided_slice %16 {offsets = [0, 0], sizes = [8, 384], strides = [1, 1]} : vector<8x512xbf16> to vector<8x384xbf16>
    %c8 = arith.constant 8 : index
    %c0_18 = arith.constant 0 : index
    %18 = vector.load %arg8[%c8, %c0_18] : memref<128x384xbf16, #tpu.memory_space<vmem>>, vector<8x384xbf16>
    tpu.vector_store %arg8[%c8, %c0_18], %17 {strides = array<i32>} : memref<128x384xbf16, #tpu.memory_space<vmem>>, vector<8x384xbf16>,
    %19 = vector.extract_strided_slice %16 {offsets = [0, 1], sizes = [8, 384], strides = [1, 1]} : vector<8x512xbf16> to vector<8x384xbf16>
    %c24 = arith.constant 24 : index
    %c0_19 = arith.constant 0 : index
    %20 = vector.load %arg8[%c24, %c0_19] : memref<128x384xbf16, #tpu.memory_space<vmem>>, vector<8x384xbf16>
    tpu.vector_store %arg8[%c24, %c0_19], %19 {strides = array<i32>} : memref<128x384xbf16, #tpu.memory_space<vmem>>, vector<8x384xbf16>,
    %21 = vector.extract_strided_slice %16 {offsets = [0, 17], sizes = [8, 384], strides = [1, 1]} : vector<8x512xbf16> to vector<8x384xbf16>
    %c72 = arith.constant 72 : index
    %c0_20 = arith.constant 0 : index
    %22 = vector.load %arg8[%c72, %c0_20] : memref<128x384xbf16, #tpu.memory_space<vmem>>, vector<8x384xbf16>
    tpu.vector_store %arg8[%c72, %c0_20], %21 {strides = array<i32>} : memref<128x384xbf16, #tpu.memory_space<vmem>>, vector<8x384xbf16>,
    %23 = vector.extract_strided_slice %16 {offsets = [0, 18], sizes = [8, 384], strides = [1, 1]} : vector<8x512xbf16> to vector<8x384xbf16>
    %c88 = arith.constant 88 : index
    %c0_21 = arith.constant 0 : index
    %24 = vector.load %arg8[%c88, %c0_21] : memref<128x384xbf16, #tpu.memory_space<vmem>>, vector<8x384xbf16>
    tpu.vector_store %arg8[%c88, %c0_21], %23 {strides = array<i32>} : memref<128x384xbf16, #tpu.memory_space<vmem>>, vector<8x384xbf16>,
    %c0_22 = arith.constant 0 : index
    %c2 = arith.constant 2 : index
    %c0_23 = arith.constant 0 : index
    %c0_24 = arith.constant 0 : index
    %25 = vector.load %arg1[%c0_22, %c2, %c0_23, %c0_24] : memref<1x4x8x512xbf16, #tpu.memory_space<vmem>>, vector<1x1x8x512xbf16>
    %26 = vector.shape_cast %25 : vector<1x1x8x512xbf16> to vector<8x512xbf16>
    %27 = vector.extract_strided_slice %26 {offsets = [0, 0], sizes = [8, 384], strides = [1, 1]} : vector<8x512xbf16> to vector<8x384xbf16>
    %c32 = arith.constant 32 : index
    %c0_25 = arith.constant 0 : index
    %28 = vector.load %arg8[%c32, %c0_25] : memref<128x384xbf16, #tpu.memory_space<vmem>>, vector<8x384xbf16>
    tpu.vector_store %arg8[%c32, %c0_25], %27 {strides = array<i32>} : memref<128x384xbf16, #tpu.memory_space<vmem>>, vector<8x384xbf16>,
    %29 = vector.extract_strided_slice %26 {offsets = [0, 1], sizes = [8, 384], strides = [1, 1]} : vector<8x512xbf16> to vector<8x384xbf16>
    %c48 = arith.constant 48 : index
    %c0_26 = arith.constant 0 : index
    %30 = vector.load %arg8[%c48, %c0_26] : memref<128x384xbf16, #tpu.memory_space<vmem>>, vector<8x384xbf16>
    tpu.vector_store %arg8[%c48, %c0_26], %29 {strides = array<i32>} : memref<128x384xbf16, #tpu.memory_space<vmem>>, vector<8x384xbf16>,
    %31 = vector.extract_strided_slice %26 {offsets = [0, 17], sizes = [8, 384], strides = [1, 1]} : vector<8x512xbf16> to vector<8x384xbf16>
    %c96 = arith.constant 96 : index
    %c0_27 = arith.constant 0 : index
    %32 = vector.load %arg8[%c96, %c0_27] : memref<128x384xbf16, #tpu.memory_space<vmem>>, vector<8x384xbf16>
    tpu.vector_store %arg8[%c96, %c0_27], %31 {strides = array<i32>} : memref<128x384xbf16, #tpu.memory_space<vmem>>, vector<8x384xbf16>,
    %33 = vector.extract_strided_slice %26 {offsets = [0, 18], sizes = [8, 384], strides = [1, 1]} : vector<8x512xbf16> to vector<8x384xbf16>
    %c112 = arith.constant 112 : index
    %c0_28 = arith.constant 0 : index
    %34 = vector.load %arg8[%c112, %c0_28] : memref<128x384xbf16, #tpu.memory_space<vmem>>, vector<8x384xbf16>
    tpu.vector_store %arg8[%c112, %c0_28], %33 {strides = array<i32>} : memref<128x384xbf16, #tpu.memory_space<vmem>>, vector<8x384xbf16>,
    %c0_29 = arith.constant 0 : index
    %c3 = arith.constant 3 : index
    %c0_30 = arith.constant 0 : index
    %c0_31 = arith.constant 0 : index
    %35 = vector.load %arg1[%c0_29, %c3, %c0_30, %c0_31] : memref<1x4x8x512xbf16, #tpu.memory_space<vmem>>, vector<1x1x8x512xbf16>
    %36 = vector.shape_cast %35 : vector<1x1x8x512xbf16> to vector<8x512xbf16>
    %37 = vector.extract_strided_slice %36 {offsets = [0, 0], sizes = [8, 384], strides = [1, 1]} : vector<8x512xbf16> to vector<8x384xbf16>
    %c40 = arith.constant 40 : index
    %c0_32 = arith.constant 0 : index
    %38 = vector.load %arg8[%c40, %c0_32] : memref<128x384xbf16, #tpu.memory_space<vmem>>, vector<8x384xbf16>
    tpu.vector_store %arg8[%c40, %c0_32], %37 {strides = array<i32>} : memref<128x384xbf16, #tpu.memory_space<vmem>>, vector<8x384xbf16>,
    %39 = vector.extract_strided_slice %36 {offsets = [0, 1], sizes = [8, 384], strides = [1, 1]} : vector<8x512xbf16> to vector<8x384xbf16>
    %c56 = arith.constant 56 : index
    %c0_33 = arith.constant 0 : index
    %40 = vector.load %arg8[%c56, %c0_33] : memref<128x384xbf16, #tpu.memory_space<vmem>>, vector<8x384xbf16>
    tpu.vector_store %arg8[%c56, %c0_33], %39 {strides = array<i32>} : memref<128x384xbf16, #tpu.memory_space<vmem>>, vector<8x384xbf16>,
    %41 = vector.extract_strided_slice %36 {offsets = [0, 17], sizes = [8, 384], strides = [1, 1]} : vector<8x512xbf16> to vector<8x384xbf16>
    %c104 = arith.constant 104 : index
    %c0_34 = arith.constant 0 : index
    %42 = vector.load %arg8[%c104, %c0_34] : memref<128x384xbf16, #tpu.memory_space<vmem>>, vector<8x384xbf16>
    tpu.vector_store %arg8[%c104, %c0_34], %41 {strides = array<i32>} : memref<128x384xbf16, #tpu.memory_space<vmem>>, vector<8x384xbf16>,
    %43 = vector.extract_strided_slice %36 {offsets = [0, 18], sizes = [8, 384], strides = [1, 1]} : vector<8x512xbf16> to vector<8x384xbf16>
    %c120 = arith.constant 120 : index
    %c0_35 = arith.constant 0 : index
    %44 = vector.load %arg8[%c120, %c0_35] : memref<128x384xbf16, #tpu.memory_space<vmem>>, vector<8x384xbf16>
    tpu.vector_store %arg8[%c120, %c0_35], %43 {strides = array<i32>} : memref<128x384xbf16, #tpu.memory_space<vmem>>, vector<8x384xbf16>,
    %c0_36 = arith.constant 0 : index
    %c0_37 = arith.constant 0 : index
    %45 = vector.load %arg8[%c0_36, %c0_37] : memref<128x384xbf16, #tpu.memory_space<vmem>>, vector<128x384xbf16>
    %cst_38 = arith.constant dense<0.000000e+00> : vector<16x384xf32>
    %46 = tpu.matmul %0, %45, %cst_38 {dimension_numbers = #tpu.dot_dimension_numbers<[1], [0], [0], [1], [0, 0, 1, 1], [], []>} : vector<16x128xbf16>, vector<128x384xbf16>, vector<16x384xf32> -> vector<16x384xf32>
    %47 = vector.broadcast %1 : vector<16x1xf32> to vector<16x384xf32>
    %48 = arith.addf %46, %47 : vector<16x384xf32>
    %c0_39 = arith.constant 0 : index
    %c0_40 = arith.constant 0 : index
    %c0_41 = arith.constant 0 : index
    %49 = vector.load %arg5[%c0_39, %c0_40, %c0_41] : memref<1x16x384xf32, #tpu.memory_space<vmem>>, vector<1x16x384xf32>
    %50 = vector.shape_cast %49 : vector<1x16x384xf32> to vector<16x384xf32>
    %51 = vector.shape_cast %48 : vector<16x384xf32> to vector<1x16x384xf32>
    tpu.vector_store %arg5[%c0_39, %c0_40, %c0_41], %51 {strides = array<i32>} : memref<1x16x384xf32, #tpu.memory_space<vmem>>, vector<1x16x384xf32>,
    %52 = vector.broadcast %2 : vector<1x384xf32> to vector<16x384xf32>
    %53 = arith.mulf %48, %52 : vector<16x384xf32>
    %cst_42 = arith.constant dense<0.000000e+00> : vector<16xf32>
    %54 = vector.multi_reduction <add>, %53, %cst_42 [1] : vector<16x384xf32> to vector<16xf32>
    %55 = vector.shape_cast %54 : vector<16xf32> to vector<16x1xf32>
    %56 = arith.addf %3, %55 : vector<16x1xf32>
    %57 = arith.mulf %53, %53 : vector<16x384xf32>
    %cst_43 = arith.constant dense<0.000000e+00> : vector<16xf32>
    %58 = vector.multi_reduction <add>, %57, %cst_43 [1] : vector<16x384xf32> to vector<16xf32>
    %59 = vector.shape_cast %58 : vector<16xf32> to vector<16x1xf32>
    %60 = arith.addf %4, %59 : vector<16x1xf32>
    %c0_44 = arith.constant 0 : index
    %c0_45 = arith.constant 0 : index
    %c0_46 = arith.constant 0 : index
    %61 = vector.load %arg6[%c0_44, %c0_45, %c0_46] : memref<1x16x1xf32, #tpu.memory_space<vmem>>, vector<1x16x1xf32>
    %62 = vector.shape_cast %61 : vector<1x16x1xf32> to vector<16x1xf32>
    %63 = vector.shape_cast %56 : vector<16x1xf32> to vector<1x16x1xf32>
    tpu.vector_store %arg6[%c0_44, %c0_45, %c0_46], %63 {strides = array<i32>} : memref<1x16x1xf32, #tpu.memory_space<vmem>>, vector<1x16x1xf32>,
    %c0_47 = arith.constant 0 : index
    %c0_48 = arith.constant 0 : index
    %c0_49 = arith.constant 0 : index
    %64 = vector.load %arg7[%c0_47, %c0_48, %c0_49] : memref<1x16x1xf32, #tpu.memory_space<vmem>>, vector<1x16x1xf32>
    %65 = vector.shape_cast %64 : vector<1x16x1xf32> to vector<16x1xf32>
    %66 = vector.shape_cast %60 : vector<16x1xf32> to vector<1x16x1xf32>
    tpu.vector_store %arg7[%c0_47, %c0_48, %c0_49], %66 {strides = array<i32>} : memref<1x16x1xf32, #tpu.memory_space<vmem>>, vector<1x16x1xf32>,
    return
  }
  func.func @transform_0(%arg0: i32) -> (i32, i32, i32, i32) {
    %c0_i32 = arith.constant 0 : i32
    %c0_i32_0 = arith.constant 0 : i32
    %c0_i32_1 = arith.constant 0 : i32
    %c0_i32_2 = arith.constant 0 : i32
    return %arg0, %c0_i32, %c0_i32_0, %c0_i32_1 : i32, i32, i32, i32
  }
  func.func @transform_1(%arg0: i32) -> (i32, i32) {
    %c0_i32 = arith.constant 0 : i32
    %c0_i32_0 = arith.constant 0 : i32
    %c0_i32_1 = arith.constant 0 : i32
    return %c0_i32, %c0_i32_0 : i32, i32
  }
  func.func @transform_2(%arg0: i32) -> (i32, i32) {
    %c0_i32 = arith.constant 0 : i32
    %c0_i32_0 = arith.constant 0 : i32
    %c0_i32_1 = arith.constant 0 : i32
    return %c0_i32, %c0_i32_0 : i32, i32
  }
  func.func @transform_3(%arg0: i32) -> (i32, i32) {
    %c0_i32 = arith.constant 0 : i32
    %c0_i32_0 = arith.constant 0 : i32
    %c0_i32_1 = arith.constant 0 : i32
    return %c0_i32, %c0_i32_0 : i32, i32
  }
  func.func @transform_4(%arg0: i32) -> (i32, i32, i32) {
    %c0_i32 = arith.constant 0 : i32
    %c0_i32_0 = arith.constant 0 : i32
    %c0_i32_1 = arith.constant 0 : i32
    return %arg0, %c0_i32, %c0_i32_0 : i32, i32, i32
  }
  func.func @transform_5(%arg0: i32) -> (i32, i32, i32) {
    %c0_i32 = arith.constant 0 : i32
    %c0_i32_0 = arith.constant 0 : i32
    %c0_i32_1 = arith.constant 0 : i32
    return %arg0, %c0_i32, %c0_i32_0 : i32, i32, i32
  }
  func.func @transform_6(%arg0: i32) -> (i32, i32, i32) {
    %c0_i32 = arith.constant 0 : i32
    %c0_i32_0 = arith.constant 0 : i32
    %c0_i32_1 = arith.constant 0 : i32
    return %arg0, %c0_i32, %c0_i32_0 : i32, i32, i32
  }
}

module attributes {stable_mosaic.version = 11 : i64} {
  func.func @_conv4x4_s2_kernel(%arg0: i32, %arg1: memref<1x4x16x256xbf16, #tpu.memory_space<vmem>>, %arg2: memref<32x256xbf16, #tpu.memory_space<vmem>>, %arg3: memref<32x1xf32, #tpu.memory_space<vmem>>, %arg4: memref<1x128xf32, #tpu.memory_space<vmem>>, %arg5: memref<1x32x128xf32, #tpu.memory_space<vmem>>, %arg6: memref<1x32x1xf32, #tpu.memory_space<vmem>>, %arg7: memref<1x32x1xf32, #tpu.memory_space<vmem>>, %arg8: memref<256x128xbf16, #tpu.memory_space<vmem>>) attributes {dimension_semantics = [#tpu.dimension_semantics<parallel>], iteration_bounds = array<i64: 2>, scalar_prefetch = 0 : i64, scratch_operands = 1 : i64, tpu.core_type = #tpu.core_type<tc>, window_params = [{transform_indices = @transform_0, window_bounds = array<i64: 1, 4, 16, 256>}, {pipeline_mode = #tpu.pipeline_mode<synchronous>, transform_indices = @transform_1, window_bounds = array<i64: 32, 256>}, {pipeline_mode = #tpu.pipeline_mode<synchronous>, transform_indices = @transform_2, window_bounds = array<i64: 32, 1>}, {pipeline_mode = #tpu.pipeline_mode<synchronous>, transform_indices = @transform_3, window_bounds = array<i64: 1, 128>}, {transform_indices = @transform_4, window_bounds = array<i64: 1, 32, 128>}, {transform_indices = @transform_5, window_bounds = array<i64: 1, 32, 1>}, {transform_indices = @transform_6, window_bounds = array<i64: 1, 32, 1>}]} {
    %c0 = arith.constant 0 : index
    %c0_0 = arith.constant 0 : index
    %0 = vector.load %arg2[%c0, %c0_0] : memref<32x256xbf16, #tpu.memory_space<vmem>>, vector<32x256xbf16>
    %c0_1 = arith.constant 0 : index
    %c0_2 = arith.constant 0 : index
    %1 = vector.load %arg3[%c0_1, %c0_2] : memref<32x1xf32, #tpu.memory_space<vmem>>, vector<32x1xf32>
    %c0_3 = arith.constant 0 : index
    %c0_4 = arith.constant 0 : index
    %2 = vector.load %arg4[%c0_3, %c0_4] : memref<1x128xf32, #tpu.memory_space<vmem>>, vector<1x128xf32>
    %cst = arith.constant 0.000000e+00 : f32
    %3 = vector.broadcast %cst : f32 to vector<32x1xf32>
    %cst_5 = arith.constant 0.000000e+00 : f32
    %4 = vector.broadcast %cst_5 : f32 to vector<32x1xf32>
    %c0_6 = arith.constant 0 : index
    %c0_7 = arith.constant 0 : index
    %c0_8 = arith.constant 0 : index
    %c0_9 = arith.constant 0 : index
    %5 = vector.load %arg1[%c0_6, %c0_7, %c0_8, %c0_9] : memref<1x4x16x256xbf16, #tpu.memory_space<vmem>>, vector<1x1x16x256xbf16>
    %6 = vector.shape_cast %5 : vector<1x1x16x256xbf16> to vector<16x256xbf16>
    %7 = vector.extract_strided_slice %6 {offsets = [0, 0], sizes = [16, 128], strides = [1, 1]} : vector<16x256xbf16> to vector<16x128xbf16>
    %c0_10 = arith.constant 0 : index
    %c0_11 = arith.constant 0 : index
    %8 = vector.load %arg8[%c0_10, %c0_11] : memref<256x128xbf16, #tpu.memory_space<vmem>>, vector<16x128xbf16>
    tpu.vector_store %arg8[%c0_10, %c0_11], %7 {strides = array<i32>} : memref<256x128xbf16, #tpu.memory_space<vmem>>, vector<16x128xbf16>,
    %9 = vector.extract_strided_slice %6 {offsets = [0, 1], sizes = [16, 128], strides = [1, 1]} : vector<16x256xbf16> to vector<16x128xbf16>
    %c32 = arith.constant 32 : index
    %c0_12 = arith.constant 0 : index
    %10 = vector.load %arg8[%c32, %c0_12] : memref<256x128xbf16, #tpu.memory_space<vmem>>, vector<16x128xbf16>
    tpu.vector_store %arg8[%c32, %c0_12], %9 {strides = array<i32>} : memref<256x128xbf16, #tpu.memory_space<vmem>>, vector<16x128xbf16>,
    %11 = vector.extract_strided_slice %6 {offsets = [0, 9], sizes = [16, 128], strides = [1, 1]} : vector<16x256xbf16> to vector<16x128xbf16>
    %c128 = arith.constant 128 : index
    %c0_13 = arith.constant 0 : index
    %12 = vector.load %arg8[%c128, %c0_13] : memref<256x128xbf16, #tpu.memory_space<vmem>>, vector<16x128xbf16>
    tpu.vector_store %arg8[%c128, %c0_13], %11 {strides = array<i32>} : memref<256x128xbf16, #tpu.memory_space<vmem>>, vector<16x128xbf16>,
    %13 = vector.extract_strided_slice %6 {offsets = [0, 10], sizes = [16, 128], strides = [1, 1]} : vector<16x256xbf16> to vector<16x128xbf16>
    %c160 = arith.constant 160 : index
    %c0_14 = arith.constant 0 : index
    %14 = vector.load %arg8[%c160, %c0_14] : memref<256x128xbf16, #tpu.memory_space<vmem>>, vector<16x128xbf16>
    tpu.vector_store %arg8[%c160, %c0_14], %13 {strides = array<i32>} : memref<256x128xbf16, #tpu.memory_space<vmem>>, vector<16x128xbf16>,
    %c0_15 = arith.constant 0 : index
    %c1 = arith.constant 1 : index
    %c0_16 = arith.constant 0 : index
    %c0_17 = arith.constant 0 : index
    %15 = vector.load %arg1[%c0_15, %c1, %c0_16, %c0_17] : memref<1x4x16x256xbf16, #tpu.memory_space<vmem>>, vector<1x1x16x256xbf16>
    %16 = vector.shape_cast %15 : vector<1x1x16x256xbf16> to vector<16x256xbf16>
    %17 = vector.extract_strided_slice %16 {offsets = [0, 0], sizes = [16, 128], strides = [1, 1]} : vector<16x256xbf16> to vector<16x128xbf16>
    %c16 = arith.constant 16 : index
    %c0_18 = arith.constant 0 : index
    %18 = vector.load %arg8[%c16, %c0_18] : memref<256x128xbf16, #tpu.memory_space<vmem>>, vector<16x128xbf16>
    tpu.vector_store %arg8[%c16, %c0_18], %17 {strides = array<i32>} : memref<256x128xbf16, #tpu.memory_space<vmem>>, vector<16x128xbf16>,
    %19 = vector.extract_strided_slice %16 {offsets = [0, 1], sizes = [16, 128], strides = [1, 1]} : vector<16x256xbf16> to vector<16x128xbf16>
    %c48 = arith.constant 48 : index
    %c0_19 = arith.constant 0 : index
    %20 = vector.load %arg8[%c48, %c0_19] : memref<256x128xbf16, #tpu.memory_space<vmem>>, vector<16x128xbf16>
    tpu.vector_store %arg8[%c48, %c0_19], %19 {strides = array<i32>} : memref<256x128xbf16, #tpu.memory_space<vmem>>, vector<16x128xbf16>,
    %21 = vector.extract_strided_slice %16 {offsets = [0, 9], sizes = [16, 128], strides = [1, 1]} : vector<16x256xbf16> to vector<16x128xbf16>
    %c144 = arith.constant 144 : index
    %c0_20 = arith.constant 0 : index
    %22 = vector.load %arg8[%c144, %c0_20] : memref<256x128xbf16, #tpu.memory_space<vmem>>, vector<16x128xbf16>
    tpu.vector_store %arg8[%c144, %c0_20], %21 {strides = array<i32>} : memref<256x128xbf16, #tpu.memory_space<vmem>>, vector<16x128xbf16>,
    %23 = vector.extract_strided_slice %16 {offsets = [0, 10], sizes = [16, 128], strides = [1, 1]} : vector<16x256xbf16> to vector<16x128xbf16>
    %c176 = arith.constant 176 : index
    %c0_21 = arith.constant 0 : index
    %24 = vector.load %arg8[%c176, %c0_21] : memref<256x128xbf16, #tpu.memory_space<vmem>>, vector<16x128xbf16>
    tpu.vector_store %arg8[%c176, %c0_21], %23 {strides = array<i32>} : memref<256x128xbf16, #tpu.memory_space<vmem>>, vector<16x128xbf16>,
    %c0_22 = arith.constant 0 : index
    %c2 = arith.constant 2 : index
    %c0_23 = arith.constant 0 : index
    %c0_24 = arith.constant 0 : index
    %25 = vector.load %arg1[%c0_22, %c2, %c0_23, %c0_24] : memref<1x4x16x256xbf16, #tpu.memory_space<vmem>>, vector<1x1x16x256xbf16>
    %26 = vector.shape_cast %25 : vector<1x1x16x256xbf16> to vector<16x256xbf16>
    %27 = vector.extract_strided_slice %26 {offsets = [0, 0], sizes = [16, 128], strides = [1, 1]} : vector<16x256xbf16> to vector<16x128xbf16>
    %c64 = arith.constant 64 : index
    %c0_25 = arith.constant 0 : index
    %28 = vector.load %arg8[%c64, %c0_25] : memref<256x128xbf16, #tpu.memory_space<vmem>>, vector<16x128xbf16>
    tpu.vector_store %arg8[%c64, %c0_25], %27 {strides = array<i32>} : memref<256x128xbf16, #tpu.memory_space<vmem>>, vector<16x128xbf16>,
    %29 = vector.extract_strided_slice %26 {offsets = [0, 1], sizes = [16, 128], strides = [1, 1]} : vector<16x256xbf16> to vector<16x128xbf16>
    %c96 = arith.constant 96 : index
    %c0_26 = arith.constant 0 : index
    %30 = vector.load %arg8[%c96, %c0_26] : memref<256x128xbf16, #tpu.memory_space<vmem>>, vector<16x128xbf16>
    tpu.vector_store %arg8[%c96, %c0_26], %29 {strides = array<i32>} : memref<256x128xbf16, #tpu.memory_space<vmem>>, vector<16x128xbf16>,
    %31 = vector.extract_strided_slice %26 {offsets = [0, 9], sizes = [16, 128], strides = [1, 1]} : vector<16x256xbf16> to vector<16x128xbf16>
    %c192 = arith.constant 192 : index
    %c0_27 = arith.constant 0 : index
    %32 = vector.load %arg8[%c192, %c0_27] : memref<256x128xbf16, #tpu.memory_space<vmem>>, vector<16x128xbf16>
    tpu.vector_store %arg8[%c192, %c0_27], %31 {strides = array<i32>} : memref<256x128xbf16, #tpu.memory_space<vmem>>, vector<16x128xbf16>,
    %33 = vector.extract_strided_slice %26 {offsets = [0, 10], sizes = [16, 128], strides = [1, 1]} : vector<16x256xbf16> to vector<16x128xbf16>
    %c224 = arith.constant 224 : index
    %c0_28 = arith.constant 0 : index
    %34 = vector.load %arg8[%c224, %c0_28] : memref<256x128xbf16, #tpu.memory_space<vmem>>, vector<16x128xbf16>
    tpu.vector_store %arg8[%c224, %c0_28], %33 {strides = array<i32>} : memref<256x128xbf16, #tpu.memory_space<vmem>>, vector<16x128xbf16>,
    %c0_29 = arith.constant 0 : index
    %c3 = arith.constant 3 : index
    %c0_30 = arith.constant 0 : index
    %c0_31 = arith.constant 0 : index
    %35 = vector.load %arg1[%c0_29, %c3, %c0_30, %c0_31] : memref<1x4x16x256xbf16, #tpu.memory_space<vmem>>, vector<1x1x16x256xbf16>
    %36 = vector.shape_cast %35 : vector<1x1x16x256xbf16> to vector<16x256xbf16>
    %37 = vector.extract_strided_slice %36 {offsets = [0, 0], sizes = [16, 128], strides = [1, 1]} : vector<16x256xbf16> to vector<16x128xbf16>
    %c80 = arith.constant 80 : index
    %c0_32 = arith.constant 0 : index
    %38 = vector.load %arg8[%c80, %c0_32] : memref<256x128xbf16, #tpu.memory_space<vmem>>, vector<16x128xbf16>
    tpu.vector_store %arg8[%c80, %c0_32], %37 {strides = array<i32>} : memref<256x128xbf16, #tpu.memory_space<vmem>>, vector<16x128xbf16>,
    %39 = vector.extract_strided_slice %36 {offsets = [0, 1], sizes = [16, 128], strides = [1, 1]} : vector<16x256xbf16> to vector<16x128xbf16>
    %c112 = arith.constant 112 : index
    %c0_33 = arith.constant 0 : index
    %40 = vector.load %arg8[%c112, %c0_33] : memref<256x128xbf16, #tpu.memory_space<vmem>>, vector<16x128xbf16>
    tpu.vector_store %arg8[%c112, %c0_33], %39 {strides = array<i32>} : memref<256x128xbf16, #tpu.memory_space<vmem>>, vector<16x128xbf16>,
    %41 = vector.extract_strided_slice %36 {offsets = [0, 9], sizes = [16, 128], strides = [1, 1]} : vector<16x256xbf16> to vector<16x128xbf16>
    %c208 = arith.constant 208 : index
    %c0_34 = arith.constant 0 : index
    %42 = vector.load %arg8[%c208, %c0_34] : memref<256x128xbf16, #tpu.memory_space<vmem>>, vector<16x128xbf16>
    tpu.vector_store %arg8[%c208, %c0_34], %41 {strides = array<i32>} : memref<256x128xbf16, #tpu.memory_space<vmem>>, vector<16x128xbf16>,
    %43 = vector.extract_strided_slice %36 {offsets = [0, 10], sizes = [16, 128], strides = [1, 1]} : vector<16x256xbf16> to vector<16x128xbf16>
    %c240 = arith.constant 240 : index
    %c0_35 = arith.constant 0 : index
    %44 = vector.load %arg8[%c240, %c0_35] : memref<256x128xbf16, #tpu.memory_space<vmem>>, vector<16x128xbf16>
    tpu.vector_store %arg8[%c240, %c0_35], %43 {strides = array<i32>} : memref<256x128xbf16, #tpu.memory_space<vmem>>, vector<16x128xbf16>,
    %c0_36 = arith.constant 0 : index
    %c0_37 = arith.constant 0 : index
    %45 = vector.load %arg8[%c0_36, %c0_37] : memref<256x128xbf16, #tpu.memory_space<vmem>>, vector<256x128xbf16>
    %cst_38 = arith.constant dense<0.000000e+00> : vector<32x128xf32>
    %46 = tpu.matmul %0, %45, %cst_38 {dimension_numbers = #tpu.dot_dimension_numbers<[1], [0], [0], [1], [0, 0, 1, 1], [], []>} : vector<32x256xbf16>, vector<256x128xbf16>, vector<32x128xf32> -> vector<32x128xf32>
    %47 = vector.broadcast %1 : vector<32x1xf32> to vector<32x128xf32>
    %48 = arith.addf %46, %47 : vector<32x128xf32>
    %c0_39 = arith.constant 0 : index
    %c0_40 = arith.constant 0 : index
    %c0_41 = arith.constant 0 : index
    %49 = vector.load %arg5[%c0_39, %c0_40, %c0_41] : memref<1x32x128xf32, #tpu.memory_space<vmem>>, vector<1x32x128xf32>
    %50 = vector.shape_cast %49 : vector<1x32x128xf32> to vector<32x128xf32>
    %51 = vector.shape_cast %48 : vector<32x128xf32> to vector<1x32x128xf32>
    tpu.vector_store %arg5[%c0_39, %c0_40, %c0_41], %51 {strides = array<i32>} : memref<1x32x128xf32, #tpu.memory_space<vmem>>, vector<1x32x128xf32>,
    %52 = vector.broadcast %2 : vector<1x128xf32> to vector<32x128xf32>
    %53 = arith.mulf %48, %52 : vector<32x128xf32>
    %cst_42 = arith.constant dense<0.000000e+00> : vector<32xf32>
    %54 = vector.multi_reduction <add>, %53, %cst_42 [1] : vector<32x128xf32> to vector<32xf32>
    %55 = vector.shape_cast %54 : vector<32xf32> to vector<32x1xf32>
    %56 = arith.addf %3, %55 : vector<32x1xf32>
    %57 = arith.mulf %53, %53 : vector<32x128xf32>
    %cst_43 = arith.constant dense<0.000000e+00> : vector<32xf32>
    %58 = vector.multi_reduction <add>, %57, %cst_43 [1] : vector<32x128xf32> to vector<32xf32>
    %59 = vector.shape_cast %58 : vector<32xf32> to vector<32x1xf32>
    %60 = arith.addf %4, %59 : vector<32x1xf32>
    %c0_44 = arith.constant 0 : index
    %c0_45 = arith.constant 0 : index
    %c0_46 = arith.constant 0 : index
    %61 = vector.load %arg6[%c0_44, %c0_45, %c0_46] : memref<1x32x1xf32, #tpu.memory_space<vmem>>, vector<1x32x1xf32>
    %62 = vector.shape_cast %61 : vector<1x32x1xf32> to vector<32x1xf32>
    %63 = vector.shape_cast %56 : vector<32x1xf32> to vector<1x32x1xf32>
    tpu.vector_store %arg6[%c0_44, %c0_45, %c0_46], %63 {strides = array<i32>} : memref<1x32x1xf32, #tpu.memory_space<vmem>>, vector<1x32x1xf32>,
    %c0_47 = arith.constant 0 : index
    %c0_48 = arith.constant 0 : index
    %c0_49 = arith.constant 0 : index
    %64 = vector.load %arg7[%c0_47, %c0_48, %c0_49] : memref<1x32x1xf32, #tpu.memory_space<vmem>>, vector<1x32x1xf32>
    %65 = vector.shape_cast %64 : vector<1x32x1xf32> to vector<32x1xf32>
    %66 = vector.shape_cast %60 : vector<32x1xf32> to vector<1x32x1xf32>
    tpu.vector_store %arg7[%c0_47, %c0_48, %c0_49], %66 {strides = array<i32>} : memref<1x32x1xf32, #tpu.memory_space<vmem>>, vector<1x32x1xf32>,
    return
  }
  func.func @transform_0(%arg0: i32) -> (i32, i32, i32, i32) {
    %c0_i32 = arith.constant 0 : i32
    %c0_i32_0 = arith.constant 0 : i32
    %c0_i32_1 = arith.constant 0 : i32
    %c0_i32_2 = arith.constant 0 : i32
    return %arg0, %c0_i32, %c0_i32_0, %c0_i32_1 : i32, i32, i32, i32
  }
  func.func @transform_1(%arg0: i32) -> (i32, i32) {
    %c0_i32 = arith.constant 0 : i32
    %c0_i32_0 = arith.constant 0 : i32
    %c0_i32_1 = arith.constant 0 : i32
    return %c0_i32, %c0_i32_0 : i32, i32
  }
  func.func @transform_2(%arg0: i32) -> (i32, i32) {
    %c0_i32 = arith.constant 0 : i32
    %c0_i32_0 = arith.constant 0 : i32
    %c0_i32_1 = arith.constant 0 : i32
    return %c0_i32, %c0_i32_0 : i32, i32
  }
  func.func @transform_3(%arg0: i32) -> (i32, i32) {
    %c0_i32 = arith.constant 0 : i32
    %c0_i32_0 = arith.constant 0 : i32
    %c0_i32_1 = arith.constant 0 : i32
    return %c0_i32, %c0_i32_0 : i32, i32
  }
  func.func @transform_4(%arg0: i32) -> (i32, i32, i32) {
    %c0_i32 = arith.constant 0 : i32
    %c0_i32_0 = arith.constant 0 : i32
    %c0_i32_1 = arith.constant 0 : i32
    return %arg0, %c0_i32, %c0_i32_0 : i32, i32, i32
  }
  func.func @transform_5(%arg0: i32) -> (i32, i32, i32) {
    %c0_i32 = arith.constant 0 : i32
    %c0_i32_0 = arith.constant 0 : i32
    %c0_i32_1 = arith.constant 0 : i32
    return %arg0, %c0_i32, %c0_i32_0 : i32, i32, i32
  }
  func.func @transform_6(%arg0: i32) -> (i32, i32, i32) {
    %c0_i32 = arith.constant 0 : i32
    %c0_i32_0 = arith.constant 0 : i32
    %c0_i32_1 = arith.constant 0 : i32
    return %arg0, %c0_i32, %c0_i32_0 : i32, i32, i32
  }
}

module attributes {stable_mosaic.version = 11 : i64} {
  func.func @_conv4x4_s2_kernel(%arg0: i32, %arg1: memref<1x4x32x256xbf16, #tpu.memory_space<vmem>>, %arg2: memref<64x512xbf16, #tpu.memory_space<vmem>>, %arg3: memref<64x1xf32, #tpu.memory_space<vmem>>, %arg4: memref<1x128xf32, #tpu.memory_space<vmem>>, %arg5: memref<1x64x128xf32, #tpu.memory_space<vmem>>, %arg6: memref<1x64x1xf32, #tpu.memory_space<vmem>>, %arg7: memref<1x64x1xf32, #tpu.memory_space<vmem>>, %arg8: memref<512x128xbf16, #tpu.memory_space<vmem>>) attributes {dimension_semantics = [#tpu.dimension_semantics<parallel>], iteration_bounds = array<i64: 2>, scalar_prefetch = 0 : i64, scratch_operands = 1 : i64, tpu.core_type = #tpu.core_type<tc>, window_params = [{transform_indices = @transform_0, window_bounds = array<i64: 1, 4, 32, 256>}, {pipeline_mode = #tpu.pipeline_mode<synchronous>, transform_indices = @transform_1, window_bounds = array<i64: 64, 512>}, {pipeline_mode = #tpu.pipeline_mode<synchronous>, transform_indices = @transform_2, window_bounds = array<i64: 64, 1>}, {pipeline_mode = #tpu.pipeline_mode<synchronous>, transform_indices = @transform_3, window_bounds = array<i64: 1, 128>}, {transform_indices = @transform_4, window_bounds = array<i64: 1, 64, 128>}, {transform_indices = @transform_5, window_bounds = array<i64: 1, 64, 1>}, {transform_indices = @transform_6, window_bounds = array<i64: 1, 64, 1>}]} {
    %c0 = arith.constant 0 : index
    %c0_0 = arith.constant 0 : index
    %0 = vector.load %arg2[%c0, %c0_0] : memref<64x512xbf16, #tpu.memory_space<vmem>>, vector<64x512xbf16>
    %c0_1 = arith.constant 0 : index
    %c0_2 = arith.constant 0 : index
    %1 = vector.load %arg3[%c0_1, %c0_2] : memref<64x1xf32, #tpu.memory_space<vmem>>, vector<64x1xf32>
    %c0_3 = arith.constant 0 : index
    %c0_4 = arith.constant 0 : index
    %2 = vector.load %arg4[%c0_3, %c0_4] : memref<1x128xf32, #tpu.memory_space<vmem>>, vector<1x128xf32>
    %cst = arith.constant 0.000000e+00 : f32
    %3 = vector.broadcast %cst : f32 to vector<64x1xf32>
    %cst_5 = arith.constant 0.000000e+00 : f32
    %4 = vector.broadcast %cst_5 : f32 to vector<64x1xf32>
    %c0_6 = arith.constant 0 : index
    %c0_7 = arith.constant 0 : index
    %c0_8 = arith.constant 0 : index
    %c0_9 = arith.constant 0 : index
    %5 = vector.load %arg1[%c0_6, %c0_7, %c0_8, %c0_9] : memref<1x4x32x256xbf16, #tpu.memory_space<vmem>>, vector<1x1x32x256xbf16>
    %6 = vector.shape_cast %5 : vector<1x1x32x256xbf16> to vector<32x256xbf16>
    %7 = vector.extract_strided_slice %6 {offsets = [0, 0], sizes = [32, 128], strides = [1, 1]} : vector<32x256xbf16> to vector<32x128xbf16>
    %c0_10 = arith.constant 0 : index
    %c0_11 = arith.constant 0 : index
    %8 = vector.load %arg8[%c0_10, %c0_11] : memref<512x128xbf16, #tpu.memory_space<vmem>>, vector<32x128xbf16>
    tpu.vector_store %arg8[%c0_10, %c0_11], %7 {strides = array<i32>} : memref<512x128xbf16, #tpu.memory_space<vmem>>, vector<32x128xbf16>,
    %9 = vector.extract_strided_slice %6 {offsets = [0, 1], sizes = [32, 128], strides = [1, 1]} : vector<32x256xbf16> to vector<32x128xbf16>
    %c64 = arith.constant 64 : index
    %c0_12 = arith.constant 0 : index
    %10 = vector.load %arg8[%c64, %c0_12] : memref<512x128xbf16, #tpu.memory_space<vmem>>, vector<32x128xbf16>
    tpu.vector_store %arg8[%c64, %c0_12], %9 {strides = array<i32>} : memref<512x128xbf16, #tpu.memory_space<vmem>>, vector<32x128xbf16>,
    %11 = vector.extract_strided_slice %6 {offsets = [0, 5], sizes = [32, 128], strides = [1, 1]} : vector<32x256xbf16> to vector<32x128xbf16>
    %c256 = arith.constant 256 : index
    %c0_13 = arith.constant 0 : index
    %12 = vector.load %arg8[%c256, %c0_13] : memref<512x128xbf16, #tpu.memory_space<vmem>>, vector<32x128xbf16>
    tpu.vector_store %arg8[%c256, %c0_13], %11 {strides = array<i32>} : memref<512x128xbf16, #tpu.memory_space<vmem>>, vector<32x128xbf16>,
    %13 = vector.extract_strided_slice %6 {offsets = [0, 6], sizes = [32, 128], strides = [1, 1]} : vector<32x256xbf16> to vector<32x128xbf16>
    %c320 = arith.constant 320 : index
    %c0_14 = arith.constant 0 : index
    %14 = vector.load %arg8[%c320, %c0_14] : memref<512x128xbf16, #tpu.memory_space<vmem>>, vector<32x128xbf16>
    tpu.vector_store %arg8[%c320, %c0_14], %13 {strides = array<i32>} : memref<512x128xbf16, #tpu.memory_space<vmem>>, vector<32x128xbf16>,
    %c0_15 = arith.constant 0 : index
    %c1 = arith.constant 1 : index
    %c0_16 = arith.constant 0 : index
    %c0_17 = arith.constant 0 : index
    %15 = vector.load %arg1[%c0_15, %c1, %c0_16, %c0_17] : memref<1x4x32x256xbf16, #tpu.memory_space<vmem>>, vector<1x1x32x256xbf16>
    %16 = vector.shape_cast %15 : vector<1x1x32x256xbf16> to vector<32x256xbf16>
    %17 = vector.extract_strided_slice %16 {offsets = [0, 0], sizes = [32, 128], strides = [1, 1]} : vector<32x256xbf16> to vector<32x128xbf16>
    %c32 = arith.constant 32 : index
    %c0_18 = arith.constant 0 : index
    %18 = vector.load %arg8[%c32, %c0_18] : memref<512x128xbf16, #tpu.memory_space<vmem>>, vector<32x128xbf16>
    tpu.vector_store %arg8[%c32, %c0_18], %17 {strides = array<i32>} : memref<512x128xbf16, #tpu.memory_space<vmem>>, vector<32x128xbf16>,
    %19 = vector.extract_strided_slice %16 {offsets = [0, 1], sizes = [32, 128], strides = [1, 1]} : vector<32x256xbf16> to vector<32x128xbf16>
    %c96 = arith.constant 96 : index
    %c0_19 = arith.constant 0 : index
    %20 = vector.load %arg8[%c96, %c0_19] : memref<512x128xbf16, #tpu.memory_space<vmem>>, vector<32x128xbf16>
    tpu.vector_store %arg8[%c96, %c0_19], %19 {strides = array<i32>} : memref<512x128xbf16, #tpu.memory_space<vmem>>, vector<32x128xbf16>,
    %21 = vector.extract_strided_slice %16 {offsets = [0, 5], sizes = [32, 128], strides = [1, 1]} : vector<32x256xbf16> to vector<32x128xbf16>
    %c288 = arith.constant 288 : index
    %c0_20 = arith.constant 0 : index
    %22 = vector.load %arg8[%c288, %c0_20] : memref<512x128xbf16, #tpu.memory_space<vmem>>, vector<32x128xbf16>
    tpu.vector_store %arg8[%c288, %c0_20], %21 {strides = array<i32>} : memref<512x128xbf16, #tpu.memory_space<vmem>>, vector<32x128xbf16>,
    %23 = vector.extract_strided_slice %16 {offsets = [0, 6], sizes = [32, 128], strides = [1, 1]} : vector<32x256xbf16> to vector<32x128xbf16>
    %c352 = arith.constant 352 : index
    %c0_21 = arith.constant 0 : index
    %24 = vector.load %arg8[%c352, %c0_21] : memref<512x128xbf16, #tpu.memory_space<vmem>>, vector<32x128xbf16>
    tpu.vector_store %arg8[%c352, %c0_21], %23 {strides = array<i32>} : memref<512x128xbf16, #tpu.memory_space<vmem>>, vector<32x128xbf16>,
    %c0_22 = arith.constant 0 : index
    %c2 = arith.constant 2 : index
    %c0_23 = arith.constant 0 : index
    %c0_24 = arith.constant 0 : index
    %25 = vector.load %arg1[%c0_22, %c2, %c0_23, %c0_24] : memref<1x4x32x256xbf16, #tpu.memory_space<vmem>>, vector<1x1x32x256xbf16>
    %26 = vector.shape_cast %25 : vector<1x1x32x256xbf16> to vector<32x256xbf16>
    %27 = vector.extract_strided_slice %26 {offsets = [0, 0], sizes = [32, 128], strides = [1, 1]} : vector<32x256xbf16> to vector<32x128xbf16>
    %c128 = arith.constant 128 : index
    %c0_25 = arith.constant 0 : index
    %28 = vector.load %arg8[%c128, %c0_25] : memref<512x128xbf16, #tpu.memory_space<vmem>>, vector<32x128xbf16>
    tpu.vector_store %arg8[%c128, %c0_25], %27 {strides = array<i32>} : memref<512x128xbf16, #tpu.memory_space<vmem>>, vector<32x128xbf16>,
    %29 = vector.extract_strided_slice %26 {offsets = [0, 1], sizes = [32, 128], strides = [1, 1]} : vector<32x256xbf16> to vector<32x128xbf16>
    %c192 = arith.constant 192 : index
    %c0_26 = arith.constant 0 : index
    %30 = vector.load %arg8[%c192, %c0_26] : memref<512x128xbf16, #tpu.memory_space<vmem>>, vector<32x128xbf16>
    tpu.vector_store %arg8[%c192, %c0_26], %29 {strides = array<i32>} : memref<512x128xbf16, #tpu.memory_space<vmem>>, vector<32x128xbf16>,
    %31 = vector.extract_strided_slice %26 {offsets = [0, 5], sizes = [32, 128], strides = [1, 1]} : vector<32x256xbf16> to vector<32x128xbf16>
    %c384 = arith.constant 384 : index
    %c0_27 = arith.constant 0 : index
    %32 = vector.load %arg8[%c384, %c0_27] : memref<512x128xbf16, #tpu.memory_space<vmem>>, vector<32x128xbf16>
    tpu.vector_store %arg8[%c384, %c0_27], %31 {strides = array<i32>} : memref<512x128xbf16, #tpu.memory_space<vmem>>, vector<32x128xbf16>,
    %33 = vector.extract_strided_slice %26 {offsets = [0, 6], sizes = [32, 128], strides = [1, 1]} : vector<32x256xbf16> to vector<32x128xbf16>
    %c448 = arith.constant 448 : index
    %c0_28 = arith.constant 0 : index
    %34 = vector.load %arg8[%c448, %c0_28] : memref<512x128xbf16, #tpu.memory_space<vmem>>, vector<32x128xbf16>
    tpu.vector_store %arg8[%c448, %c0_28], %33 {strides = array<i32>} : memref<512x128xbf16, #tpu.memory_space<vmem>>, vector<32x128xbf16>,
    %c0_29 = arith.constant 0 : index
    %c3 = arith.constant 3 : index
    %c0_30 = arith.constant 0 : index
    %c0_31 = arith.constant 0 : index
    %35 = vector.load %arg1[%c0_29, %c3, %c0_30, %c0_31] : memref<1x4x32x256xbf16, #tpu.memory_space<vmem>>, vector<1x1x32x256xbf16>
    %36 = vector.shape_cast %35 : vector<1x1x32x256xbf16> to vector<32x256xbf16>
    %37 = vector.extract_strided_slice %36 {offsets = [0, 0], sizes = [32, 128], strides = [1, 1]} : vector<32x256xbf16> to vector<32x128xbf16>
    %c160 = arith.constant 160 : index
    %c0_32 = arith.constant 0 : index
    %38 = vector.load %arg8[%c160, %c0_32] : memref<512x128xbf16, #tpu.memory_space<vmem>>, vector<32x128xbf16>
    tpu.vector_store %arg8[%c160, %c0_32], %37 {strides = array<i32>} : memref<512x128xbf16, #tpu.memory_space<vmem>>, vector<32x128xbf16>,
    %39 = vector.extract_strided_slice %36 {offsets = [0, 1], sizes = [32, 128], strides = [1, 1]} : vector<32x256xbf16> to vector<32x128xbf16>
    %c224 = arith.constant 224 : index
    %c0_33 = arith.constant 0 : index
    %40 = vector.load %arg8[%c224, %c0_33] : memref<512x128xbf16, #tpu.memory_space<vmem>>, vector<32x128xbf16>
    tpu.vector_store %arg8[%c224, %c0_33], %39 {strides = array<i32>} : memref<512x128xbf16, #tpu.memory_space<vmem>>, vector<32x128xbf16>,
    %41 = vector.extract_strided_slice %36 {offsets = [0, 5], sizes = [32, 128], strides = [1, 1]} : vector<32x256xbf16> to vector<32x128xbf16>
    %c416 = arith.constant 416 : index
    %c0_34 = arith.constant 0 : index
    %42 = vector.load %arg8[%c416, %c0_34] : memref<512x128xbf16, #tpu.memory_space<vmem>>, vector<32x128xbf16>
    tpu.vector_store %arg8[%c416, %c0_34], %41 {strides = array<i32>} : memref<512x128xbf16, #tpu.memory_space<vmem>>, vector<32x128xbf16>,
    %43 = vector.extract_strided_slice %36 {offsets = [0, 6], sizes = [32, 128], strides = [1, 1]} : vector<32x256xbf16> to vector<32x128xbf16>
    %c480 = arith.constant 480 : index
    %c0_35 = arith.constant 0 : index
    %44 = vector.load %arg8[%c480, %c0_35] : memref<512x128xbf16, #tpu.memory_space<vmem>>, vector<32x128xbf16>
    tpu.vector_store %arg8[%c480, %c0_35], %43 {strides = array<i32>} : memref<512x128xbf16, #tpu.memory_space<vmem>>, vector<32x128xbf16>,
    %c0_36 = arith.constant 0 : index
    %c0_37 = arith.constant 0 : index
    %45 = vector.load %arg8[%c0_36, %c0_37] : memref<512x128xbf16, #tpu.memory_space<vmem>>, vector<512x128xbf16>
    %cst_38 = arith.constant dense<0.000000e+00> : vector<64x128xf32>
    %46 = tpu.matmul %0, %45, %cst_38 {dimension_numbers = #tpu.dot_dimension_numbers<[1], [0], [0], [1], [0, 0, 1, 1], [], []>} : vector<64x512xbf16>, vector<512x128xbf16>, vector<64x128xf32> -> vector<64x128xf32>
    %47 = vector.broadcast %1 : vector<64x1xf32> to vector<64x128xf32>
    %48 = arith.addf %46, %47 : vector<64x128xf32>
    %c0_39 = arith.constant 0 : index
    %c0_40 = arith.constant 0 : index
    %c0_41 = arith.constant 0 : index
    %49 = vector.load %arg5[%c0_39, %c0_40, %c0_41] : memref<1x64x128xf32, #tpu.memory_space<vmem>>, vector<1x64x128xf32>
    %50 = vector.shape_cast %49 : vector<1x64x128xf32> to vector<64x128xf32>
    %51 = vector.shape_cast %48 : vector<64x128xf32> to vector<1x64x128xf32>
    tpu.vector_store %arg5[%c0_39, %c0_40, %c0_41], %51 {strides = array<i32>} : memref<1x64x128xf32, #tpu.memory_space<vmem>>, vector<1x64x128xf32>,
    %52 = vector.broadcast %2 : vector<1x128xf32> to vector<64x128xf32>
    %53 = arith.mulf %48, %52 : vector<64x128xf32>
    %cst_42 = arith.constant dense<0.000000e+00> : vector<64xf32>
    %54 = vector.multi_reduction <add>, %53, %cst_42 [1] : vector<64x128xf32> to vector<64xf32>
    %55 = vector.shape_cast %54 : vector<64xf32> to vector<64x1xf32>
    %56 = arith.addf %3, %55 : vector<64x1xf32>
    %57 = arith.mulf %53, %53 : vector<64x128xf32>
    %cst_43 = arith.constant dense<0.000000e+00> : vector<64xf32>
    %58 = vector.multi_reduction <add>, %57, %cst_43 [1] : vector<64x128xf32> to vector<64xf32>
    %59 = vector.shape_cast %58 : vector<64xf32> to vector<64x1xf32>
    %60 = arith.addf %4, %59 : vector<64x1xf32>
    %c0_44 = arith.constant 0 : index
    %c0_45 = arith.constant 0 : index
    %c0_46 = arith.constant 0 : index
    %61 = vector.load %arg6[%c0_44, %c0_45, %c0_46] : memref<1x64x1xf32, #tpu.memory_space<vmem>>, vector<1x64x1xf32>
    %62 = vector.shape_cast %61 : vector<1x64x1xf32> to vector<64x1xf32>
    %63 = vector.shape_cast %56 : vector<64x1xf32> to vector<1x64x1xf32>
    tpu.vector_store %arg6[%c0_44, %c0_45, %c0_46], %63 {strides = array<i32>} : memref<1x64x1xf32, #tpu.memory_space<vmem>>, vector<1x64x1xf32>,
    %c0_47 = arith.constant 0 : index
    %c0_48 = arith.constant 0 : index
    %c0_49 = arith.constant 0 : index
    %64 = vector.load %arg7[%c0_47, %c0_48, %c0_49] : memref<1x64x1xf32, #tpu.memory_space<vmem>>, vector<1x64x1xf32>
    %65 = vector.shape_cast %64 : vector<1x64x1xf32> to vector<64x1xf32>
    %66 = vector.shape_cast %60 : vector<64x1xf32> to vector<1x64x1xf32>
    tpu.vector_store %arg7[%c0_47, %c0_48, %c0_49], %66 {strides = array<i32>} : memref<1x64x1xf32, #tpu.memory_space<vmem>>, vector<1x64x1xf32>,
    return
  }
  func.func @transform_0(%arg0: i32) -> (i32, i32, i32, i32) {
    %c0_i32 = arith.constant 0 : i32
    %c0_i32_0 = arith.constant 0 : i32
    %c0_i32_1 = arith.constant 0 : i32
    %c0_i32_2 = arith.constant 0 : i32
    return %arg0, %c0_i32, %c0_i32_0, %c0_i32_1 : i32, i32, i32, i32
  }
  func.func @transform_1(%arg0: i32) -> (i32, i32) {
    %c0_i32 = arith.constant 0 : i32
    %c0_i32_0 = arith.constant 0 : i32
    %c0_i32_1 = arith.constant 0 : i32
    return %c0_i32, %c0_i32_0 : i32, i32
  }
  func.func @transform_2(%arg0: i32) -> (i32, i32) {
    %c0_i32 = arith.constant 0 : i32
    %c0_i32_0 = arith.constant 0 : i32
    %c0_i32_1 = arith.constant 0 : i32
    return %c0_i32, %c0_i32_0 : i32, i32
  }
  func.func @transform_3(%arg0: i32) -> (i32, i32) {
    %c0_i32 = arith.constant 0 : i32
    %c0_i32_0 = arith.constant 0 : i32
    %c0_i32_1 = arith.constant 0 : i32
    return %c0_i32, %c0_i32_0 : i32, i32
  }
  func.func @transform_4(%arg0: i32) -> (i32, i32, i32) {
    %c0_i32 = arith.constant 0 : i32
    %c0_i32_0 = arith.constant 0 : i32
    %c0_i32_1 = arith.constant 0 : i32
    return %arg0, %c0_i32, %c0_i32_0 : i32, i32, i32
  }
  func.func @transform_5(%arg0: i32) -> (i32, i32, i32) {
    %c0_i32 = arith.constant 0 : i32
    %c0_i32_0 = arith.constant 0 : i32
    %c0_i32_1 = arith.constant 0 : i32
    return %arg0, %c0_i32, %c0_i32_0 : i32, i32, i32
  }
  func.func @transform_6(%arg0: i32) -> (i32, i32, i32) {
    %c0_i32 = arith.constant 0 : i32
    %c0_i32_0 = arith.constant 0 : i32
    %c0_i32_1 = arith.constant 0 : i32
    return %arg0, %c0_i32, %c0_i32_0 : i32, i32, i32
  }
}

</mosaic_0001>

<llo_original>
// kernel: rec_discriminator_forward.4
$region0: #{rec_discriminator_forward.4}
  #allocation0 [shape = 'u32[]', space=smem, size = 0x4, offset = 0x4, fixed_abs, tag = 'smem constant byte address 0x4 - core index']
  #allocation1 [shape = 'u32[144,128]{1,0:T(1,128)}', space=vmem, size = 0x12000, scoped, tag = 'internal scratch']
  #allocation2 [shape = 'bf16[128,1152]{1,0:T(16,128)(2,1)}', space=vmem, size = 0x48000, scoped, tag = 'scratch operand']
  %s0 = inlined_call_operand.vmem [shape: bf16[2,4,8,1280], index: 0, kind: input, shape index: {}]
  %s1 = inlined_call_operand.vmem [shape: bf16[8,128], index: 1, kind: input, shape index: {}]
  %s2 = inlined_call_operand.vmem [shape: f32[8,1], index: 2, kind: input, shape index: {}]
  %s3 = inlined_call_operand.vmem [shape: f32[1,1152], index: 3, kind: input, shape index: {}]
  %s4 = inlined_call_operand.vmem [shape: f32[2,8,1152], index: 4, kind: output, shape index: {0}]
  %s5 = inlined_call_operand.hbm [shape: f32[2,8,1], index: 5, kind: output, shape index: {1}]
  %s6 = inlined_call_operand.hbm [shape: f32[2,8,1], index: 6, kind: output, shape index: {2}]
  %7 = xla_tuple %s4, %s5, %s6
  %s8 = sld [smem:[#allocation0]]
  $region65: #{rec_discriminator_forward.4} parent=0
    _
  %s10 = ssub.s32 1, %s8
  %s11 = scalar_select 0, %s10, %s8
  $region1: #{rec_discriminator_forward.4} parent=0
    #allocation3 [shape = 'u8[8192]{0}', space=vmem, size = 0x2000, scoped, tag = 'output window, operand 1']
    #allocation4 [shape = 's32[2]{0}', space=sflag, size = 0x8, scoped, tag = 'scoped memory for rec_discriminator_forward.4']
    #allocation5 [shape = 'u8[8192]{0}', space=vmem, size = 0x2000, scoped, tag = 'output window, operand 2']
    #allocation6 [shape = 's32[2]{0}', space=sflag, size = 0x8, scoped, tag = 'scoped memory for rec_discriminator_forward.4']
    %12 = vsyncpa [#allocation4], 0
    %s13 = scalar_lea.sflag [#allocation4], 1
    %14 = vsyncpa %s13, 0
    %15 = vsyncpa [#allocation6], 0
    %s16 = scalar_lea.sflag [#allocation6], 1
    %17 = vsyncpa %s16, 0
    loop: start=0, step=1, limit=4
    $region2: #{rec_discriminator_forward.4} parent=1 // loop_pre_header
      _
    $region3: #{rec_discriminator_forward.4} parent=1 // loop_header
      %s19 = sphi 0, %s23
      %p20 = scmp.ge.s32.totalorder %s19, 4
      %s29 = sphi 0, %s31
      %s32 = sphi 0, %s29
      %s33 = sphi 0, %s32
      %s49 = sphi 0, %s33
      %s53 = sphi 0, %s53
      %s55 = sphi 0, %s53
      %s56 = sphi 0, %s55
      %s70 = sphi 0, %s56
      %s74 = sphi 0, %s74
      %s76 = sphi 0, %s74
      %s77 = sphi 0, %s76
      %s91 = sphi 0, %s77
      %s95 = sphi 0, %s95
      %s97 = sphi 0, %s95
      %s98 = sphi 0, %s97
      %s112 = sphi 0, %s98
      %s118 = sphi 0, %s120
      %s121 = sphi 0, %s118
      %s122 = sphi 0, %s121
      %s138 = sphi 0, %s122
      %s144 = sphi 0, %s146
      %s147 = sphi 0, %s144
      %s148 = sphi 0, %s147
      %s164 = sphi 0, %s148
      %s170 = sphi 0, %s172
      %s173 = sphi 0, %s170
      %s174 = sphi 0, %s173
      %s190 = sphi 0, %s174
    $region4: #{rec_discriminator_forward.4} parent=1 // loop_header_branch
      %22 = sbr.rel (%p20) target = $region8
    $region5: #{rec_discriminator_forward.4} parent=1 // loop_body
      %s24 = ssub.s32 %s19, 1
      %s25 = ssub.s32 %s19, 2
      %s26 = sadd.s32 %s19, 1
      %s27 = ssub.s32 %s19, %s26
      %p28 = scmp.eq.s32.totalorder %s27, 0
      %s30 = sadd.s32 %s29, 1
      %s31 = scalar_select %p28, %s29, %s30
      %p34 = pneg %p28
      %p35 = scmp.eq.s32.totalorder %s19, 1
      %p36 = por %p34, %p35
      %p37 = scmp.ne.s32.totalorder %s29, %s32
      %p38 = scmp.eq.s32.totalorder %s19, 0
      %p39 = por %p37, %p38
      %p40 = scmp.ne.s32.totalorder %s29, %s32
      %p41 = scmp.eq.s32.totalorder %s24, 1
      %p42 = por %p40, %p41
      %p43 = scmp.ne.s32.totalorder %s32, %s33
      %p44 = scmp.eq.s32.totalorder %s24, 0
      %p45 = por %p43, %p44
      %p46 = scmp.ne.s32.totalorder %s32, %s33
      %p47 = scmp.eq.s32.totalorder %s25, 1
      %p48 = por %p46, %p47
      %p50 = scmp.ne.s32.totalorder %s33, %s49
      %p51 = scmp.eq.s32.totalorder %s25, 0
      %p52 = por %p50, %p51
      %s54 = sadd.s32 %s53, 1
      %p57 = scmp.eq.s32.totalorder %s19, 1
      %p58 = scmp.ne.s32.totalorder %s53, %s55
      %p59 = scmp.eq.s32.totalorder %s19, 0
      %p60 = por %p58, %p59
      %p61 = scmp.ne.s32.totalorder %s53, %s55
      %p62 = scmp.eq.s32.totalorder %s24, 1
      %p63 = por %p61, %p62
      %p64 = scmp.ne.s32.totalorder %s55, %s56
      %p65 = scmp.eq.s32.totalorder %s24, 0
      %p66 = por %p64, %p65
      %p67 = scmp.ne.s32.totalorder %s55, %s56
      %p68 = scmp.eq.s32.totalorder %s25, 1
      %p69 = por %p67, %p68
      %p71 = scmp.ne.s32.totalorder %s56, %s70
      %p72 = scmp.eq.s32.totalorder %s25, 0
      %p73 = por %p71, %p72
      %s75 = sadd.s32 %s74, 1
      %p78 = scmp.eq.s32.totalorder %s19, 1
      %p79 = scmp.ne.s32.totalorder %s74, %s76
      %p80 = scmp.eq.s32.totalorder %s19, 0
      %p81 = por %p79, %p80
      %p82 = scmp.ne.s32.totalorder %s74, %s76
      %p83 = scmp.eq.s32.totalorder %s24, 1
      %p84 = por %p82, %p83
      %p85 = scmp.ne.s32.totalorder %s76, %s77
      %p86 = scmp.eq.s32.totalorder %s24, 0
      %p87 = por %p85, %p86
      %p88 = scmp.ne.s32.totalorder %s76, %s77
      %p89 = scmp.eq.s32.totalorder %s25, 1
      %p90 = por %p88, %p89
      %p92 = scmp.ne.s32.totalorder %s77, %s91
      %p93 = scmp.eq.s32.totalorder %s25, 0
      %p94 = por %p92, %p93
      %s96 = sadd.s32 %s95, 1
      %p99 = scmp.eq.s32.totalorder %s19, 1
      %p100 = scmp.ne.s32.totalorder %s95, %s97
      %p101 = scmp.eq.s32.totalorder %s19, 0
      %p102 = por %p100, %p101
      %p103 = scmp.ne.s32.totalorder %s95, %s97
      %p104 = scmp.eq.s32.totalorder %s24, 1
      %p105 = por %p103, %p104
      %p106 = scmp.ne.s32.totalorder %s97, %s98
      %p107 = scmp.eq.s32.totalorder %s24, 0
      %p108 = por %p106, %p107
      %p109 = scmp.ne.s32.totalorder %s97, %s98
      %p110 = scmp.eq.s32.totalorder %s25, 1
      %p111 = por %p109, %p110
      %p113 = scmp.ne.s32.totalorder %s98, %s112
      %p114 = scmp.eq.s32.totalorder %s25, 0
      %p115 = por %p113, %p114
      %s116 = ssub.s32 %s19, %s26
      %p117 = scmp.eq.s32.totalorder %s116, 0
      %s119 = sadd.s32 %s118, 1
      %s120 = scalar_select %p117, %s118, %s119
      %p123 = pneg %p117
      %p124 = scmp.eq.s32.totalorder %s19, 1
      %p125 = por %p123, %p124
      %p126 = scmp.ne.s32.totalorder %s118, %s121
      %p127 = scmp.eq.s32.totalorder %s19, 0
      %p128 = por %p126, %p127
      %p129 = scmp.ne.s32.totalorder %s118, %s121
      %p130 = scmp.eq.s32.totalorder %s24, 1
      %p131 = por %p129, %p130
      %p132 = scmp.ne.s32.totalorder %s121, %s122
      %p133 = scmp.eq.s32.totalorder %s24, 0
      %p134 = por %p132, %p133
      %p135 = scmp.ne.s32.totalorder %s121, %s122
      %p136 = scmp.eq.s32.totalorder %s25, 1
      %p137 = por %p135, %p136
      %p139 = scmp.ne.s32.totalorder %s122, %s138
      %p140 = scmp.eq.s32.totalorder %s25, 0
      %p141 = por %p139, %p140
      %s142 = ssub.s32 %s19, %s26
      %p143 = scmp.eq.s32.totalorder %s142, 0
      %s145 = sadd.s32 %s144, 1
      %s146 = scalar_select %p143, %s144, %s145
      %p149 = pneg %p143
      %p150 = scmp.eq.s32.totalorder %s19, 1
      %p151 = por %p149, %p150
      %p152 = scmp.ne.s32.totalorder %s144, %s147
      %p153 = scmp.eq.s32.totalorder %s19, 0
      %p154 = por %p152, %p153
      %p155 = scmp.ne.s32.totalorder %s144, %s147
      %p156 = scmp.eq.s32.totalorder %s24, 1
      %p157 = por %p155, %p156
      %p158 = scmp.ne.s32.totalorder %s147, %s148
      %p159 = scmp.eq.s32.totalorder %s24, 0
      %p160 = por %p158, %p159
      %p161 = scmp.ne.s32.totalorder %s147, %s148
      %p162 = scmp.eq.s32.totalorder %s25, 1
      %p163 = por %p161, %p162
      %p165 = scmp.ne.s32.totalorder %s148, %s164
      %p166 = scmp.eq.s32.totalorder %s25, 0
      %p167 = por %p165, %p166
      %s168 = ssub.s32 %s19, %s26
      %p169 = scmp.eq.s32.totalorder %s168, 0
      %s171 = sadd.s32 %s170, 1
      %s172 = scalar_select %p169, %s170, %s171
      %p175 = pneg %p169
      %p176 = scmp.eq.s32.totalorder %s19, 1
      %p177 = por %p175, %p176
      %p178 = scmp.ne.s32.totalorder %s170, %s173
      %p179 = scmp.eq.s32.totalorder %s19, 0
      %p180 = por %p178, %p179
      %p181 = scmp.ne.s32.totalorder %s170, %s173
      %p182 = scmp.eq.s32.totalorder %s24, 1
      %p183 = por %p181, %p182
      %p184 = scmp.ne.s32.totalorder %s173, %s174
      %p185 = scmp.eq.s32.totalorder %s24, 0
      %p186 = por %p184, %p185
      %p187 = scmp.ne.s32.totalorder %s173, %s174
      %p188 = scmp.eq.s32.totalorder %s25, 1
      %p189 = por %p187, %p188
      %p191 = scmp.ne.s32.totalorder %s174, %s190
      %p192 = scmp.eq.s32.totalorder %s25, 0
      %p193 = por %p191, %p192
      %p194 = scmp.le.s32.totalorder 1, %s19
      %p195 = scmp.lt.s32.totalorder %s19, 3
      %p196 = pnand %p194, %p195
      %p197 = pneg %p196
      // Predicated region
      $region9: #{rec_discriminator_forward.4} parent=5 // pred_check
        _
      $region10: #{rec_discriminator_forward.4} parent=5 // pred_check_branch
        %199 = sbr.rel (%p196) target = $region12
      $region11: #{rec_discriminator_forward.4} parent=5 // pred_region
        %s200 = ssub.s32 %s19, 1
        // Predicated region
        $region13: #{rec_discriminator_forward.4} parent=11 // pred_check
          %p201 = pneg %p66
        $region14: #{rec_discriminator_forward.4} parent=11 // pred_check_branch
          %203 = sbr.rel (%p201) target = $region16
        $region15: #{rec_discriminator_forward.4} parent=11 // pred_region
          _
        $region16: #{rec_discriminator_forward.4} parent=11 // pred_fallthru
          _
        // Predicated region
        $region17: #{rec_discriminator_forward.4} parent=11 // pred_check
          %p204 = pneg %p87
        $region18: #{rec_discriminator_forward.4} parent=11 // pred_check_branch
          %206 = sbr.rel (%p204) target = $region20
        $region19: #{rec_discriminator_forward.4} parent=11 // pred_region
          _
        $region20: #{rec_discriminator_forward.4} parent=11 // pred_fallthru
          _
        // Predicated region
        $region21: #{rec_discriminator_forward.4} parent=11 // pred_check
          %p207 = pneg %p108
        $region22: #{rec_discriminator_forward.4} parent=11 // pred_check_branch
          %209 = sbr.rel (%p207) target = $region24
        $region23: #{rec_discriminator_forward.4} parent=11 // pred_region
          _
        $region24: #{rec_discriminator_forward.4} parent=11 // pred_fallthru
          _
      $region12: #{rec_discriminator_forward.4} parent=5 // pred_fallthru
        _
      %p210 = scmp.lt.s32.totalorder %s19, 2
      // Predicated region
      $region25: #{rec_discriminator_forward.4} parent=5 // pred_check
        %p211 = pneg %p210
      $region26: #{rec_discriminator_forward.4} parent=5 // pred_check_branch
        %213 = sbr.rel (%p211) target = $region28
      $region27: #{rec_discriminator_forward.4} parent=5 // pred_region
        // Predicated region
        $region29: #{rec_discriminator_forward.4} parent=27 // pred_check
          %p214 = pneg %p39
        $region30: #{rec_discriminator_forward.4} parent=27 // pred_check_branch
          %216 = sbr.rel (%p214) target = $region32
        $region31: #{rec_discriminator_forward.4} parent=27 // pred_region
          %p217 = scmp.lt.s32.totalorder %s19, 1
          %s218 = scalar_select %p217, %s19, 1
          %s219 = smul.addr %s218, 40
          %s220 = smul.addr %s219, 4
          %s221 = scalar_lea.vmem %s0, %s220
        $region32: #{rec_discriminator_forward.4} parent=27 // pred_fallthru
          _
      $region28: #{rec_discriminator_forward.4} parent=5 // pred_fallthru
        _
      %p222 = scmp.le.s32.totalorder 1, %s19
      %p223 = scmp.lt.s32.totalorder %s19, 3
      %p224 = pnand %p222, %p223
      %p225 = pneg %p224
      // Predicated region
      $region33: #{rec_discriminator_forward.4} parent=5 // pred_check
        _
      $region34: #{rec_discriminator_forward.4} parent=5 // pred_check_branch
        %227 = sbr.rel (%p224) target = $region36
      $region35: #{rec_discriminator_forward.4} parent=5 // pred_region
        %s228 = ssub.s32 %s19, 1
        %p229 = scmp.lt.s32.totalorder %s24, 1
        %s230 = scalar_select %p229, %s24, 1
        %s231 = smul.addr %s230, 40
        %s232 = smul.addr %s231, 4
        %s233 = scalar_lea.vmem %s0, %s232
        %p234 = pneg %p45
        %p235 = pneg %p42
        %p236 = pneg %p66
        %p237 = pneg %p63
        %p238 = pneg %p87
        %p239 = pneg %p84
        %p240 = pneg %p108
        %p241 = pneg %p105
        %p242 = pneg %p134
        %p243 = pneg %p131
        %p244 = scmp.lt.s32.totalorder %s24, 1
        %s245 = scalar_select %p244, %s24, 1
        %s246 = smul.addr %s245, 9
        %s247 = smul.addr %s246, 8
        %s248 = scalar_lea.vmem %s4, %s247
        %p249 = pneg %p160
        %p250 = pneg %p157
        %s251 = sand.u32 %s147, 1
        %s252 = scalar_lea.sflag [#allocation4], %s251
        %s253 = sand.u32 %s147, 1
        %s254 = smul.addr %s253, 8
        %s255 = scalar_lea.vmem [#allocation3], %s254
        %p256 = pneg %p186
        %p257 = pneg %p183
        %s258 = sand.u32 %s173, 1
        %s259 = scalar_lea.sflag [#allocation6], %s258
        %s260 = sand.u32 %s173, 1
        %s261 = smul.addr %s260, 8
        %s262 = scalar_lea.vmem [#allocation5], %s261
        %p263 = scmp.lt.s32.totalorder %s24, 1
        %s264 = scalar_select %p263, %s24, 1
        %s265 = smul.addr %s264, 40
        %s266 = smul.addr %s265, 4
        %s267 = scalar_lea.vmem %s0, %s266
        %p268 = scmp.lt.s32.totalorder %s24, 1
        %s269 = scalar_select %p268, %s24, 1
        %s270 = smul.addr %s269, 9
        %s271 = smul.addr %s270, 8
        %s272 = scalar_lea.vmem %s4, %s271
        %v274 = vld [vmem:[%s1] sm:$0xf]
        %v275 = vld [vmem:[%s2] sm:$0xff]
        %v276 = vld [vmem:[%s3] sm:$0xff]
        %v277 = vld [vmem:[%s3 + $0x8] sm:$0x1]
        %v278 = vld [vmem:[%s267] sm:$0xff]
        %v279 = vld [vmem:[%s267 + $0x8] sm:$0xff]
        %v280 = vld [vmem:[%s267 + $0x10] sm:$0xff]
        %v281 = vld [vmem:[%s267 + $0x18] sm:$0xff]
        %v282 = vld [vmem:[%s267 + $0x20] sm:$0xff]
        %v288 = vunpack.c.l.b16 %v278
        %v289 = vunpack.c.h.b16 %v278
        %v290 = vunpack.c.l.b16 %v279
        %v291 = vunpack.c.h.b16 %v279
        %v292 = vunpack.c.l.b16 %v280
        %v293 = vunpack.c.h.b16 %v280
        %v294 = vunpack.c.l.b16 %v281
        %v295 = vunpack.c.h.b16 %v281
        %v296 = vunpack.c.l.b16 %v282
        %v297 = vpack.c.b16 %v288, %v288
        %v298 = vpack.c.b16 %v289, %v289
        %v299 = vpack.c.b16 %v290, %v290
        %v300 = vpack.c.b16 %v291, %v291
        %v301 = vpack.c.b16 %v292, %v292
        %v302 = vpack.c.b16 %v293, %v293
        %v303 = vpack.c.b16 %v294, %v294
        %v304 = vpack.c.b16 %v295, %v295
        %v305 = vpack.c.b16 %v296, %v296
        %315 = vst [vmem:[#allocation2] sm:$0xf] %v297
        %316 = vst [vmem:[#allocation2 + $0x8] sm:$0xf] %v298
        %317 = vst [vmem:[#allocation2 + $0x10] sm:$0xf] %v299
        %318 = vst [vmem:[#allocation2 + $0x18] sm:$0xf] %v300
        %319 = vst [vmem:[#allocation2 + $0x20] sm:$0xf] %v301
        %320 = vst [vmem:[#allocation2 + $0x28] sm:$0xf] %v302
        %321 = vst [vmem:[#allocation2 + $0x30] sm:$0xf] %v303
        %322 = vst [vmem:[#allocation2 + $0x38] sm:$0xf] %v304
        %323 = vst [vmem:[#allocation2 + $0x40] sm:$0xf] %v305
        %v324 = vunpack.c.h.b16 %v282
        %v325 = vpack.c.b16 %v324, %v324
        %326 = vrot.lane.b32.xlu0 %v297, 127
        %v327 = vpop.permute.xlu0 %326
        %328 = vrot.lane.b32.xlu0 %v298, 127
        %v329 = vpop.permute.xlu0 %328
        %330 = vrot.lane.b32.xlu0 %v299, 127
        %v331 = vpop.permute.xlu0 %330
        %332 = vrot.lane.b32.xlu0 %v300, 127
        %v333 = vpop.permute.xlu0 %332
        %334 = vrot.lane.b32.xlu0 %v301, 127
        %v335 = vpop.permute.xlu0 %334
        %336 = vrot.lane.b32.xlu0 %v302, 127
        %v337 = vpop.permute.xlu0 %336
        %338 = vrot.lane.b32.xlu0 %v303, 127
        %v339 = vpop.permute.xlu0 %338
        %340 = vrot.lane.b32.xlu0 %v304, 127
        %v341 = vpop.permute.xlu0 %340
        %342 = vrot.lane.b32.xlu0 %v305, 127
        %v343 = vpop.permute.xlu0 %342
        %344 = vrot.lane.b32.xlu0 %v325, 127
        %v345 = vpop.permute.xlu0 %344
        %vm346 = vcmask 1039360
        %v347 = vsel %vm346, %v327, %v329
        %v348 = vsel %vm346, %v329, %v331
        %v349 = vsel %vm346, %v331, %v333
        %v350 = vsel %vm346, %v333, %v335
        %v351 = vsel %vm346, %v335, %v337
        %v352 = vsel %vm346, %v337, %v339
        %v353 = vsel %vm346, %v339, %v341
        %v354 = vsel %vm346, %v341, %v343
        %v355 = vsel %vm346, %v343, %v345
        %365 = vst [vmem:[#allocation2 + $0x48] sm:$0xf] %v347
        %366 = vst [vmem:[#allocation2 + $0x50] sm:$0xf] %v348
        %367 = vst [vmem:[#allocation2 + $0x58] sm:$0xf] %v349
        %368 = vst [vmem:[#allocation2 + $0x60] sm:$0xf] %v350
        %369 = vst [vmem:[#allocation2 + $0x68] sm:$0xf] %v351
        %370 = vst [vmem:[#allocation2 + $0x70] sm:$0xf] %v352
        %371 = vst [vmem:[#allocation2 + $0x78] sm:$0xf] %v353
        %372 = vst [vmem:[#allocation2 + $0x80] sm:$0xf] %v354
        %373 = vst [vmem:[#allocation2 + $0x88] sm:$0xf] %v355
        %374 = vrot.lane.b32.xlu0 %v297, 95
        %v375 = vpop.permute.xlu0 %374
        %376 = vrot.lane.b32.xlu0 %v298, 95
        %v377 = vpop.permute.xlu0 %376
        %378 = vrot.lane.b32.xlu0 %v299, 95
        %v379 = vpop.permute.xlu0 %378
        %380 = vrot.lane.b32.xlu0 %v300, 95
        %v381 = vpop.permute.xlu0 %380
        %382 = vrot.lane.b32.xlu0 %v301, 95
        %v383 = vpop.permute.xlu0 %382
        %384 = vrot.lane.b32.xlu0 %v302, 95
        %v385 = vpop.permute.xlu0 %384
        %386 = vrot.lane.b32.xlu0 %v303, 95
        %v387 = vpop.permute.xlu0 %386
        %388 = vrot.lane.b32.xlu0 %v304, 95
        %v389 = vpop.permute.xlu0 %388
        %390 = vrot.lane.b32.xlu0 %v305, 95
        %v391 = vpop.permute.xlu0 %390
        %392 = vrot.lane.b32.xlu0 %v325, 95
        %v393 = vpop.permute.xlu0 %392
        %vm394 = vcmask 777216
        %v395 = vsel %vm394, %v375, %v377
        %v396 = vsel %vm394, %v377, %v379
        %v397 = vsel %vm394, %v379, %v381
        %v398 = vsel %vm394, %v381, %v383
        %v399 = vsel %vm394, %v383, %v385
        %v400 = vsel %vm394, %v385, %v387
        %v401 = vsel %vm394, %v387, %v389
        %v402 = vsel %vm394, %v389, %v391
        %v403 = vsel %vm394, %v391, %v393
        %413 = vst [vmem:[#allocation2 + $0x120] sm:$0xf] %v395
        %414 = vst [vmem:[#allocation2 + $0x128] sm:$0xf] %v396
        %415 = vst [vmem:[#allocation2 + $0x130] sm:$0xf] %v397
        %416 = vst [vmem:[#allocation2 + $0x138] sm:$0xf] %v398
        %417 = vst [vmem:[#allocation2 + $0x140] sm:$0xf] %v399
        %418 = vst [vmem:[#allocation2 + $0x148] sm:$0xf] %v400
        %419 = vst [vmem:[#allocation2 + $0x150] sm:$0xf] %v401
        %420 = vst [vmem:[#allocation2 + $0x158] sm:$0xf] %v402
        %421 = vst [vmem:[#allocation2 + $0x160] sm:$0xf] %v403
        %422 = vrot.lane.b32.xlu0 %v297, 94
        %v423 = vpop.permute.xlu0 %422
        %424 = vrot.lane.b32.xlu0 %v298, 94
        %v425 = vpop.permute.xlu0 %424
        %426 = vrot.lane.b32.xlu0 %v299, 94
        %v427 = vpop.permute.xlu0 %426
        %428 = vrot.lane.b32.xlu0 %v300, 94
        %v429 = vpop.permute.xlu0 %428
        %430 = vrot.lane.b32.xlu0 %v301, 94
        %v431 = vpop.permute.xlu0 %430
        %432 = vrot.lane.b32.xlu0 %v302, 94
        %v433 = vpop.permute.xlu0 %432
        %434 = vrot.lane.b32.xlu0 %v303, 94
        %v435 = vpop.permute.xlu0 %434
        %436 = vrot.lane.b32.xlu0 %v304, 94
        %v437 = vpop.permute.xlu0 %436
        %438 = vrot.lane.b32.xlu0 %v305, 94
        %v439 = vpop.permute.xlu0 %438
        %440 = vrot.lane.b32.xlu0 %v325, 94
        %v441 = vpop.permute.xlu0 %440
        %vm442 = vcmask 769024
        %v443 = vsel %vm442, %v423, %v425
        %v444 = vsel %vm442, %v425, %v427
        %v445 = vsel %vm442, %v427, %v429
        %v446 = vsel %vm442, %v429, %v431
        %v447 = vsel %vm442, %v431, %v433
        %v448 = vsel %vm442, %v433, %v435
        %v449 = vsel %vm442, %v435, %v437
        %v450 = vsel %vm442, %v437, %v439
        %v451 = vsel %vm442, %v439, %v441
        %461 = vst [vmem:[#allocation2 + $0x168] sm:$0xf] %v443
        %462 = vst [vmem:[#allocation2 + $0x170] sm:$0xf] %v444
        %463 = vst [vmem:[#allocation2 + $0x178] sm:$0xf] %v445
        %464 = vst [vmem:[#allocation2 + $0x180] sm:$0xf] %v446
        %465 = vst [vmem:[#allocation2 + $0x188] sm:$0xf] %v447
        %466 = vst [vmem:[#allocation2 + $0x190] sm:$0xf] %v448
        %467 = vst [vmem:[#allocation2 + $0x198] sm:$0xf] %v449
        %468 = vst [vmem:[#allocation2 + $0x1a0] sm:$0xf] %v450
        %469 = vst [vmem:[#allocation2 + $0x1a8] sm:$0xf] %v451
        %s470 = scalar_lea.vmem %s267, 40
        %v471 = vld [vmem:[%s470] sm:$0xff]
        %v472 = vld [vmem:[%s470 + $0x8] sm:$0xff]
        %v473 = vld [vmem:[%s470 + $0x10] sm:$0xff]
        %v474 = vld [vmem:[%s470 + $0x18] sm:$0xff]
        %v475 = vld [vmem:[%s470 + $0x20] sm:$0xff]
        %v481 = vunpack.c.l.b16 %v471
        %v482 = vunpack.c.h.b16 %v471
        %v483 = vunpack.c.l.b16 %v472
        %v484 = vunpack.c.h.b16 %v472
        %v485 = vunpack.c.l.b16 %v473
        %v486 = vunpack.c.h.b16 %v473
        %v487 = vunpack.c.l.b16 %v474
        %v488 = vunpack.c.h.b16 %v474
        %v489 = vunpack.c.l.b16 %v475
        %v490 = vpack.c.b16 %v481, %v481
        %v491 = vpack.c.b16 %v482, %v482
        %v492 = vpack.c.b16 %v483, %v483
        %v493 = vpack.c.b16 %v484, %v484
        %v494 = vpack.c.b16 %v485, %v485
        %v495 = vpack.c.b16 %v486, %v486
        %v496 = vpack.c.b16 %v487, %v487
        %v497 = vpack.c.b16 %v488, %v488
        %v498 = vpack.c.b16 %v489, %v489
        %508 = vst [vmem:[#allocation2] sm:$0xf0] %v490
        %509 = vst [vmem:[#allocation2 + $0x8] sm:$0xf0] %v491
        %510 = vst [vmem:[#allocation2 + $0x10] sm:$0xf0] %v492
        %511 = vst [vmem:[#allocation2 + $0x18] sm:$0xf0] %v493
        %512 = vst [vmem:[#allocation2 + $0x20] sm:$0xf0] %v494
        %513 = vst [vmem:[#allocation2 + $0x28] sm:$0xf0] %v495
        %514 = vst [vmem:[#allocation2 + $0x30] sm:$0xf0] %v496
        %515 = vst [vmem:[#allocation2 + $0x38] sm:$0xf0] %v497
        %516 = vst [vmem:[#allocation2 + $0x40] sm:$0xf0] %v498
        %v517 = vunpack.c.h.b16 %v475
        %v518 = vpack.c.b16 %v517, %v517
        %519 = vrot.lane.b32.xlu0 %v490, 127
        %v520 = vpop.permute.xlu0 %519
        %521 = vrot.lane.b32.xlu0 %v491, 127
        %v522 = vpop.permute.xlu0 %521
        %523 = vrot.lane.b32.xlu0 %v492, 127
        %v524 = vpop.permute.xlu0 %523
        %525 = vrot.lane.b32.xlu0 %v493, 127
        %v526 = vpop.permute.xlu0 %525
        %527 = vrot.lane.b32.xlu0 %v494, 127
        %v528 = vpop.permute.xlu0 %527
        %529 = vrot.lane.b32.xlu0 %v495, 127
        %v530 = vpop.permute.xlu0 %529
        %531 = vrot.lane.b32.xlu0 %v496, 127
        %v532 = vpop.permute.xlu0 %531
        %533 = vrot.lane.b32.xlu0 %v497, 127
        %v534 = vpop.permute.xlu0 %533
        %535 = vrot.lane.b32.xlu0 %v498, 127
        %v536 = vpop.permute.xlu0 %535
        %537 = vrot.lane.b32.xlu0 %v518, 127
        %v538 = vpop.permute.xlu0 %537
        %v539 = vsel %vm346, %v520, %v522
        %v540 = vsel %vm346, %v522, %v524
        %v541 = vsel %vm346, %v524, %v526
        %v542 = vsel %vm346, %v526, %v528
        %v543 = vsel %vm346, %v528, %v530
        %v544 = vsel %vm346, %v530, %v532
        %v545 = vsel %vm346, %v532, %v534
        %v546 = vsel %vm346, %v534, %v536
        %v547 = vsel %vm346, %v536, %v538
        %557 = vst [vmem:[#allocation2 + $0x48] sm:$0xf0] %v539
        %558 = vst [vmem:[#allocation2 + $0x50] sm:$0xf0] %v540
        %559 = vst [vmem:[#allocation2 + $0x58] sm:$0xf0] %v541
        %560 = vst [vmem:[#allocation2 + $0x60] sm:$0xf0] %v542
        %561 = vst [vmem:[#allocation2 + $0x68] sm:$0xf0] %v543
        %562 = vst [vmem:[#allocation2 + $0x70] sm:$0xf0] %v544
        %563 = vst [vmem:[#allocation2 + $0x78] sm:$0xf0] %v545
        %564 = vst [vmem:[#allocation2 + $0x80] sm:$0xf0] %v546
        %565 = vst [vmem:[#allocation2 + $0x88] sm:$0xf0] %v547
        %566 = vrot.lane.b32.xlu0 %v490, 95
        %v567 = vpop.permute.xlu0 %566
        %568 = vrot.lane.b32.xlu0 %v491, 95
        %v569 = vpop.permute.xlu0 %568
        %570 = vrot.lane.b32.xlu0 %v492, 95
        %v571 = vpop.permute.xlu0 %570
        %572 = vrot.lane.b32.xlu0 %v493, 95
        %v573 = vpop.permute.xlu0 %572
        %574 = vrot.lane.b32.xlu0 %v494, 95
        %v575 = vpop.permute.xlu0 %574
        %576 = vrot.lane.b32.xlu0 %v495, 95
        %v577 = vpop.permute.xlu0 %576
        %578 = vrot.lane.b32.xlu0 %v496, 95
        %v579 = vpop.permute.xlu0 %578
        %580 = vrot.lane.b32.xlu0 %v497, 95
        %v581 = vpop.permute.xlu0 %580
        %582 = vrot.lane.b32.xlu0 %v498, 95
        %v583 = vpop.permute.xlu0 %582
        %584 = vrot.lane.b32.xlu0 %v518, 95
        %v585 = vpop.permute.xlu0 %584
        %v586 = vsel %vm394, %v567, %v569
        %v587 = vsel %vm394, %v569, %v571
        %v588 = vsel %vm394, %v571, %v573
        %v589 = vsel %vm394, %v573, %v575
        %v590 = vsel %vm394, %v575, %v577
        %v591 = vsel %vm394, %v577, %v579
        %v592 = vsel %vm394, %v579, %v581
        %v593 = vsel %vm394, %v581, %v583
        %v594 = vsel %vm394, %v583, %v585
        %604 = vst [vmem:[#allocation2 + $0x120] sm:$0xf0] %v586
        %605 = vst [vmem:[#allocation2 + $0x128] sm:$0xf0] %v587
        %606 = vst [vmem:[#allocation2 + $0x130] sm:$0xf0] %v588
        %607 = vst [vmem:[#allocation2 + $0x138] sm:$0xf0] %v589
        %608 = vst [vmem:[#allocation2 + $0x140] sm:$0xf0] %v590
        %609 = vst [vmem:[#allocation2 + $0x148] sm:$0xf0] %v591
        %610 = vst [vmem:[#allocation2 + $0x150] sm:$0xf0] %v592
        %611 = vst [vmem:[#allocation2 + $0x158] sm:$0xf0] %v593
        %612 = vst [vmem:[#allocation2 + $0x160] sm:$0xf0] %v594
        %613 = vrot.lane.b32.xlu0 %v490, 94
        %v614 = vpop.permute.xlu0 %613
        %615 = vrot.lane.b32.xlu0 %v491, 94
        %v616 = vpop.permute.xlu0 %615
        %617 = vrot.lane.b32.xlu0 %v492, 94
        %v618 = vpop.permute.xlu0 %617
        %619 = vrot.lane.b32.xlu0 %v493, 94
        %v620 = vpop.permute.xlu0 %619
        %621 = vrot.lane.b32.xlu0 %v494, 94
        %v622 = vpop.permute.xlu0 %621
        %623 = vrot.lane.b32.xlu0 %v495, 94
        %v624 = vpop.permute.xlu0 %623
        %625 = vrot.lane.b32.xlu0 %v496, 94
        %v626 = vpop.permute.xlu0 %625
        %627 = vrot.lane.b32.xlu0 %v497, 94
        %v628 = vpop.permute.xlu0 %627
        %629 = vrot.lane.b32.xlu0 %v498, 94
        %v630 = vpop.permute.xlu0 %629
        %631 = vrot.lane.b32.xlu0 %v518, 94
        %v632 = vpop.permute.xlu0 %631
        %v633 = vsel %vm442, %v614, %v616
        %v634 = vsel %vm442, %v616, %v618
        %v635 = vsel %vm442, %v618, %v620
        %v636 = vsel %vm442, %v620, %v622
        %v637 = vsel %vm442, %v622, %v624
        %v638 = vsel %vm442, %v624, %v626
        %v639 = vsel %vm442, %v626, %v628
        %v640 = vsel %vm442, %v628, %v630
        %v641 = vsel %vm442, %v630, %v632
        %651 = vst [vmem:[#allocation2 + $0x168] sm:$0xf0] %v633
        %652 = vst [vmem:[#allocation2 + $0x170] sm:$0xf0] %v634
        %653 = vst [vmem:[#allocation2 + $0x178] sm:$0xf0] %v635
        %654 = vst [vmem:[#allocation2 + $0x180] sm:$0xf0] %v636
        %655 = vst [vmem:[#allocation2 + $0x188] sm:$0xf0] %v637
        %656 = vst [vmem:[#allocation2 + $0x190] sm:$0xf0] %v638
        %657 = vst [vmem:[#allocation2 + $0x198] sm:$0xf0] %v639
        %658 = vst [vmem:[#allocation2 + $0x1a0] sm:$0xf0] %v640
        %659 = vst [vmem:[#allocation2 + $0x1a8] sm:$0xf0] %v641
        %s660 = scalar_lea.vmem %s267, 80
        %v661 = vld [vmem:[%s660] sm:$0xff]
        %v662 = vld [vmem:[%s660 + $0x8] sm:$0xff]
        %v663 = vld [vmem:[%s660 + $0x10] sm:$0xff]
        %v664 = vld [vmem:[%s660 + $0x18] sm:$0xff]
        %v665 = vld [vmem:[%s660 + $0x20] sm:$0xff]
        %v671 = vunpack.c.l.b16 %v661
        %v672 = vunpack.c.h.b16 %v661
        %v673 = vunpack.c.l.b16 %v662
        %v674 = vunpack.c.h.b16 %v662
        %v675 = vunpack.c.l.b16 %v663
        %v676 = vunpack.c.h.b16 %v663
        %v677 = vunpack.c.l.b16 %v664
        %v678 = vunpack.c.h.b16 %v664
        %v679 = vunpack.c.l.b16 %v665
        %v680 = vpack.c.b16 %v671, %v671
        %v681 = vpack.c.b16 %v672, %v672
        %v682 = vpack.c.b16 %v673, %v673
        %v683 = vpack.c.b16 %v674, %v674
        %v684 = vpack.c.b16 %v675, %v675
        %v685 = vpack.c.b16 %v676, %v676
        %v686 = vpack.c.b16 %v677, %v677
        %v687 = vpack.c.b16 %v678, %v678
        %v688 = vpack.c.b16 %v679, %v679
        %698 = vst [vmem:[#allocation2 + $0x90] sm:$0xf] %v680
        %699 = vst [vmem:[#allocation2 + $0x98] sm:$0xf] %v681
        %700 = vst [vmem:[#allocation2 + $0xa0] sm:$0xf] %v682
        %701 = vst [vmem:[#allocation2 + $0xa8] sm:$0xf] %v683
        %702 = vst [vmem:[#allocation2 + $0xb0] sm:$0xf] %v684
        %703 = vst [vmem:[#allocation2 + $0xb8] sm:$0xf] %v685
        %704 = vst [vmem:[#allocation2 + $0xc0] sm:$0xf] %v686
        %705 = vst [vmem:[#allocation2 + $0xc8] sm:$0xf] %v687
        %706 = vst [vmem:[#allocation2 + $0xd0] sm:$0xf] %v688
        %v707 = vunpack.c.h.b16 %v665
        %v708 = vpack.c.b16 %v707, %v707
        %709 = vrot.lane.b32.xlu0 %v680, 127
        %v710 = vpop.permute.xlu0 %709
        %711 = vrot.lane.b32.xlu0 %v681, 127
        %v712 = vpop.permute.xlu0 %711
        %713 = vrot.lane.b32.xlu0 %v682, 127
        %v714 = vpop.permute.xlu0 %713
        %715 = vrot.lane.b32.xlu0 %v683, 127
        %v716 = vpop.permute.xlu0 %715
        %717 = vrot.lane.b32.xlu0 %v684, 127
        %v718 = vpop.permute.xlu0 %717
        %719 = vrot.lane.b32.xlu0 %v685, 127
        %v720 = vpop.permute.xlu0 %719
        %721 = vrot.lane.b32.xlu0 %v686, 127
        %v722 = vpop.permute.xlu0 %721
        %723 = vrot.lane.b32.xlu0 %v687, 127
        %v724 = vpop.permute.xlu0 %723
        %725 = vrot.lane.b32.xlu0 %v688, 127
        %v726 = vpop.permute.xlu0 %725
        %727 = vrot.lane.b32.xlu0 %v708, 127
        %v728 = vpop.permute.xlu0 %727
        %v729 = vsel %vm346, %v710, %v712
        %v730 = vsel %vm346, %v712, %v714
        %v731 = vsel %vm346, %v714, %v716
        %v732 = vsel %vm346, %v716, %v718
        %v733 = vsel %vm346, %v718, %v720
        %v734 = vsel %vm346, %v720, %v722
        %v735 = vsel %vm346, %v722, %v724
        %v736 = vsel %vm346, %v724, %v726
        %v737 = vsel %vm346, %v726, %v728
        %747 = vst [vmem:[#allocation2 + $0xd8] sm:$0xf] %v729
        %748 = vst [vmem:[#allocation2 + $0xe0] sm:$0xf] %v730
        %749 = vst [vmem:[#allocation2 + $0xe8] sm:$0xf] %v731
        %750 = vst [vmem:[#allocation2 + $0xf0] sm:$0xf] %v732
        %751 = vst [vmem:[#allocation2 + $0xf8] sm:$0xf] %v733
        %752 = vst [vmem:[#allocation2 + $0x100] sm:$0xf] %v734
        %753 = vst [vmem:[#allocation2 + $0x108] sm:$0xf] %v735
        %754 = vst [vmem:[#allocation2 + $0x110] sm:$0xf] %v736
        %755 = vst [vmem:[#allocation2 + $0x118] sm:$0xf] %v737
        %756 = vrot.lane.b32.xlu0 %v680, 95
        %v757 = vpop.permute.xlu0 %756
        %758 = vrot.lane.b32.xlu0 %v681, 95
        %v759 = vpop.permute.xlu0 %758
        %760 = vrot.lane.b32.xlu0 %v682, 95
        %v761 = vpop.permute.xlu0 %760
        %762 = vrot.lane.b32.xlu0 %v683, 95
        %v763 = vpop.permute.xlu0 %762
        %764 = vrot.lane.b32.xlu0 %v684, 95
        %v765 = vpop.permute.xlu0 %764
        %766 = vrot.lane.b32.xlu0 %v685, 95
        %v767 = vpop.permute.xlu0 %766
        %768 = vrot.lane.b32.xlu0 %v686, 95
        %v769 = vpop.permute.xlu0 %768
        %770 = vrot.lane.b32.xlu0 %v687, 95
        %v771 = vpop.permute.xlu0 %770
        %772 = vrot.lane.b32.xlu0 %v688, 95
        %v773 = vpop.permute.xlu0 %772
        %774 = vrot.lane.b32.xlu0 %v708, 95
        %v775 = vpop.permute.xlu0 %774
        %v776 = vsel %vm394, %v757, %v759
        %v777 = vsel %vm394, %v759, %v761
        %v778 = vsel %vm394, %v761, %v763
        %v779 = vsel %vm394, %v763, %v765
        %v780 = vsel %vm394, %v765, %v767
        %v781 = vsel %vm394, %v767, %v769
        %v782 = vsel %vm394, %v769, %v771
        %v783 = vsel %vm394, %v771, %v773
        %v784 = vsel %vm394, %v773, %v775
        %794 = vst [vmem:[#allocation2 + $0x1b0] sm:$0xf] %v776
        %795 = vst [vmem:[#allocation2 + $0x1b8] sm:$0xf] %v777
        %796 = vst [vmem:[#allocation2 + $0x1c0] sm:$0xf] %v778
        %797 = vst [vmem:[#allocation2 + $0x1c8] sm:$0xf] %v779
        %798 = vst [vmem:[#allocation2 + $0x1d0] sm:$0xf] %v780
        %799 = vst [vmem:[#allocation2 + $0x1d8] sm:$0xf] %v781
        %800 = vst [vmem:[#allocation2 + $0x1e0] sm:$0xf] %v782
        %801 = vst [vmem:[#allocation2 + $0x1e8] sm:$0xf] %v783
        %802 = vst [vmem:[#allocation2 + $0x1f0] sm:$0xf] %v784
        %803 = vrot.lane.b32.xlu0 %v680, 94
        %v804 = vpop.permute.xlu0 %803
        %805 = vrot.lane.b32.xlu0 %v681, 94
        %v806 = vpop.permute.xlu0 %805
        %807 = vrot.lane.b32.xlu0 %v682, 94
        %v808 = vpop.permute.xlu0 %807
        %809 = vrot.lane.b32.xlu0 %v683, 94
        %v810 = vpop.permute.xlu0 %809
        %811 = vrot.lane.b32.xlu0 %v684, 94
        %v812 = vpop.permute.xlu0 %811
        %813 = vrot.lane.b32.xlu0 %v685, 94
        %v814 = vpop.permute.xlu0 %813
        %815 = vrot.lane.b32.xlu0 %v686, 94
        %v816 = vpop.permute.xlu0 %815
        %817 = vrot.lane.b32.xlu0 %v687, 94
        %v818 = vpop.permute.xlu0 %817
        %819 = vrot.lane.b32.xlu0 %v688, 94
        %v820 = vpop.permute.xlu0 %819
        %821 = vrot.lane.b32.xlu0 %v708, 94
        %v822 = vpop.permute.xlu0 %821
        %v823 = vsel %vm442, %v804, %v806
        %v824 = vsel %vm442, %v806, %v808
        %v825 = vsel %vm442, %v808, %v810
        %v826 = vsel %vm442, %v810, %v812
        %v827 = vsel %vm442, %v812, %v814
        %v828 = vsel %vm442, %v814, %v816
        %v829 = vsel %vm442, %v816, %v818
        %v830 = vsel %vm442, %v818, %v820
        %v831 = vsel %vm442, %v820, %v822
        %841 = vst [vmem:[#allocation2 + $0x1f8] sm:$0xf] %v823
        %842 = vst [vmem:[#allocation2 + $0x200] sm:$0xf] %v824
        %843 = vst [vmem:[#allocation2 + $0x208] sm:$0xf] %v825
        %844 = vst [vmem:[#allocation2 + $0x210] sm:$0xf] %v826
        %845 = vst [vmem:[#allocation2 + $0x218] sm:$0xf] %v827
        %846 = vst [vmem:[#allocation2 + $0x220] sm:$0xf] %v828
        %847 = vst [vmem:[#allocation2 + $0x228] sm:$0xf] %v829
        %848 = vst [vmem:[#allocation2 + $0x230] sm:$0xf] %v830
        %849 = vst [vmem:[#allocation2 + $0x238] sm:$0xf] %v831
        %s850 = scalar_lea.vmem %s267, 120
        %v851 = vld [vmem:[%s850] sm:$0xff]
        %v852 = vld [vmem:[%s850 + $0x8] sm:$0xff]
        %v853 = vld [vmem:[%s850 + $0x10] sm:$0xff]
        %v854 = vld [vmem:[%s850 + $0x18] sm:$0xff]
        %v855 = vld [vmem:[%s850 + $0x20] sm:$0xff]
        %v861 = vunpack.c.l.b16 %v851
        %v862 = vunpack.c.h.b16 %v851
        %v863 = vunpack.c.l.b16 %v852
        %v864 = vunpack.c.h.b16 %v852
        %v865 = vunpack.c.l.b16 %v853
        %v866 = vunpack.c.h.b16 %v853
        %v867 = vunpack.c.l.b16 %v854
        %v868 = vunpack.c.h.b16 %v854
        %v869 = vunpack.c.l.b16 %v855
        %v870 = vpack.c.b16 %v861, %v861
        %v871 = vpack.c.b16 %v862, %v862
        %v872 = vpack.c.b16 %v863, %v863
        %v873 = vpack.c.b16 %v864, %v864
        %v874 = vpack.c.b16 %v865, %v865
        %v875 = vpack.c.b16 %v866, %v866
        %v876 = vpack.c.b16 %v867, %v867
        %v877 = vpack.c.b16 %v868, %v868
        %v878 = vpack.c.b16 %v869, %v869
        %888 = vst [vmem:[#allocation2 + $0x90] sm:$0xf0] %v870
        %889 = vst [vmem:[#allocation2 + $0x98] sm:$0xf0] %v871
        %890 = vst [vmem:[#allocation2 + $0xa0] sm:$0xf0] %v872
        %891 = vst [vmem:[#allocation2 + $0xa8] sm:$0xf0] %v873
        %892 = vst [vmem:[#allocation2 + $0xb0] sm:$0xf0] %v874
        %893 = vst [vmem:[#allocation2 + $0xb8] sm:$0xf0] %v875
        %894 = vst [vmem:[#allocation2 + $0xc0] sm:$0xf0] %v876
        %895 = vst [vmem:[#allocation2 + $0xc8] sm:$0xf0] %v877
        %896 = vst [vmem:[#allocation2 + $0xd0] sm:$0xf0] %v878
        %v897 = vunpack.c.h.b16 %v855
        %v898 = vpack.c.b16 %v897, %v897
        %899 = vrot.lane.b32.xlu0 %v870, 127
        %v900 = vpop.permute.xlu0 %899
        %901 = vrot.lane.b32.xlu0 %v871, 127
        %v902 = vpop.permute.xlu0 %901
        %903 = vrot.lane.b32.xlu0 %v872, 127
        %v904 = vpop.permute.xlu0 %903
        %905 = vrot.lane.b32.xlu0 %v873, 127
        %v906 = vpop.permute.xlu0 %905
        %907 = vrot.lane.b32.xlu0 %v874, 127
        %v908 = vpop.permute.xlu0 %907
        %909 = vrot.lane.b32.xlu0 %v875, 127
        %v910 = vpop.permute.xlu0 %909
        %911 = vrot.lane.b32.xlu0 %v876, 127
        %v912 = vpop.permute.xlu0 %911
        %913 = vrot.lane.b32.xlu0 %v877, 127
        %v914 = vpop.permute.xlu0 %913
        %915 = vrot.lane.b32.xlu0 %v878, 127
        %v916 = vpop.permute.xlu0 %915
        %917 = vrot.lane.b32.xlu0 %v898, 127
        %v918 = vpop.permute.xlu0 %917
        %v919 = vsel %vm346, %v900, %v902
        %v920 = vsel %vm346, %v902, %v904
        %v921 = vsel %vm346, %v904, %v906
        %v922 = vsel %vm346, %v906, %v908
        %v923 = vsel %vm346, %v908, %v910
        %v924 = vsel %vm346, %v910, %v912
        %v925 = vsel %vm346, %v912, %v914
        %v926 = vsel %vm346, %v914, %v916
        %v927 = vsel %vm346, %v916, %v918
        %937 = vst [vmem:[#allocation2 + $0xd8] sm:$0xf0] %v919
        %938 = vst [vmem:[#allocation2 + $0xe0] sm:$0xf0] %v920
        %939 = vst [vmem:[#allocation2 + $0xe8] sm:$0xf0] %v921
        %940 = vst [vmem:[#allocation2 + $0xf0] sm:$0xf0] %v922
        %941 = vst [vmem:[#allocation2 + $0xf8] sm:$0xf0] %v923
        %942 = vst [vmem:[#allocation2 + $0x100] sm:$0xf0] %v924
        %943 = vst [vmem:[#allocation2 + $0x108] sm:$0xf0] %v925
        %944 = vst [vmem:[#allocation2 + $0x110] sm:$0xf0] %v926
        %945 = vst [vmem:[#allocation2 + $0x118] sm:$0xf0] %v927
        %946 = vrot.lane.b32.xlu0 %v870, 95
        %v947 = vpop.permute.xlu0 %946
        %948 = vrot.lane.b32.xlu0 %v871, 95
        %v949 = vpop.permute.xlu0 %948
        %950 = vrot.lane.b32.xlu0 %v872, 95
        %v951 = vpop.permute.xlu0 %950
        %952 = vrot.lane.b32.xlu0 %v873, 95
        %v953 = vpop.permute.xlu0 %952
        %954 = vrot.lane.b32.xlu0 %v874, 95
        %v955 = vpop.permute.xlu0 %954
        %956 = vrot.lane.b32.xlu0 %v875, 95
        %v957 = vpop.permute.xlu0 %956
        %958 = vrot.lane.b32.xlu0 %v876, 95
        %v959 = vpop.permute.xlu0 %958
        %960 = vrot.lane.b32.xlu0 %v877, 95
        %v961 = vpop.permute.xlu0 %960
        %962 = vrot.lane.b32.xlu0 %v878, 95
        %v963 = vpop.permute.xlu0 %962
        %964 = vrot.lane.b32.xlu0 %v898, 95
        %v965 = vpop.permute.xlu0 %964
        %v966 = vsel %vm394, %v947, %v949
        %v967 = vsel %vm394, %v949, %v951
        %v968 = vsel %vm394, %v951, %v953
        %v969 = vsel %vm394, %v953, %v955
        %v970 = vsel %vm394, %v955, %v957
        %v971 = vsel %vm394, %v957, %v959
        %v972 = vsel %vm394, %v959, %v961
        %v973 = vsel %vm394, %v961, %v963
        %v974 = vsel %vm394, %v963, %v965
        %984 = vst [vmem:[#allocation2 + $0x1b0] sm:$0xf0] %v966
        %985 = vst [vmem:[#allocation2 + $0x1b8] sm:$0xf0] %v967
        %986 = vst [vmem:[#allocation2 + $0x1c0] sm:$0xf0] %v968
        %987 = vst [vmem:[#allocation2 + $0x1c8] sm:$0xf0] %v969
        %988 = vst [vmem:[#allocation2 + $0x1d0] sm:$0xf0] %v970
        %989 = vst [vmem:[#allocation2 + $0x1d8] sm:$0xf0] %v971
        %990 = vst [vmem:[#allocation2 + $0x1e0] sm:$0xf0] %v972
        %991 = vst [vmem:[#allocation2 + $0x1e8] sm:$0xf0] %v973
        %992 = vst [vmem:[#allocation2 + $0x1f0] sm:$0xf0] %v974
        %993 = vrot.lane.b32.xlu0 %v870, 94
        %v994 = vpop.permute.xlu0 %993
        %995 = vrot.lane.b32.xlu0 %v871, 94
        %v996 = vpop.permute.xlu0 %995
        %997 = vrot.lane.b32.xlu0 %v872, 94
        %v998 = vpop.permute.xlu0 %997
        %999 = vrot.lane.b32.xlu0 %v873, 94
        %v1000 = vpop.permute.xlu0 %999
        %1001 = vrot.lane.b32.xlu0 %v874, 94
        %v1002 = vpop.permute.xlu0 %1001
        %1003 = vrot.lane.b32.xlu0 %v875, 94
        %v1004 = vpop.permute.xlu0 %1003
        %1005 = vrot.lane.b32.xlu0 %v876, 94
        %v1006 = vpop.permute.xlu0 %1005
        %1007 = vrot.lane.b32.xlu0 %v877, 94
        %v1008 = vpop.permute.xlu0 %1007
        %1009 = vrot.lane.b32.xlu0 %v878, 94
        %v1010 = vpop.permute.xlu0 %1009
        %1011 = vrot.lane.b32.xlu0 %v898, 94
        %v1012 = vpop.permute.xlu0 %1011
        %v1013 = vsel %vm442, %v994, %v996
        %v1014 = vsel %vm442, %v996, %v998
        %v1015 = vsel %vm442, %v998, %v1000
        %v1016 = vsel %vm442, %v1000, %v1002
        %v1017 = vsel %vm442, %v1002, %v1004
        %v1018 = vsel %vm442, %v1004, %v1006
        %v1019 = vsel %vm442, %v1006, %v1008
        %v1020 = vsel %vm442, %v1008, %v1010
        %v1021 = vsel %vm442, %v1010, %v1012
        %1031 = vst [vmem:[#allocation2 + $0x1f8] sm:$0xf0] %v1013
        %1032 = vst [vmem:[#allocation2 + $0x200] sm:$0xf0] %v1014
        %1033 = vst [vmem:[#allocation2 + $0x208] sm:$0xf0] %v1015
        %1034 = vst [vmem:[#allocation2 + $0x210] sm:$0xf0] %v1016
        %1035 = vst [vmem:[#allocation2 + $0x218] sm:$0xf0] %v1017
        %1036 = vst [vmem:[#allocation2 + $0x220] sm:$0xf0] %v1018
        %1037 = vst [vmem:[#allocation2 + $0x228] sm:$0xf0] %v1019
        %1038 = vst [vmem:[#allocation2 + $0x230] sm:$0xf0] %v1020
        %1039 = vst [vmem:[#allocation2 + $0x238] sm:$0xf0] %v1021
        %v1040 = vld [vmem:[#allocation2] sm:$0xff]
        %v1041 = vld [vmem:[#allocation2 + $0x8] sm:$0xff]
        %v1042 = vld [vmem:[#allocation2 + $0x10] sm:$0xff]
        %v1043 = vld [vmem:[#allocation2 + $0x18] sm:$0xff]
        %v1044 = vld [vmem:[#allocation2 + $0x20] sm:$0xff]
        %v1045 = vld [vmem:[#allocation2 + $0x28] sm:$0xff]
        %v1046 = vld [vmem:[#allocation2 + $0x30] sm:$0xff]
        %v1047 = vld [vmem:[#allocation2 + $0x38] sm:$0xff]
        %v1048 = vld [vmem:[#allocation2 + $0x40] sm:$0xff]
        %v1049 = vld [vmem:[#allocation2 + $0x48] sm:$0xff]
        %v1050 = vld [vmem:[#allocation2 + $0x50] sm:$0xff]
        %v1051 = vld [vmem:[#allocation2 + $0x58] sm:$0xff]
        %v1052 = vld [vmem:[#allocation2 + $0x60] sm:$0xff]
        %v1053 = vld [vmem:[#allocation2 + $0x68] sm:$0xff]
        %v1054 = vld [vmem:[#allocation2 + $0x70] sm:$0xff]
        %v1055 = vld [vmem:[#allocation2 + $0x78] sm:$0xff]
        %v1056 = vld [vmem:[#allocation2 + $0x80] sm:$0xff]
        %v1057 = vld [vmem:[#allocation2 + $0x88] sm:$0xff]
        %v1058 = vld [vmem:[#allocation2 + $0x90] sm:$0xff]
        %v1059 = vld [vmem:[#allocation2 + $0x98] sm:$0xff]
        %v1060 = vld [vmem:[#allocation2 + $0xa0] sm:$0xff]
        %v1061 = vld [vmem:[#allocation2 + $0xa8] sm:$0xff]
        %v1062 = vld [vmem:[#allocation2 + $0xb0] sm:$0xff]
        %v1063 = vld [vmem:[#allocation2 + $0xb8] sm:$0xff]
        %v1064 = vld [vmem:[#allocation2 + $0xc0] sm:$0xff]
        %v1065 = vld [vmem:[#allocation2 + $0xc8] sm:$0xff]
        %v1066 = vld [vmem:[#allocation2 + $0xd0] sm:$0xff]
        %v1067 = vld [vmem:[#allocation2 + $0xd8] sm:$0xff]
        %v1068 = vld [vmem:[#allocation2 + $0xe0] sm:$0xff]
        %v1069 = vld [vmem:[#allocation2 + $0xe8] sm:$0xff]
        %v1070 = vld [vmem:[#allocation2 + $0xf0] sm:$0xff]
        %v1071 = vld [vmem:[#allocation2 + $0xf8] sm:$0xff]
        %v1072 = vld [vmem:[#allocation2 + $0x100] sm:$0xff]
        %v1073 = vld [vmem:[#allocation2 + $0x108] sm:$0xff]
        %v1074 = vld [vmem:[#allocation2 + $0x110] sm:$0xff]
        %v1075 = vld [vmem:[#allocation2 + $0x118] sm:$0xff]
        %v1076 = vld [vmem:[#allocation2 + $0x120] sm:$0xff]
        %v1077 = vld [vmem:[#allocation2 + $0x128] sm:$0xff]
        %v1078 = vld [vmem:[#allocation2 + $0x130] sm:$0xff]
        %v1079 = vld [vmem:[#allocation2 + $0x138] sm:$0xff]
        %v1080 = vld [vmem:[#allocation2 + $0x140] sm:$0xff]
        %v1081 = vld [vmem:[#allocation2 + $0x148] sm:$0xff]
        %v1082 = vld [vmem:[#allocation2 + $0x150] sm:$0xff]
        %v1083 = vld [vmem:[#allocation2 + $0x158] sm:$0xff]
        %v1084 = vld [vmem:[#allocation2 + $0x160] sm:$0xff]
        %v1085 = vld [vmem:[#allocation2 + $0x168] sm:$0xff]
        %v1086 = vld [vmem:[#allocation2 + $0x170] sm:$0xff]
        %v1087 = vld [vmem:[#allocation2 + $0x178] sm:$0xff]
        %v1088 = vld [vmem:[#allocation2 + $0x180] sm:$0xff]
        %v1089 = vld [vmem:[#allocation2 + $0x188] sm:$0xff]
        %v1090 = vld [vmem:[#allocation2 + $0x190] sm:$0xff]
        %v1091 = vld [vmem:[#allocation2 + $0x198] sm:$0xff]
        %v1092 = vld [vmem:[#allocation2 + $0x1a0] sm:$0xff]
        %v1093 = vld [vmem:[#allocation2 + $0x1a8] sm:$0xff]
        %v1094 = vld [vmem:[#allocation2 + $0x1b0] sm:$0xff]
        %v1095 = vld [vmem:[#allocation2 + $0x1b8] sm:$0xff]
        %v1096 = vld [vmem:[#allocation2 + $0x1c0] sm:$0xff]
        %v1097 = vld [vmem:[#allocation2 + $0x1c8] sm:$0xff]
        %v1098 = vld [vmem:[#allocation2 + $0x1d0] sm:$0xff]
        %v1099 = vld [vmem:[#allocation2 + $0x1d8] sm:$0xff]
        %v1100 = vld [vmem:[#allocation2 + $0x1e0] sm:$0xff]
        %v1101 = vld [vmem:[#allocation2 + $0x1e8] sm:$0xff]
        %v1102 = vld [vmem:[#allocation2 + $0x1f0] sm:$0xff]
        %v1103 = vld [vmem:[#allocation2 + $0x1f8] sm:$0xff]
        %v1104 = vld [vmem:[#allocation2 + $0x200] sm:$0xff]
        %v1105 = vld [vmem:[#allocation2 + $0x208] sm:$0xff]
        %v1106 = vld [vmem:[#allocation2 + $0x210] sm:$0xff]
        %v1107 = vld [vmem:[#allocation2 + $0x218] sm:$0xff]
        %v1108 = vld [vmem:[#allocation2 + $0x220] sm:$0xff]
        %v1109 = vld [vmem:[#allocation2 + $0x228] sm:$0xff]
        %v1110 = vld [vmem:[#allocation2 + $0x230] sm:$0xff]
        %v1111 = vld [vmem:[#allocation2 + $0x238] sm:$0xff]
        %1113 = vset.pattern.permute.xlu0 0
        %1114 = vperm.xlu0 %1113, %v275
        %v1115 = vpop.permute.xlu0 %1114
        %1117 = vmatprep.subr.bf16.mxu0 %v1041
        %1118 = vmatpush1.bf16.msra.mxu0 %v1040
        %1119 = vmatprep.subr.bf16.mxu0 %v1050
        %1120 = vmatpush1.bf16.msra.mxu0 %v1049
        %1121 = vmatprep.subr.bf16.mxu0 %v1059
        %1122 = vmatpush1.bf16.msra.mxu0 %v1058
        %1123 = vmatprep.subr.bf16.mxu0 %v1068
        %1124 = vmatpush1.bf16.msra.mxu0 %v1067
        %1125 = vmatprep.subr.bf16.mxu0 %v1077
        %1126 = vmatpush1.bf16.msra.mxu0 %v1076
        %1127 = vmatprep.subr.bf16.mxu0 %v1086
        %1128 = vmatpush1.bf16.msra.mxu0 %v1085
        %1129 = vmatprep.subr.bf16.mxu0 %v1095
        %1130 = vmatpush1.bf16.msra.mxu0 %v1094
        %1131 = vmatprep.subr.bf16.mxu0 %v1104
        %1132 = vmatpush1.bf16.msra.mxu0 %v1103
        %1133 = vmatprep.subr.bf16.mxu0 0
        %1134 = vmatpush1.bf16.msra.mxu0 0
        %1135 = vmatprep.subr.bf16.mxu0 0
        %1136 = vmatpush1.bf16.msra.mxu0 0
        %1137 = vmatprep.subr.bf16.mxu0 0
        %1138 = vmatpush1.bf16.msra.mxu0 0
        %1139 = vmatprep.subr.bf16.mxu0 0
        %1140 = vmatpush1.bf16.msra.mxu0 0
        %1141 = vmatprep.subr.bf16.mxu0 0
        %1142 = vmatpush1.bf16.msra.mxu0 0
        %1143 = vmatprep.subr.bf16.mxu0 0
        %1144 = vmatpush1.bf16.msra.mxu0 0
        %1145 = vmatprep.subr.bf16.mxu0 0
        %1146 = vmatpush1.bf16.msra.mxu0 0
        %1147 = vmatprep.subr.bf16.mxu0 0
        %1148 = vmatpush1.bf16.msra.mxu0 0
        %1149 = vmatprep.mubr.bf16.mxu0 0
        %1150 = vmatmul.mubr.bf16.gmra.mrb[0].mxu0 %v274
        %v1151 = vpop.f32.mrb[0].mxu0
        %v1152 = vadd.f32 %v1115, %v1151
        %v1153 = vpop.f32.mrb[0].mxu0
        %v1154 = vadd.f32 %v1115, %v1153
        %v1155 = vpop.f32.mrb[0].mxu0
        %v1156 = vpop.f32.mrb[0].mxu0
        %1157 = vdwg.mxu0
        %1158 = vmatprep.subr.bf16.mxu0 %v1043
        %1159 = vmatpush1.bf16.msra.mxu0 %v1042
        %1160 = vmatprep.subr.bf16.mxu0 %v1052
        %1161 = vmatpush1.bf16.msra.mxu0 %v1051
        %1162 = vmatprep.subr.bf16.mxu0 %v1061
        %1163 = vmatpush1.bf16.msra.mxu0 %v1060
        %1164 = vmatprep.subr.bf16.mxu0 %v1070
        %1165 = vmatpush1.bf16.msra.mxu0 %v1069
        %1166 = vmatprep.subr.bf16.mxu0 %v1079
        %1167 = vmatpush1.bf16.msra.mxu0 %v1078
        %1168 = vmatprep.subr.bf16.mxu0 %v1088
        %1169 = vmatpush1.bf16.msra.mxu0 %v1087
        %1170 = vmatprep.subr.bf16.mxu0 %v1097
        %1171 = vmatpush1.bf16.msra.mxu0 %v1096
        %1172 = vmatprep.subr.bf16.mxu0 %v1106
        %1173 = vmatpush1.bf16.msra.mxu0 %v1105
        %1174 = vmatprep.subr.bf16.mxu0 0
        %1175 = vmatpush1.bf16.msra.mxu0 0
        %1176 = vmatprep.subr.bf16.mxu0 0
        %1177 = vmatpush1.bf16.msra.mxu0 0
        %1178 = vmatprep.subr.bf16.mxu0 0
        %1179 = vmatpush1.bf16.msra.mxu0 0
        %1180 = vmatprep.subr.bf16.mxu0 0
        %1181 = vmatpush1.bf16.msra.mxu0 0
        %1182 = vmatprep.subr.bf16.mxu0 0
        %1183 = vmatpush1.bf16.msra.mxu0 0
        %1184 = vmatprep.subr.bf16.mxu0 0
        %1185 = vmatpush1.bf16.msra.mxu0 0
        %1186 = vmatprep.subr.bf16.mxu0 0
        %1187 = vmatpush1.bf16.msra.mxu0 0
        %1188 = vmatprep.subr.bf16.mxu0 0
        %1189 = vmatpush1.bf16.msra.mxu0 0
        %1190 = vmatprep.mubr.bf16.mxu0 0
        %1191 = vmatmul.mubr.bf16.gmra.mrb[0].mxu0 %v274
        %v1192 = vpop.f32.mrb[0].mxu0
        %v1193 = vadd.f32 %v1115, %v1192
        %v1194 = vpop.f32.mrb[0].mxu0
        %v1195 = vadd.f32 %v1115, %v1194
        %v1196 = vpop.f32.mrb[0].mxu0
        %v1197 = vpop.f32.mrb[0].mxu0
        %1198 = vdwg.mxu0
        %1199 = vmatprep.subr.bf16.mxu0 %v1045
        %1200 = vmatpush1.bf16.msra.mxu0 %v1044
        %1201 = vmatprep.subr.bf16.mxu0 %v1054
        %1202 = vmatpush1.bf16.msra.mxu0 %v1053
        %1203 = vmatprep.subr.bf16.mxu0 %v1063
        %1204 = vmatpush1.bf16.msra.mxu0 %v1062
        %1205 = vmatprep.subr.bf16.mxu0 %v1072
        %1206 = vmatpush1.bf16.msra.mxu0 %v1071
        %1207 = vmatprep.subr.bf16.mxu0 %v1081
        %1208 = vmatpush1.bf16.msra.mxu0 %v1080
        %1209 = vmatprep.subr.bf16.mxu0 %v1090
        %1210 = vmatpush1.bf16.msra.mxu0 %v1089
        %1211 = vmatprep.subr.bf16.mxu0 %v1099
        %1212 = vmatpush1.bf16.msra.mxu0 %v1098
        %1213 = vmatprep.subr.bf16.mxu0 %v1108
        %1214 = vmatpush1.bf16.msra.mxu0 %v1107
        %1215 = vmatprep.subr.bf16.mxu0 0
        %1216 = vmatpush1.bf16.msra.mxu0 0
        %1217 = vmatprep.subr.bf16.mxu0 0
        %1218 = vmatpush1.bf16.msra.mxu0 0
        %1219 = vmatprep.subr.bf16.mxu0 0
        %1220 = vmatpush1.bf16.msra.mxu0 0
        %1221 = vmatprep.subr.bf16.mxu0 0
        %1222 = vmatpush1.bf16.msra.mxu0 0
        %1223 = vmatprep.subr.bf16.mxu0 0
        %1224 = vmatpush1.bf16.msra.mxu0 0
        %1225 = vmatprep.subr.bf16.mxu0 0
        %1226 = vmatpush1.bf16.msra.mxu0 0
        %1227 = vmatprep.subr.bf16.mxu0 0
        %1228 = vmatpush1.bf16.msra.mxu0 0
        %1229 = vmatprep.subr.bf16.mxu0 0
        %1230 = vmatpush1.bf16.msra.mxu0 0
        %1231 = vmatprep.mubr.bf16.mxu0 0
        %1232 = vmatmul.mubr.bf16.gmra.mrb[0].mxu0 %v274
        %v1233 = vpop.f32.mrb[0].mxu0
        %v1234 = vadd.f32 %v1115, %v1233
        %v1235 = vpop.f32.mrb[0].mxu0
        %v1236 = vadd.f32 %v1115, %v1235
        %v1237 = vpop.f32.mrb[0].mxu0
        %v1238 = vpop.f32.mrb[0].mxu0
        %1239 = vdwg.mxu0
        %1240 = vmatprep.subr.bf16.mxu0 %v1047
        %1241 = vmatpush1.bf16.msra.mxu0 %v1046
        %1242 = vmatprep.subr.bf16.mxu0 %v1056
        %1243 = vmatpush1.bf16.msra.mxu0 %v1055
        %1244 = vmatprep.subr.bf16.mxu0 %v1065
        %1245 = vmatpush1.bf16.msra.mxu0 %v1064
        %1246 = vmatprep.subr.bf16.mxu0 %v1074
        %1247 = vmatpush1.bf16.msra.mxu0 %v1073
        %1248 = vmatprep.subr.bf16.mxu0 %v1083
        %1249 = vmatpush1.bf16.msra.mxu0 %v1082
        %1250 = vmatprep.subr.bf16.mxu0 %v1092
        %1251 = vmatpush1.bf16.msra.mxu0 %v1091
        %1252 = vmatprep.subr.bf16.mxu0 %v1101
        %1253 = vmatpush1.bf16.msra.mxu0 %v1100
        %1254 = vmatprep.subr.bf16.mxu0 %v1110
        %1255 = vmatpush1.bf16.msra.mxu0 %v1109
        %1256 = vmatprep.subr.bf16.mxu0 0
        %1257 = vmatpush1.bf16.msra.mxu0 0
        %1258 = vmatprep.subr.bf16.mxu0 0
        %1259 = vmatpush1.bf16.msra.mxu0 0
        %1260 = vmatprep.subr.bf16.mxu0 0
        %1261 = vmatpush1.bf16.msra.mxu0 0
        %1262 = vmatprep.subr.bf16.mxu0 0
        %1263 = vmatpush1.bf16.msra.mxu0 0
        %1264 = vmatprep.subr.bf16.mxu0 0
        %1265 = vmatpush1.bf16.msra.mxu0 0
        %1266 = vmatprep.subr.bf16.mxu0 0
        %1267 = vmatpush1.bf16.msra.mxu0 0
        %1268 = vmatprep.subr.bf16.mxu0 0
        %1269 = vmatpush1.bf16.msra.mxu0 0
        %1270 = vmatprep.subr.bf16.mxu0 0
        %1271 = vmatpush1.bf16.msra.mxu0 0
        %1272 = vmatprep.mubr.bf16.mxu0 0
        %1273 = vmatmul.mubr.bf16.gmra.mrb[0].mxu0 %v274
        %v1274 = vpop.f32.mrb[0].mxu0
        %v1275 = vadd.f32 %v1115, %v1274
        %v1276 = vpop.f32.mrb[0].mxu0
        %v1277 = vadd.f32 %v1115, %v1276
        %v1278 = vpop.f32.mrb[0].mxu0
        %v1279 = vpop.f32.mrb[0].mxu0
        %1280 = vdwg.mxu0
        %1281 = vmatprep.subr.bf16.mxu0 0
        %1282 = vmatpush1.bf16.msra.mxu0 %v1048
        %1283 = vmatprep.subr.bf16.mxu0 0
        %1284 = vmatpush1.bf16.msra.mxu0 %v1057
        %1285 = vmatprep.subr.bf16.mxu0 0
        %1286 = vmatpush1.bf16.msra.mxu0 %v1066
        %1287 = vmatprep.subr.bf16.mxu0 0
        %1288 = vmatpush1.bf16.msra.mxu0 %v1075
        %1289 = vmatprep.subr.bf16.mxu0 0
        %1290 = vmatpush1.bf16.msra.mxu0 %v1084
        %1291 = vmatprep.subr.bf16.mxu0 0
        %1292 = vmatpush1.bf16.msra.mxu0 %v1093
        %1293 = vmatprep.subr.bf16.mxu0 0
        %1294 = vmatpush1.bf16.msra.mxu0 %v1102
        %1295 = vmatprep.subr.bf16.mxu0 0
        %1296 = vmatpush1.bf16.msra.mxu0 %v1111
        %1297 = vmatprep.subr.bf16.mxu0 0
        %1298 = vmatpush1.bf16.msra.mxu0 0
        %1299 = vmatprep.subr.bf16.mxu0 0
        %1300 = vmatpush1.bf16.msra.mxu0 0
        %1301 = vmatprep.subr.bf16.mxu0 0
        %1302 = vmatpush1.bf16.msra.mxu0 0
        %1303 = vmatprep.subr.bf16.mxu0 0
        %1304 = vmatpush1.bf16.msra.mxu0 0
        %1305 = vmatprep.subr.bf16.mxu0 0
        %1306 = vmatpush1.bf16.msra.mxu0 0
        %1307 = vmatprep.subr.bf16.mxu0 0
        %1308 = vmatpush1.bf16.msra.mxu0 0
        %1309 = vmatprep.subr.bf16.mxu0 0
        %1310 = vmatpush1.bf16.msra.mxu0 0
        %1311 = vmatprep.subr.bf16.mxu0 0
        %1312 = vmatpush1.bf16.msra.mxu0 0
        %1313 = vmatprep.mubr.bf16.mxu0 0
        %1314 = vmatmul.mubr.bf16.gmra.mrb[0].mxu0 %v274
        %v1315 = vpop.f32.mrb[0].mxu0
        %v1316 = vadd.f32 %v1115, %v1315
        %v1317 = vpop.f32.mrb[0].mxu0
        %v1318 = vpop.f32.mrb[0].mxu0
        %v1319 = vpop.f32.mrb[0].mxu0
        %1320 = vdwg.mxu0
        %1321 = vst [vmem:[%s272] sm:$0xff] %v1152
        %1322 = vst [vmem:[%s272 + $0x8] sm:$0xff] %v1154
        %1323 = vst [vmem:[%s272 + $0x10] sm:$0xff] %v1193
        %1324 = vst [vmem:[%s272 + $0x18] sm:$0xff] %v1195
        %1325 = vst [vmem:[%s272 + $0x20] sm:$0xff] %v1234
        %1326 = vst [vmem:[%s272 + $0x28] sm:$0xff] %v1236
        %1327 = vst [vmem:[%s272 + $0x30] sm:$0xff] %v1275
        %1328 = vst [vmem:[%s272 + $0x38] sm:$0xff] %v1277
        %1329 = vst [vmem:[%s272 + $0x40] sm:$0xff] %v1316
        %v1332 = vlaneseq
        %v1333 = vshrl.u32 %v1332, 7
        %v1334 = vsub.s32 0, %v1333
        %v1335 = vrot.slane %v276, %v1334
        %v1336 = vlaneseq
        %v1337 = vshrl.u32 %v1336, 7
        %v1338 = vsub.s32 1, %v1337
        %v1339 = vrot.slane %v276, %v1338
        %v1340 = vlaneseq
        %v1341 = vshrl.u32 %v1340, 7
        %v1342 = vsub.s32 2, %v1341
        %v1343 = vrot.slane %v276, %v1342
        %v1344 = vlaneseq
        %v1345 = vshrl.u32 %v1344, 7
        %v1346 = vsub.s32 3, %v1345
        %v1347 = vrot.slane %v276, %v1346
        %v1348 = vlaneseq
        %v1349 = vshrl.u32 %v1348, 7
        %v1350 = vsub.s32 4, %v1349
        %v1351 = vrot.slane %v276, %v1350
        %v1352 = vlaneseq
        %v1353 = vshrl.u32 %v1352, 7
        %v1354 = vsub.s32 5, %v1353
        %v1355 = vrot.slane %v276, %v1354
        %v1356 = vlaneseq
        %v1357 = vshrl.u32 %v1356, 7
        %v1358 = vsub.s32 6, %v1357
        %v1359 = vrot.slane %v276, %v1358
        %v1360 = vlaneseq
        %v1361 = vshrl.u32 %v1360, 7
        %v1362 = vsub.s32 7, %v1361
        %v1363 = vrot.slane %v276, %v1362
        %v1364 = vlaneseq
        %v1365 = vshrl.u32 %v1364, 7
        %v1366 = vsub.s32 0, %v1365
        %v1367 = vrot.slane %v277, %v1366
        %v1377 = vmul.f32 %v1152, %v1335
        %v1378 = vmul.f32 %v1154, %v1339
        %v1379 = vmul.f32 %v1193, %v1343
        %v1380 = vmul.f32 %v1195, %v1347
        %v1381 = vmul.f32 %v1234, %v1351
        %v1382 = vmul.f32 %v1236, %v1355
        %v1383 = vmul.f32 %v1275, %v1359
        %v1384 = vmul.f32 %v1277, %v1363
        %v1385 = vmul.f32 %v1316, %v1367
        %v1386 = vadd.f32 %v1377, %v1378
        %v1387 = vadd.f32 %v1386, %v1379
        %v1388 = vadd.f32 %v1387, %v1380
        %v1389 = vadd.f32 %v1388, %v1381
        %v1390 = vadd.f32 %v1389, %v1382
        %v1391 = vadd.f32 %v1390, %v1383
        %v1392 = vadd.f32 %v1391, %v1384
        %v1393 = vadd.f32 %v1392, %v1385
        %1394 = vadd.xlane.f32.xlu0 %v1393
        %v1395 = vpop.xlane.xlu0 %1394
        %v1396 = vadd.f32 %v1395, 0.0
        %v1397 = vmul.f32 %v1377, %v1377
        %v1398 = vmul.f32 %v1378, %v1378
        %v1399 = vmul.f32 %v1379, %v1379
        %v1400 = vmul.f32 %v1380, %v1380
        %v1401 = vmul.f32 %v1381, %v1381
        %v1402 = vmul.f32 %v1382, %v1382
        %v1403 = vmul.f32 %v1383, %v1383
        %v1404 = vmul.f32 %v1384, %v1384
        %v1405 = vmul.f32 %v1385, %v1385
        %v1406 = vadd.f32 %v1397, %v1398
        %v1407 = vadd.f32 %v1406, %v1399
        %v1408 = vadd.f32 %v1407, %v1400
        %v1409 = vadd.f32 %v1408, %v1401
        %v1410 = vadd.f32 %v1409, %v1402
        %v1411 = vadd.f32 %v1410, %v1403
        %v1412 = vadd.f32 %v1411, %v1404
        %v1413 = vadd.f32 %v1412, %v1405
        %1414 = vadd.xlane.f32.xlu0 %v1413
        %v1415 = vpop.xlane.xlu0 %1414
        %v1416 = vadd.f32 %v1415, 0.0
        %vm1417 = vcmask 7168
        %1418 = vst.msk [vmem:[%s255] sm:$0xff] %vm1417, %v1396
        %1419 = vst.msk [vmem:[%s262] sm:$0xff] %vm1417, %v1416
        %p1420 = scmp.lt.s32.totalorder %s24, 1
        %s1421 = scalar_select %p1420, %s24, 1
        %s1422 = smul.addr %s1421, 9
        %s1423 = smul.addr %s1422, 8
        %s1424 = scalar_lea.vmem %s4, %s1423
        %s1425 = sand.u32 %s147, 1
        %s1426 = scalar_lea.sflag [#allocation4], %s1425
        %s1427 = sand.u32 %s147, 1
        %s1428 = smul.addr %s1427, 8
        %s1429 = scalar_lea.vmem [#allocation3], %s1428
        %s1430 = sand.u32 %s173, 1
        %s1431 = scalar_lea.sflag [#allocation6], %s1430
        %s1432 = sand.u32 %s173, 1
        %s1433 = smul.addr %s1432, 8
        %s1434 = scalar_lea.vmem [#allocation5], %s1433
        // Predicated region
        $region37: #{rec_discriminator_forward.4} parent=35 // pred_check
          %p1435 = pneg %p131
        $region38: #{rec_discriminator_forward.4} parent=35 // pred_check_branch
          %1437 = sbr.rel (%p1435) target = $region40
        $region39: #{rec_discriminator_forward.4} parent=35 // pred_region
          _
        $region40: #{rec_discriminator_forward.4} parent=35 // pred_fallthru
          _
        // Predicated region
        $region41: #{rec_discriminator_forward.4} parent=35 // pred_check
          %p1438 = pneg %p157
        $region42: #{rec_discriminator_forward.4} parent=35 // pred_check_branch
          %1440 = sbr.rel (%p1438) target = $region44
        $region43: #{rec_discriminator_forward.4} parent=35 // pred_region
          %s1442 = ssub.s32 128, 128
          %1443 = vsyncadd %s1426, %s1442
          %s1444 = smul.addr %s24, 128
          %s1445 = scalar_lea.hbm %s5, %s1444
          %s1447 = sshll.u32 %s1429, 4
          %s1448 = int_to_ptr.vmem [resolvable:$true] %s1447
          %1450 = dma.vmem_to_hbm [thread:$0]  %s1448, 128, %s1445, %s1426
        $region44: #{rec_discriminator_forward.4} parent=35 // pred_fallthru
          _
        // Predicated region
        $region45: #{rec_discriminator_forward.4} parent=35 // pred_check
          %p1451 = pneg %p183
        $region46: #{rec_discriminator_forward.4} parent=35 // pred_check_branch
          %1453 = sbr.rel (%p1451) target = $region48
        $region47: #{rec_discriminator_forward.4} parent=35 // pred_region
          %s1455 = ssub.s32 128, 128
          %1456 = vsyncadd %s1431, %s1455
          %s1457 = smul.addr %s24, 128
          %s1458 = scalar_lea.hbm %s6, %s1457
          %s1460 = sshll.u32 %s1434, 4
          %s1461 = int_to_ptr.vmem [resolvable:$true] %s1460
          %1463 = dma.vmem_to_hbm [thread:$0]  %s1461, 128, %s1458, %s1431
        $region48: #{rec_discriminator_forward.4} parent=35 // pred_fallthru
          _
      $region36: #{rec_discriminator_forward.4} parent=5 // pred_fallthru
        _
      %p1464 = scmp.le.s32.totalorder 2, %s19
      // Predicated region
      $region49: #{rec_discriminator_forward.4} parent=5 // pred_check
        %p1465 = pneg %p1464
      $region50: #{rec_discriminator_forward.4} parent=5 // pred_check_branch
        %1467 = sbr.rel (%p1465) target = $region52
      $region51: #{rec_discriminator_forward.4} parent=5 // pred_region
        %s1468 = ssub.s32 %s19, 2
        // Predicated region
        $region53: #{rec_discriminator_forward.4} parent=51 // pred_check
          %p1469 = pneg %p137
        $region54: #{rec_discriminator_forward.4} parent=51 // pred_check_branch
          %1471 = sbr.rel (%p1469) target = $region56
        $region55: #{rec_discriminator_forward.4} parent=51 // pred_region
          %p1472 = scmp.lt.s32.totalorder %s25, 1
          %s1473 = scalar_select %p1472, %s25, 1
          %s1474 = smul.addr %s1473, 9
          %s1475 = smul.addr %s1474, 8
          %s1476 = scalar_lea.vmem %s4, %s1475
        $region56: #{rec_discriminator_forward.4} parent=51 // pred_fallthru
          _
        // Predicated region
        $region57: #{rec_discriminator_forward.4} parent=51 // pred_check
          %p1477 = pneg %p163
        $region58: #{rec_discriminator_forward.4} parent=51 // pred_check_branch
          %1479 = sbr.rel (%p1477) target = $region60
        $region59: #{rec_discriminator_forward.4} parent=51 // pred_region
          %s1480 = sand.u32 %s148, 1
          %s1481 = scalar_lea.sflag [#allocation4], %s1480
          %s1482 = sand.u32 %s148, 1
          %s1483 = smul.addr %s1482, 8
          %s1484 = scalar_lea.vmem [#allocation3], %s1483
          %1485 = dma.done %s1481, 128
        $region60: #{rec_discriminator_forward.4} parent=51 // pred_fallthru
          _
        // Predicated region
        $region61: #{rec_discriminator_forward.4} parent=51 // pred_check
          %p1486 = pneg %p189
        $region62: #{rec_discriminator_forward.4} parent=51 // pred_check_branch
          %1488 = sbr.rel (%p1486) target = $region64
        $region63: #{rec_discriminator_forward.4} parent=51 // pred_region
          %s1489 = sand.u32 %s174, 1
          %s1490 = scalar_lea.sflag [#allocation6], %s1489
          %s1491 = sand.u32 %s174, 1
          %s1492 = smul.addr %s1491, 8
          %s1493 = scalar_lea.vmem [#allocation5], %s1492
          %1494 = dma.done %s1490, 128
        $region64: #{rec_discriminator_forward.4} parent=51 // pred_fallthru
          _
      $region52: #{rec_discriminator_forward.4} parent=5 // pred_fallthru
        _
    $region6: #{rec_discriminator_forward.4} parent=1 // loop_footer
      %s23 = sadd.s32 1, %s19
    $region7: #{rec_discriminator_forward.4} parent=1 // loop_footer_branch
      %18 = sbr.rel target = $region3
    $region8: #{rec_discriminator_forward.4} parent=1 // loop_exit
      _
    %1495 = vsyncpa [#allocation4], 1
    %s1496 = scalar_lea.sflag [#allocation4], 1
    %1497 = vsyncpa %s1496, 1
    %1498 = vsyncpa [#allocation6], 1
    %s1499 = scalar_lea.sflag [#allocation6], 1
    %1500 = vsyncpa %s1499, 1

// kernel: rec_discriminator_forward.5
$region0: #{rec_discriminator_forward.5}
  #allocation0 [shape = 'u32[]', space=smem, size = 0x4, offset = 0x4, fixed_abs, tag = 'smem constant byte address 0x4 - core index']
  #allocation1 [shape = 'u32[144,128]{1,0:T(1,128)}', space=vmem, size = 0x12000, scoped, tag = 'internal scratch']
  #allocation2 [shape = 'bf16[128,384]{1,0:T(16,128)(2,1)}', space=vmem, size = 0x18000, scoped, tag = 'scratch operand']
  %s0 = inlined_call_operand.vmem [shape: bf16[2,4,8,512], index: 0, kind: input, shape index: {}]
  %s1 = inlined_call_operand.vmem [shape: bf16[16,128], index: 1, kind: input, shape index: {}]
  %s2 = inlined_call_operand.vmem [shape: f32[16,1], index: 2, kind: input, shape index: {}]
  %s3 = inlined_call_operand.vmem [shape: f32[1,384], index: 3, kind: input, shape index: {}]
  %s4 = inlined_call_operand.vmem [shape: f32[2,16,384], index: 4, kind: output, shape index: {0}]
  %s5 = inlined_call_operand.vmem [shape: f32[2,16,1], index: 5, kind: output, shape index: {1}]
  %s6 = inlined_call_operand.vmem [shape: f32[2,16,1], index: 6, kind: output, shape index: {2}]
  %7 = xla_tuple %s4, %s5, %s6
  %s8 = sld [smem:[#allocation0]]
  $region65: #{rec_discriminator_forward.5} parent=0
    _
  %s10 = ssub.s32 1, %s8
  %s11 = scalar_select 0, %s10, %s8
  loop: start=0, step=1, limit=4
  $region2: #{rec_discriminator_forward.5} parent=0 // loop_pre_header
    _
  $region3: #{rec_discriminator_forward.5} parent=0 // loop_header
    %s13 = sphi 0, %s17
    %p14 = scmp.ge.s32.totalorder %s13, 4
    %s23 = sphi 0, %s25
    %s26 = sphi 0, %s23
    %s27 = sphi 0, %s26
    %s43 = sphi 0, %s27
    %s47 = sphi 0, %s47
    %s49 = sphi 0, %s47
    %s50 = sphi 0, %s49
    %s64 = sphi 0, %s50
    %s68 = sphi 0, %s68
    %s70 = sphi 0, %s68
    %s71 = sphi 0, %s70
    %s85 = sphi 0, %s71
    %s89 = sphi 0, %s89
    %s91 = sphi 0, %s89
    %s92 = sphi 0, %s91
    %s106 = sphi 0, %s92
    %s112 = sphi 0, %s114
    %s115 = sphi 0, %s112
    %s116 = sphi 0, %s115
    %s132 = sphi 0, %s116
    %s138 = sphi 0, %s140
    %s141 = sphi 0, %s138
    %s142 = sphi 0, %s141
    %s158 = sphi 0, %s142
    %s164 = sphi 0, %s166
    %s167 = sphi 0, %s164
    %s168 = sphi 0, %s167
    %s184 = sphi 0, %s168
  $region4: #{rec_discriminator_forward.5} parent=0 // loop_header_branch
    %16 = sbr.rel (%p14) target = $region8
  $region5: #{rec_discriminator_forward.5} parent=0 // loop_body
    %s18 = ssub.s32 %s13, 1
    %s19 = ssub.s32 %s13, 2
    %s20 = sadd.s32 %s13, 1
    %s21 = ssub.s32 %s13, %s20
    %p22 = scmp.eq.s32.totalorder %s21, 0
    %s24 = sadd.s32 %s23, 1
    %s25 = scalar_select %p22, %s23, %s24
    %p28 = pneg %p22
    %p29 = scmp.eq.s32.totalorder %s13, 1
    %p30 = por %p28, %p29
    %p31 = scmp.ne.s32.totalorder %s23, %s26
    %p32 = scmp.eq.s32.totalorder %s13, 0
    %p33 = por %p31, %p32
    %p34 = scmp.ne.s32.totalorder %s23, %s26
    %p35 = scmp.eq.s32.totalorder %s18, 1
    %p36 = por %p34, %p35
    %p37 = scmp.ne.s32.totalorder %s26, %s27
    %p38 = scmp.eq.s32.totalorder %s18, 0
    %p39 = por %p37, %p38
    %p40 = scmp.ne.s32.totalorder %s26, %s27
    %p41 = scmp.eq.s32.totalorder %s19, 1
    %p42 = por %p40, %p41
    %p44 = scmp.ne.s32.totalorder %s27, %s43
    %p45 = scmp.eq.s32.totalorder %s19, 0
    %p46 = por %p44, %p45
    %s48 = sadd.s32 %s47, 1
    %p51 = scmp.eq.s32.totalorder %s13, 1
    %p52 = scmp.ne.s32.totalorder %s47, %s49
    %p53 = scmp.eq.s32.totalorder %s13, 0
    %p54 = por %p52, %p53
    %p55 = scmp.ne.s32.totalorder %s47, %s49
    %p56 = scmp.eq.s32.totalorder %s18, 1
    %p57 = por %p55, %p56
    %p58 = scmp.ne.s32.totalorder %s49, %s50
    %p59 = scmp.eq.s32.totalorder %s18, 0
    %p60 = por %p58, %p59
    %p61 = scmp.ne.s32.totalorder %s49, %s50
    %p62 = scmp.eq.s32.totalorder %s19, 1
    %p63 = por %p61, %p62
    %p65 = scmp.ne.s32.totalorder %s50, %s64
    %p66 = scmp.eq.s32.totalorder %s19, 0
    %p67 = por %p65, %p66
    %s69 = sadd.s32 %s68, 1
    %p72 = scmp.eq.s32.totalorder %s13, 1
    %p73 = scmp.ne.s32.totalorder %s68, %s70
    %p74 = scmp.eq.s32.totalorder %s13, 0
    %p75 = por %p73, %p74
    %p76 = scmp.ne.s32.totalorder %s68, %s70
    %p77 = scmp.eq.s32.totalorder %s18, 1
    %p78 = por %p76, %p77
    %p79 = scmp.ne.s32.totalorder %s70, %s71
    %p80 = scmp.eq.s32.totalorder %s18, 0
    %p81 = por %p79, %p80
    %p82 = scmp.ne.s32.totalorder %s70, %s71
    %p83 = scmp.eq.s32.totalorder %s19, 1
    %p84 = por %p82, %p83
    %p86 = scmp.ne.s32.totalorder %s71, %s85
    %p87 = scmp.eq.s32.totalorder %s19, 0
    %p88 = por %p86, %p87
    %s90 = sadd.s32 %s89, 1
    %p93 = scmp.eq.s32.totalorder %s13, 1
    %p94 = scmp.ne.s32.totalorder %s89, %s91
    %p95 = scmp.eq.s32.totalorder %s13, 0
    %p96 = por %p94, %p95
    %p97 = scmp.ne.s32.totalorder %s89, %s91
    %p98 = scmp.eq.s32.totalorder %s18, 1
    %p99 = por %p97, %p98
    %p100 = scmp.ne.s32.totalorder %s91, %s92
    %p101 = scmp.eq.s32.totalorder %s18, 0
    %p102 = por %p100, %p101
    %p103 = scmp.ne.s32.totalorder %s91, %s92
    %p104 = scmp.eq.s32.totalorder %s19, 1
    %p105 = por %p103, %p104
    %p107 = scmp.ne.s32.totalorder %s92, %s106
    %p108 = scmp.eq.s32.totalorder %s19, 0
    %p109 = por %p107, %p108
    %s110 = ssub.s32 %s13, %s20
    %p111 = scmp.eq.s32.totalorder %s110, 0
    %s113 = sadd.s32 %s112, 1
    %s114 = scalar_select %p111, %s112, %s113
    %p117 = pneg %p111
    %p118 = scmp.eq.s32.totalorder %s13, 1
    %p119 = por %p117, %p118
    %p120 = scmp.ne.s32.totalorder %s112, %s115
    %p121 = scmp.eq.s32.totalorder %s13, 0
    %p122 = por %p120, %p121
    %p123 = scmp.ne.s32.totalorder %s112, %s115
    %p124 = scmp.eq.s32.totalorder %s18, 1
    %p125 = por %p123, %p124
    %p126 = scmp.ne.s32.totalorder %s115, %s116
    %p127 = scmp.eq.s32.totalorder %s18, 0
    %p128 = por %p126, %p127
    %p129 = scmp.ne.s32.totalorder %s115, %s116
    %p130 = scmp.eq.s32.totalorder %s19, 1
    %p131 = por %p129, %p130
    %p133 = scmp.ne.s32.totalorder %s116, %s132
    %p134 = scmp.eq.s32.totalorder %s19, 0
    %p135 = por %p133, %p134
    %s136 = ssub.s32 %s13, %s20
    %p137 = scmp.eq.s32.totalorder %s136, 0
    %s139 = sadd.s32 %s138, 1
    %s140 = scalar_select %p137, %s138, %s139
    %p143 = pneg %p137
    %p144 = scmp.eq.s32.totalorder %s13, 1
    %p145 = por %p143, %p144
    %p146 = scmp.ne.s32.totalorder %s138, %s141
    %p147 = scmp.eq.s32.totalorder %s13, 0
    %p148 = por %p146, %p147
    %p149 = scmp.ne.s32.totalorder %s138, %s141
    %p150 = scmp.eq.s32.totalorder %s18, 1
    %p151 = por %p149, %p150
    %p152 = scmp.ne.s32.totalorder %s141, %s142
    %p153 = scmp.eq.s32.totalorder %s18, 0
    %p154 = por %p152, %p153
    %p155 = scmp.ne.s32.totalorder %s141, %s142
    %p156 = scmp.eq.s32.totalorder %s19, 1
    %p157 = por %p155, %p156
    %p159 = scmp.ne.s32.totalorder %s142, %s158
    %p160 = scmp.eq.s32.totalorder %s19, 0
    %p161 = por %p159, %p160
    %s162 = ssub.s32 %s13, %s20
    %p163 = scmp.eq.s32.totalorder %s162, 0
    %s165 = sadd.s32 %s164, 1
    %s166 = scalar_select %p163, %s164, %s165
    %p169 = pneg %p163
    %p170 = scmp.eq.s32.totalorder %s13, 1
    %p171 = por %p169, %p170
    %p172 = scmp.ne.s32.totalorder %s164, %s167
    %p173 = scmp.eq.s32.totalorder %s13, 0
    %p174 = por %p172, %p173
    %p175 = scmp.ne.s32.totalorder %s164, %s167
    %p176 = scmp.eq.s32.totalorder %s18, 1
    %p177 = por %p175, %p176
    %p178 = scmp.ne.s32.totalorder %s167, %s168
    %p179 = scmp.eq.s32.totalorder %s18, 0
    %p180 = por %p178, %p179
    %p181 = scmp.ne.s32.totalorder %s167, %s168
    %p182 = scmp.eq.s32.totalorder %s19, 1
    %p183 = por %p181, %p182
    %p185 = scmp.ne.s32.totalorder %s168, %s184
    %p186 = scmp.eq.s32.totalorder %s19, 0
    %p187 = por %p185, %p186
    %p188 = scmp.le.s32.totalorder 1, %s13
    %p189 = scmp.lt.s32.totalorder %s13, 3
    %p190 = pnand %p188, %p189
    %p191 = pneg %p190
    // Predicated region
    $region9: #{rec_discriminator_forward.5} parent=5 // pred_check
      _
    $region10: #{rec_discriminator_forward.5} parent=5 // pred_check_branch
      %193 = sbr.rel (%p190) target = $region12
    $region11: #{rec_discriminator_forward.5} parent=5 // pred_region
      %s194 = ssub.s32 %s13, 1
      // Predicated region
      $region13: #{rec_discriminator_forward.5} parent=11 // pred_check
        %p195 = pneg %p60
      $region14: #{rec_discriminator_forward.5} parent=11 // pred_check_branch
        %197 = sbr.rel (%p195) target = $region16
      $region15: #{rec_discriminator_forward.5} parent=11 // pred_region
        _
      $region16: #{rec_discriminator_forward.5} parent=11 // pred_fallthru
        _
      // Predicated region
      $region17: #{rec_discriminator_forward.5} parent=11 // pred_check
        %p198 = pneg %p81
      $region18: #{rec_discriminator_forward.5} parent=11 // pred_check_branch
        %200 = sbr.rel (%p198) target = $region20
      $region19: #{rec_discriminator_forward.5} parent=11 // pred_region
        _
      $region20: #{rec_discriminator_forward.5} parent=11 // pred_fallthru
        _
      // Predicated region
      $region21: #{rec_discriminator_forward.5} parent=11 // pred_check
        %p201 = pneg %p102
      $region22: #{rec_discriminator_forward.5} parent=11 // pred_check_branch
        %203 = sbr.rel (%p201) target = $region24
      $region23: #{rec_discriminator_forward.5} parent=11 // pred_region
        _
      $region24: #{rec_discriminator_forward.5} parent=11 // pred_fallthru
        _
    $region12: #{rec_discriminator_forward.5} parent=5 // pred_fallthru
      _
    %p204 = scmp.lt.s32.totalorder %s13, 2
    // Predicated region
    $region25: #{rec_discriminator_forward.5} parent=5 // pred_check
      %p205 = pneg %p204
    $region26: #{rec_discriminator_forward.5} parent=5 // pred_check_branch
      %207 = sbr.rel (%p205) target = $region28
    $region27: #{rec_discriminator_forward.5} parent=5 // pred_region
      // Predicated region
      $region29: #{rec_discriminator_forward.5} parent=27 // pred_check
        %p208 = pneg %p33
      $region30: #{rec_discriminator_forward.5} parent=27 // pred_check_branch
        %210 = sbr.rel (%p208) target = $region32
      $region31: #{rec_discriminator_forward.5} parent=27 // pred_region
        %p211 = scmp.lt.s32.totalorder %s13, 1
        %s212 = scalar_select %p211, %s13, 1
        %s213 = smul.addr %s212, 16
        %s214 = smul.addr %s213, 4
        %s215 = scalar_lea.vmem %s0, %s214
      $region32: #{rec_discriminator_forward.5} parent=27 // pred_fallthru
        _
    $region28: #{rec_discriminator_forward.5} parent=5 // pred_fallthru
      _
    %p216 = scmp.le.s32.totalorder 1, %s13
    %p217 = scmp.lt.s32.totalorder %s13, 3
    %p218 = pnand %p216, %p217
    %p219 = pneg %p218
    // Predicated region
    $region33: #{rec_discriminator_forward.5} parent=5 // pred_check
      _
    $region34: #{rec_discriminator_forward.5} parent=5 // pred_check_branch
      %221 = sbr.rel (%p218) target = $region36
    $region35: #{rec_discriminator_forward.5} parent=5 // pred_region
      %s222 = ssub.s32 %s13, 1
      %p223 = scmp.lt.s32.totalorder %s18, 1
      %s224 = scalar_select %p223, %s18, 1
      %s225 = smul.addr %s224, 16
      %s226 = smul.addr %s225, 4
      %s227 = scalar_lea.vmem %s0, %s226
      %p228 = pneg %p39
      %p229 = pneg %p36
      %p230 = pneg %p60
      %p231 = pneg %p57
      %p232 = pneg %p81
      %p233 = pneg %p78
      %p234 = pneg %p102
      %p235 = pneg %p99
      %p236 = pneg %p128
      %p237 = pneg %p125
      %p238 = scmp.lt.s32.totalorder %s18, 1
      %s239 = scalar_select %p238, %s18, 1
      %s240 = smul.addr %s239, 6
      %s241 = smul.addr %s240, 8
      %s242 = scalar_lea.vmem %s4, %s241
      %p243 = pneg %p154
      %p244 = pneg %p151
      %p245 = scmp.lt.s32.totalorder %s18, 1
      %s246 = scalar_select %p245, %s18, 1
      %s247 = smul.addr %s246, 2
      %s248 = smul.addr %s247, 8
      %s249 = scalar_lea.vmem %s5, %s248
      %p250 = pneg %p180
      %p251 = pneg %p177
      %p252 = scmp.lt.s32.totalorder %s18, 1
      %s253 = scalar_select %p252, %s18, 1
      %s254 = smul.addr %s253, 2
      %s255 = smul.addr %s254, 8
      %s256 = scalar_lea.vmem %s6, %s255
      %p257 = scmp.lt.s32.totalorder %s18, 1
      %s258 = scalar_select %p257, %s18, 1
      %s259 = smul.addr %s258, 16
      %s260 = smul.addr %s259, 4
      %s261 = scalar_lea.vmem %s0, %s260
      %p262 = scmp.lt.s32.totalorder %s18, 1
      %s263 = scalar_select %p262, %s18, 1
      %s264 = smul.addr %s263, 6
      %s265 = smul.addr %s264, 8
      %s266 = scalar_lea.vmem %s4, %s265
      %p267 = scmp.lt.s32.totalorder %s18, 1
      %s268 = scalar_select %p267, %s18, 1
      %s269 = smul.addr %s268, 2
      %s270 = smul.addr %s269, 8
      %s271 = scalar_lea.vmem %s5, %s270
      %p272 = scmp.lt.s32.totalorder %s18, 1
      %s273 = scalar_select %p272, %s18, 1
      %s274 = smul.addr %s273, 2
      %s275 = smul.addr %s274, 8
      %s276 = scalar_lea.vmem %s6, %s275
      %v278 = vld [vmem:[%s1] sm:$0xf]
      %v279 = vld [vmem:[%s1 + $0x4] sm:$0xf]
      %v280 = vld [vmem:[%s2] sm:$0xff]
      %v281 = vld [vmem:[%s2 + $0x8] sm:$0xff]
      %v282 = vld [vmem:[%s3] sm:$0x7]
      %v283 = vld [vmem:[%s261] sm:$0xff]
      %v284 = vld [vmem:[%s261 + $0x8] sm:$0xff]
      %v287 = vunpack.c.l.b16 %v283
      %v288 = vunpack.c.h.b16 %v283
      %v289 = vunpack.c.l.b16 %v284
      %v290 = vpack.c.b16 %v287, %v287
      %v291 = vpack.c.b16 %v288, %v288
      %v292 = vpack.c.b16 %v289, %v289
      %296 = vst [vmem:[#allocation2] sm:$0xf] %v290
      %297 = vst [vmem:[#allocation2 + $0x8] sm:$0xf] %v291
      %298 = vst [vmem:[#allocation2 + $0x10] sm:$0xf] %v292
      %v299 = vunpack.c.h.b16 %v284
      %v300 = vpack.c.b16 %v299, %v299
      %301 = vrot.lane.b32.xlu0 %v290, 127
      %v302 = vpop.permute.xlu0 %301
      %303 = vrot.lane.b32.xlu0 %v291, 127
      %v304 = vpop.permute.xlu0 %303
      %305 = vrot.lane.b32.xlu0 %v292, 127
      %v306 = vpop.permute.xlu0 %305
      %307 = vrot.lane.b32.xlu0 %v300, 127
      %v308 = vpop.permute.xlu0 %307
      %vm309 = vcmask 1039360
      %v310 = vsel %vm309, %v302, %v304
      %v311 = vsel %vm309, %v304, %v306
      %v312 = vsel %vm309, %v306, %v308
      %316 = vst [vmem:[#allocation2 + $0x18] sm:$0xf] %v310
      %317 = vst [vmem:[#allocation2 + $0x20] sm:$0xf] %v311
      %318 = vst [vmem:[#allocation2 + $0x28] sm:$0xf] %v312
      %319 = vrot.lane.b32.xlu0 %v290, 111
      %v320 = vpop.permute.xlu0 %319
      %321 = vrot.lane.b32.xlu0 %v291, 111
      %v322 = vpop.permute.xlu0 %321
      %323 = vrot.lane.b32.xlu0 %v292, 111
      %v324 = vpop.permute.xlu0 %323
      %325 = vrot.lane.b32.xlu0 %v300, 111
      %v326 = vpop.permute.xlu0 %325
      %vm327 = vcmask 908288
      %v328 = vsel %vm327, %v320, %v322
      %v329 = vsel %vm327, %v322, %v324
      %v330 = vsel %vm327, %v324, %v326
      %334 = vst [vmem:[#allocation2 + $0x60] sm:$0xf] %v328
      %335 = vst [vmem:[#allocation2 + $0x68] sm:$0xf] %v329
      %336 = vst [vmem:[#allocation2 + $0x70] sm:$0xf] %v330
      %337 = vrot.lane.b32.xlu0 %v290, 110
      %v338 = vpop.permute.xlu0 %337
      %339 = vrot.lane.b32.xlu0 %v291, 110
      %v340 = vpop.permute.xlu0 %339
      %341 = vrot.lane.b32.xlu0 %v292, 110
      %v342 = vpop.permute.xlu0 %341
      %343 = vrot.lane.b32.xlu0 %v300, 110
      %v344 = vpop.permute.xlu0 %343
      %vm345 = vcmask 900096
      %v346 = vsel %vm345, %v338, %v340
      %v347 = vsel %vm345, %v340, %v342
      %v348 = vsel %vm345, %v342, %v344
      %352 = vst [vmem:[#allocation2 + $0x78] sm:$0xf] %v346
      %353 = vst [vmem:[#allocation2 + $0x80] sm:$0xf] %v347
      %354 = vst [vmem:[#allocation2 + $0x88] sm:$0xf] %v348
      %s355 = scalar_lea.vmem %s261, 16
      %v356 = vld [vmem:[%s355] sm:$0xff]
      %v357 = vld [vmem:[%s355 + $0x8] sm:$0xff]
      %v360 = vunpack.c.l.b16 %v356
      %v361 = vunpack.c.h.b16 %v356
      %v362 = vunpack.c.l.b16 %v357
      %v363 = vpack.c.b16 %v360, %v360
      %v364 = vpack.c.b16 %v361, %v361
      %v365 = vpack.c.b16 %v362, %v362
      %369 = vst [vmem:[#allocation2] sm:$0xf0] %v363
      %370 = vst [vmem:[#allocation2 + $0x8] sm:$0xf0] %v364
      %371 = vst [vmem:[#allocation2 + $0x10] sm:$0xf0] %v365
      %v372 = vunpack.c.h.b16 %v357
      %v373 = vpack.c.b16 %v372, %v372
      %374 = vrot.lane.b32.xlu0 %v363, 127
      %v375 = vpop.permute.xlu0 %374
      %376 = vrot.lane.b32.xlu0 %v364, 127
      %v377 = vpop.permute.xlu0 %376
      %378 = vrot.lane.b32.xlu0 %v365, 127
      %v379 = vpop.permute.xlu0 %378
      %380 = vrot.lane.b32.xlu0 %v373, 127
      %v381 = vpop.permute.xlu0 %380
      %v382 = vsel %vm309, %v375, %v377
      %v383 = vsel %vm309, %v377, %v379
      %v384 = vsel %vm309, %v379, %v381
      %388 = vst [vmem:[#allocation2 + $0x18] sm:$0xf0] %v382
      %389 = vst [vmem:[#allocation2 + $0x20] sm:$0xf0] %v383
      %390 = vst [vmem:[#allocation2 + $0x28] sm:$0xf0] %v384
      %391 = vrot.lane.b32.xlu0 %v363, 111
      %v392 = vpop.permute.xlu0 %391
      %393 = vrot.lane.b32.xlu0 %v364, 111
      %v394 = vpop.permute.xlu0 %393
      %395 = vrot.lane.b32.xlu0 %v365, 111
      %v396 = vpop.permute.xlu0 %395
      %397 = vrot.lane.b32.xlu0 %v373, 111
      %v398 = vpop.permute.xlu0 %397
      %v399 = vsel %vm327, %v392, %v394
      %v400 = vsel %vm327, %v394, %v396
      %v401 = vsel %vm327, %v396, %v398
      %405 = vst [vmem:[#allocation2 + $0x60] sm:$0xf0] %v399
      %406 = vst [vmem:[#allocation2 + $0x68] sm:$0xf0] %v400
      %407 = vst [vmem:[#allocation2 + $0x70] sm:$0xf0] %v401
      %408 = vrot.lane.b32.xlu0 %v363, 110
      %v409 = vpop.permute.xlu0 %408
      %410 = vrot.lane.b32.xlu0 %v364, 110
      %v411 = vpop.permute.xlu0 %410
      %412 = vrot.lane.b32.xlu0 %v365, 110
      %v413 = vpop.permute.xlu0 %412
      %414 = vrot.lane.b32.xlu0 %v373, 110
      %v415 = vpop.permute.xlu0 %414
      %v416 = vsel %vm345, %v409, %v411
      %v417 = vsel %vm345, %v411, %v413
      %v418 = vsel %vm345, %v413, %v415
      %422 = vst [vmem:[#allocation2 + $0x78] sm:$0xf0] %v416
      %423 = vst [vmem:[#allocation2 + $0x80] sm:$0xf0] %v417
      %424 = vst [vmem:[#allocation2 + $0x88] sm:$0xf0] %v418
      %s425 = scalar_lea.vmem %s261, 32
      %v426 = vld [vmem:[%s425] sm:$0xff]
      %v427 = vld [vmem:[%s425 + $0x8] sm:$0xff]
      %v430 = vunpack.c.l.b16 %v426
      %v431 = vunpack.c.h.b16 %v426
      %v432 = vunpack.c.l.b16 %v427
      %v433 = vpack.c.b16 %v430, %v430
      %v434 = vpack.c.b16 %v431, %v431
      %v435 = vpack.c.b16 %v432, %v432
      %439 = vst [vmem:[#allocation2 + $0x30] sm:$0xf] %v433
      %440 = vst [vmem:[#allocation2 + $0x38] sm:$0xf] %v434
      %441 = vst [vmem:[#allocation2 + $0x40] sm:$0xf] %v435
      %v442 = vunpack.c.h.b16 %v427
      %v443 = vpack.c.b16 %v442, %v442
      %444 = vrot.lane.b32.xlu0 %v433, 127
      %v445 = vpop.permute.xlu0 %444
      %446 = vrot.lane.b32.xlu0 %v434, 127
      %v447 = vpop.permute.xlu0 %446
      %448 = vrot.lane.b32.xlu0 %v435, 127
      %v449 = vpop.permute.xlu0 %448
      %450 = vrot.lane.b32.xlu0 %v443, 127
      %v451 = vpop.permute.xlu0 %450
      %v452 = vsel %vm309, %v445, %v447
      %v453 = vsel %vm309, %v447, %v449
      %v454 = vsel %vm309, %v449, %v451
      %458 = vst [vmem:[#allocation2 + $0x48] sm:$0xf] %v452
      %459 = vst [vmem:[#allocation2 + $0x50] sm:$0xf] %v453
      %460 = vst [vmem:[#allocation2 + $0x58] sm:$0xf] %v454
      %461 = vrot.lane.b32.xlu0 %v433, 111
      %v462 = vpop.permute.xlu0 %461
      %463 = vrot.lane.b32.xlu0 %v434, 111
      %v464 = vpop.permute.xlu0 %463
      %465 = vrot.lane.b32.xlu0 %v435, 111
      %v466 = vpop.permute.xlu0 %465
      %467 = vrot.lane.b32.xlu0 %v443, 111
      %v468 = vpop.permute.xlu0 %467
      %v469 = vsel %vm327, %v462, %v464
      %v470 = vsel %vm327, %v464, %v466
      %v471 = vsel %vm327, %v466, %v468
      %475 = vst [vmem:[#allocation2 + $0x90] sm:$0xf] %v469
      %476 = vst [vmem:[#allocation2 + $0x98] sm:$0xf] %v470
      %477 = vst [vmem:[#allocation2 + $0xa0] sm:$0xf] %v471
      %478 = vrot.lane.b32.xlu0 %v433, 110
      %v479 = vpop.permute.xlu0 %478
      %480 = vrot.lane.b32.xlu0 %v434, 110
      %v481 = vpop.permute.xlu0 %480
      %482 = vrot.lane.b32.xlu0 %v435, 110
      %v483 = vpop.permute.xlu0 %482
      %484 = vrot.lane.b32.xlu0 %v443, 110
      %v485 = vpop.permute.xlu0 %484
      %v486 = vsel %vm345, %v479, %v481
      %v487 = vsel %vm345, %v481, %v483
      %v488 = vsel %vm345, %v483, %v485
      %492 = vst [vmem:[#allocation2 + $0xa8] sm:$0xf] %v486
      %493 = vst [vmem:[#allocation2 + $0xb0] sm:$0xf] %v487
      %494 = vst [vmem:[#allocation2 + $0xb8] sm:$0xf] %v488
      %s495 = scalar_lea.vmem %s261, 48
      %v496 = vld [vmem:[%s495] sm:$0xff]
      %v497 = vld [vmem:[%s495 + $0x8] sm:$0xff]
      %v500 = vunpack.c.l.b16 %v496
      %v501 = vunpack.c.h.b16 %v496
      %v502 = vunpack.c.l.b16 %v497
      %v503 = vpack.c.b16 %v500, %v500
      %v504 = vpack.c.b16 %v501, %v501
      %v505 = vpack.c.b16 %v502, %v502
      %509 = vst [vmem:[#allocation2 + $0x30] sm:$0xf0] %v503
      %510 = vst [vmem:[#allocation2 + $0x38] sm:$0xf0] %v504
      %511 = vst [vmem:[#allocation2 + $0x40] sm:$0xf0] %v505
      %v512 = vunpack.c.h.b16 %v497
      %v513 = vpack.c.b16 %v512, %v512
      %514 = vrot.lane.b32.xlu0 %v503, 127
      %v515 = vpop.permute.xlu0 %514
      %516 = vrot.lane.b32.xlu0 %v504, 127
      %v517 = vpop.permute.xlu0 %516
      %518 = vrot.lane.b32.xlu0 %v505, 127
      %v519 = vpop.permute.xlu0 %518
      %520 = vrot.lane.b32.xlu0 %v513, 127
      %v521 = vpop.permute.xlu0 %520
      %v522 = vsel %vm309, %v515, %v517
      %v523 = vsel %vm309, %v517, %v519
      %v524 = vsel %vm309, %v519, %v521
      %528 = vst [vmem:[#allocation2 + $0x48] sm:$0xf0] %v522
      %529 = vst [vmem:[#allocation2 + $0x50] sm:$0xf0] %v523
      %530 = vst [vmem:[#allocation2 + $0x58] sm:$0xf0] %v524
      %531 = vrot.lane.b32.xlu0 %v503, 111
      %v532 = vpop.permute.xlu0 %531
      %533 = vrot.lane.b32.xlu0 %v504, 111
      %v534 = vpop.permute.xlu0 %533
      %535 = vrot.lane.b32.xlu0 %v505, 111
      %v536 = vpop.permute.xlu0 %535
      %537 = vrot.lane.b32.xlu0 %v513, 111
      %v538 = vpop.permute.xlu0 %537
      %v539 = vsel %vm327, %v532, %v534
      %v540 = vsel %vm327, %v534, %v536
      %v541 = vsel %vm327, %v536, %v538
      %545 = vst [vmem:[#allocation2 + $0x90] sm:$0xf0] %v539
      %546 = vst [vmem:[#allocation2 + $0x98] sm:$0xf0] %v540
      %547 = vst [vmem:[#allocation2 + $0xa0] sm:$0xf0] %v541
      %548 = vrot.lane.b32.xlu0 %v503, 110
      %v549 = vpop.permute.xlu0 %548
      %550 = vrot.lane.b32.xlu0 %v504, 110
      %v551 = vpop.permute.xlu0 %550
      %552 = vrot.lane.b32.xlu0 %v505, 110
      %v553 = vpop.permute.xlu0 %552
      %554 = vrot.lane.b32.xlu0 %v513, 110
      %v555 = vpop.permute.xlu0 %554
      %v556 = vsel %vm345, %v549, %v551
      %v557 = vsel %vm345, %v551, %v553
      %v558 = vsel %vm345, %v553, %v555
      %562 = vst [vmem:[#allocation2 + $0xa8] sm:$0xf0] %v556
      %563 = vst [vmem:[#allocation2 + $0xb0] sm:$0xf0] %v557
      %564 = vst [vmem:[#allocation2 + $0xb8] sm:$0xf0] %v558
      %v565 = vld [vmem:[#allocation2] sm:$0xff]
      %v566 = vld [vmem:[#allocation2 + $0x8] sm:$0xff]
      %v567 = vld [vmem:[#allocation2 + $0x10] sm:$0xff]
      %v568 = vld [vmem:[#allocation2 + $0x18] sm:$0xff]
      %v569 = vld [vmem:[#allocation2 + $0x20] sm:$0xff]
      %v570 = vld [vmem:[#allocation2 + $0x28] sm:$0xff]
      %v571 = vld [vmem:[#allocation2 + $0x30] sm:$0xff]
      %v572 = vld [vmem:[#allocation2 + $0x38] sm:$0xff]
      %v573 = vld [vmem:[#allocation2 + $0x40] sm:$0xff]
      %v574 = vld [vmem:[#allocation2 + $0x48] sm:$0xff]
      %v575 = vld [vmem:[#allocation2 + $0x50] sm:$0xff]
      %v576 = vld [vmem:[#allocation2 + $0x58] sm:$0xff]
      %v577 = vld [vmem:[#allocation2 + $0x60] sm:$0xff]
      %v578 = vld [vmem:[#allocation2 + $0x68] sm:$0xff]
      %v579 = vld [vmem:[#allocation2 + $0x70] sm:$0xff]
      %v580 = vld [vmem:[#allocation2 + $0x78] sm:$0xff]
      %v581 = vld [vmem:[#allocation2 + $0x80] sm:$0xff]
      %v582 = vld [vmem:[#allocation2 + $0x88] sm:$0xff]
      %v583 = vld [vmem:[#allocation2 + $0x90] sm:$0xff]
      %v584 = vld [vmem:[#allocation2 + $0x98] sm:$0xff]
      %v585 = vld [vmem:[#allocation2 + $0xa0] sm:$0xff]
      %v586 = vld [vmem:[#allocation2 + $0xa8] sm:$0xff]
      %v587 = vld [vmem:[#allocation2 + $0xb0] sm:$0xff]
      %v588 = vld [vmem:[#allocation2 + $0xb8] sm:$0xff]
      %590 = vset.pattern.permute.xlu0 0
      %591 = vperm.xlu0 %590, %v280
      %v592 = vpop.permute.xlu0 %591
      %595 = vset.pattern.permute.xlu0 0
      %596 = vperm.xlu0 %595, %v281
      %v597 = vpop.permute.xlu0 %596
      %v601 = vunpack.c.l.b16 %v278
      %v602 = vunpack.c.l.b16 %v279
      %v603 = vpack.c.b16 %v602, %v601
      %605 = vmatprep.subr.bf16.mxu0 %v566
      %606 = vmatpush1.bf16.msra.mxu0 %v565
      %607 = vmatprep.subr.bf16.mxu0 %v569
      %608 = vmatpush1.bf16.msra.mxu0 %v568
      %609 = vmatprep.subr.bf16.mxu0 %v572
      %610 = vmatpush1.bf16.msra.mxu0 %v571
      %611 = vmatprep.subr.bf16.mxu0 %v575
      %612 = vmatpush1.bf16.msra.mxu0 %v574
      %613 = vmatprep.subr.bf16.mxu0 %v578
      %614 = vmatpush1.bf16.msra.mxu0 %v577
      %615 = vmatprep.subr.bf16.mxu0 %v581
      %616 = vmatpush1.bf16.msra.mxu0 %v580
      %617 = vmatprep.subr.bf16.mxu0 %v584
      %618 = vmatpush1.bf16.msra.mxu0 %v583
      %619 = vmatprep.subr.bf16.mxu0 %v587
      %620 = vmatpush1.bf16.msra.mxu0 %v586
      %621 = vmatprep.subr.bf16.mxu0 0
      %622 = vmatpush1.bf16.msra.mxu0 0
      %623 = vmatprep.subr.bf16.mxu0 0
      %624 = vmatpush1.bf16.msra.mxu0 0
      %625 = vmatprep.subr.bf16.mxu0 0
      %626 = vmatpush1.bf16.msra.mxu0 0
      %627 = vmatprep.subr.bf16.mxu0 0
      %628 = vmatpush1.bf16.msra.mxu0 0
      %629 = vmatprep.subr.bf16.mxu0 0
      %630 = vmatpush1.bf16.msra.mxu0 0
      %631 = vmatprep.subr.bf16.mxu0 0
      %632 = vmatpush1.bf16.msra.mxu0 0
      %633 = vmatprep.subr.bf16.mxu0 0
      %634 = vmatpush1.bf16.msra.mxu0 0
      %635 = vmatprep.subr.bf16.mxu0 0
      %636 = vmatpush1.bf16.msra.mxu0 0
      %637 = vmatprep.mubr.bf16.mxu0 0
      %638 = vmatmul.mubr.bf16.gmra.mrb[0].mxu0 %v603
      %v639 = vpop.f32.mrb[0].mxu0
      %v640 = vadd.f32 %v592, %v639
      %v641 = vpop.f32.mrb[0].mxu0
      %v642 = vadd.f32 %v592, %v641
      %v643 = vpop.f32.mrb[0].mxu0
      %v644 = vadd.f32 %v597, %v643
      %v645 = vpop.f32.mrb[0].mxu0
      %v646 = vadd.f32 %v597, %v645
      %647 = vdwg.mxu0
      %648 = vmatprep.subr.bf16.mxu0 0
      %649 = vmatpush1.bf16.msra.mxu0 %v567
      %650 = vmatprep.subr.bf16.mxu0 0
      %651 = vmatpush1.bf16.msra.mxu0 %v570
      %652 = vmatprep.subr.bf16.mxu0 0
      %653 = vmatpush1.bf16.msra.mxu0 %v573
      %654 = vmatprep.subr.bf16.mxu0 0
      %655 = vmatpush1.bf16.msra.mxu0 %v576
      %656 = vmatprep.subr.bf16.mxu0 0
      %657 = vmatpush1.bf16.msra.mxu0 %v579
      %658 = vmatprep.subr.bf16.mxu0 0
      %659 = vmatpush1.bf16.msra.mxu0 %v582
      %660 = vmatprep.subr.bf16.mxu0 0
      %661 = vmatpush1.bf16.msra.mxu0 %v585
      %662 = vmatprep.subr.bf16.mxu0 0
      %663 = vmatpush1.bf16.msra.mxu0 %v588
      %664 = vmatprep.subr.bf16.mxu0 0
      %665 = vmatpush1.bf16.msra.mxu0 0
      %666 = vmatprep.subr.bf16.mxu0 0
      %667 = vmatpush1.bf16.msra.mxu0 0
      %668 = vmatprep.subr.bf16.mxu0 0
      %669 = vmatpush1.bf16.msra.mxu0 0
      %670 = vmatprep.subr.bf16.mxu0 0
      %671 = vmatpush1.bf16.msra.mxu0 0
      %672 = vmatprep.subr.bf16.mxu0 0
      %673 = vmatpush1.bf16.msra.mxu0 0
      %674 = vmatprep.subr.bf16.mxu0 0
      %675 = vmatpush1.bf16.msra.mxu0 0
      %676 = vmatprep.subr.bf16.mxu0 0
      %677 = vmatpush1.bf16.msra.mxu0 0
      %678 = vmatprep.subr.bf16.mxu0 0
      %679 = vmatpush1.bf16.msra.mxu0 0
      %680 = vmatprep.mubr.bf16.mxu0 0
      %681 = vmatmul.mubr.bf16.gmra.mrb[0].mxu0 %v603
      %v682 = vpop.f32.mrb[0].mxu0
      %v683 = vadd.f32 %v592, %v682
      %v684 = vpop.f32.mrb[0].mxu0
      %v685 = vpop.f32.mrb[0].mxu0
      %v686 = vadd.f32 %v597, %v685
      %v687 = vpop.f32.mrb[0].mxu0
      %688 = vdwg.mxu0
      %689 = vst [vmem:[%s266] sm:$0xff] %v640
      %690 = vst [vmem:[%s266 + $0x8] sm:$0xff] %v642
      %691 = vst [vmem:[%s266 + $0x10] sm:$0xff] %v683
      %692 = vst [vmem:[%s266 + $0x18] sm:$0xff] %v644
      %693 = vst [vmem:[%s266 + $0x20] sm:$0xff] %v646
      %694 = vst [vmem:[%s266 + $0x28] sm:$0xff] %v686
      %v696 = vlaneseq
      %v697 = vshrl.u32 %v696, 7
      %v698 = vsub.s32 0, %v697
      %v699 = vrot.slane %v282, %v698
      %v700 = vlaneseq
      %v701 = vshrl.u32 %v700, 7
      %v702 = vsub.s32 1, %v701
      %v703 = vrot.slane %v282, %v702
      %v704 = vlaneseq
      %v705 = vshrl.u32 %v704, 7
      %v706 = vsub.s32 2, %v705
      %v707 = vrot.slane %v282, %v706
      %v711 = vmul.f32 %v640, %v699
      %v712 = vmul.f32 %v642, %v703
      %v713 = vmul.f32 %v683, %v707
      %v714 = vmul.f32 %v644, %v699
      %v715 = vmul.f32 %v646, %v703
      %v716 = vmul.f32 %v686, %v707
      %v717 = vadd.f32 %v711, %v712
      %v718 = vadd.f32 %v717, %v713
      %719 = vadd.xlane.f32.xlu0 %v718
      %v720 = vpop.xlane.xlu0 %719
      %v721 = vadd.f32 %v714, %v715
      %v722 = vadd.f32 %v721, %v716
      %723 = vadd.xlane.f32.xlu0 %v722
      %v724 = vpop.xlane.xlu0 %723
      %v725 = vadd.f32 %v720, 0.0
      %v726 = vadd.f32 %v724, 0.0
      %v727 = vmul.f32 %v711, %v711
      %v728 = vmul.f32 %v712, %v712
      %v729 = vmul.f32 %v713, %v713
      %v730 = vmul.f32 %v714, %v714
      %v731 = vmul.f32 %v715, %v715
      %v732 = vmul.f32 %v716, %v716
      %v733 = vadd.f32 %v727, %v728
      %v734 = vadd.f32 %v733, %v729
      %735 = vadd.xlane.f32.xlu0 %v734
      %v736 = vpop.xlane.xlu0 %735
      %v737 = vadd.f32 %v730, %v731
      %v738 = vadd.f32 %v737, %v732
      %739 = vadd.xlane.f32.xlu0 %v738
      %v740 = vpop.xlane.xlu0 %739
      %v741 = vadd.f32 %v736, 0.0
      %v742 = vadd.f32 %v740, 0.0
      %vm743 = vcmask 7168
      %744 = vst.msk [vmem:[%s271] sm:$0xff] %vm743, %v725
      %745 = vst.msk [vmem:[%s271 + $0x8] sm:$0xff] %vm743, %v726
      %746 = vst.msk [vmem:[%s276] sm:$0xff] %vm743, %v741
      %747 = vst.msk [vmem:[%s276 + $0x8] sm:$0xff] %vm743, %v742
      %p748 = scmp.lt.s32.totalorder %s18, 1
      %s749 = scalar_select %p748, %s18, 1
      %s750 = smul.addr %s749, 6
      %s751 = smul.addr %s750, 8
      %s752 = scalar_lea.vmem %s4, %s751
      %p753 = scmp.lt.s32.totalorder %s18, 1
      %s754 = scalar_select %p753, %s18, 1
      %s755 = smul.addr %s754, 2
      %s756 = smul.addr %s755, 8
      %s757 = scalar_lea.vmem %s5, %s756
      %p758 = scmp.lt.s32.totalorder %s18, 1
      %s759 = scalar_select %p758, %s18, 1
      %s760 = smul.addr %s759, 2
      %s761 = smul.addr %s760, 8
      %s762 = scalar_lea.vmem %s6, %s761
      // Predicated region
      $region37: #{rec_discriminator_forward.5} parent=35 // pred_check
        %p763 = pneg %p125
      $region38: #{rec_discriminator_forward.5} parent=35 // pred_check_branch
        %765 = sbr.rel (%p763) target = $region40
      $region39: #{rec_discriminator_forward.5} parent=35 // pred_region
        _
      $region40: #{rec_discriminator_forward.5} parent=35 // pred_fallthru
        _
      // Predicated region
      $region41: #{rec_discriminator_forward.5} parent=35 // pred_check
        %p766 = pneg %p151
      $region42: #{rec_discriminator_forward.5} parent=35 // pred_check_branch
        %768 = sbr.rel (%p766) target = $region44
      $region43: #{rec_discriminator_forward.5} parent=35 // pred_region
        _
      $region44: #{rec_discriminator_forward.5} parent=35 // pred_fallthru
        _
      // Predicated region
      $region45: #{rec_discriminator_forward.5} parent=35 // pred_check
        %p769 = pneg %p177
      $region46: #{rec_discriminator_forward.5} parent=35 // pred_check_branch
        %771 = sbr.rel (%p769) target = $region48
      $region47: #{rec_discriminator_forward.5} parent=35 // pred_region
        _
      $region48: #{rec_discriminator_forward.5} parent=35 // pred_fallthru
        _
    $region36: #{rec_discriminator_forward.5} parent=5 // pred_fallthru
      _
    %p772 = scmp.le.s32.totalorder 2, %s13
    // Predicated region
    $region49: #{rec_discriminator_forward.5} parent=5 // pred_check
      %p773 = pneg %p772
    $region50: #{rec_discriminator_forward.5} parent=5 // pred_check_branch
      %775 = sbr.rel (%p773) target = $region52
    $region51: #{rec_discriminator_forward.5} parent=5 // pred_region
      %s776 = ssub.s32 %s13, 2
      // Predicated region
      $region53: #{rec_discriminator_forward.5} parent=51 // pred_check
        %p777 = pneg %p131
      $region54: #{rec_discriminator_forward.5} parent=51 // pred_check_branch
        %779 = sbr.rel (%p777) target = $region56
      $region55: #{rec_discriminator_forward.5} parent=51 // pred_region
        %p780 = scmp.lt.s32.totalorder %s19, 1
        %s781 = scalar_select %p780, %s19, 1
        %s782 = smul.addr %s781, 6
        %s783 = smul.addr %s782, 8
        %s784 = scalar_lea.vmem %s4, %s783
      $region56: #{rec_discriminator_forward.5} parent=51 // pred_fallthru
        _
      // Predicated region
      $region57: #{rec_discriminator_forward.5} parent=51 // pred_check
        %p785 = pneg %p157
      $region58: #{rec_discriminator_forward.5} parent=51 // pred_check_branch
        %787 = sbr.rel (%p785) target = $region60
      $region59: #{rec_discriminator_forward.5} parent=51 // pred_region
        %p788 = scmp.lt.s32.totalorder %s19, 1
        %s789 = scalar_select %p788, %s19, 1
        %s790 = smul.addr %s789, 2
        %s791 = smul.addr %s790, 8
        %s792 = scalar_lea.vmem %s5, %s791
      $region60: #{rec_discriminator_forward.5} parent=51 // pred_fallthru
        _
      // Predicated region
      $region61: #{rec_discriminator_forward.5} parent=51 // pred_check
        %p793 = pneg %p183
      $region62: #{rec_discriminator_forward.5} parent=51 // pred_check_branch
        %795 = sbr.rel (%p793) target = $region64
      $region63: #{rec_discriminator_forward.5} parent=51 // pred_region
        %p796 = scmp.lt.s32.totalorder %s19, 1
        %s797 = scalar_select %p796, %s19, 1
        %s798 = smul.addr %s797, 2
        %s799 = smul.addr %s798, 8
        %s800 = scalar_lea.vmem %s6, %s799
      $region64: #{rec_discriminator_forward.5} parent=51 // pred_fallthru
        _
    $region52: #{rec_discriminator_forward.5} parent=5 // pred_fallthru
      _
  $region6: #{rec_discriminator_forward.5} parent=0 // loop_footer
    %s17 = sadd.s32 1, %s13
  $region7: #{rec_discriminator_forward.5} parent=0 // loop_footer_branch
    %12 = sbr.rel target = $region3
  $region8: #{rec_discriminator_forward.5} parent=0 // loop_exit
    _

// kernel: rec_discriminator_forward.6
$region0: #{rec_discriminator_forward.6}
  #allocation0 [shape = 'u32[]', space=smem, size = 0x4, offset = 0x4, fixed_abs, tag = 'smem constant byte address 0x4 - core index']
  #allocation1 [shape = 'u32[144,128]{1,0:T(1,128)}', space=vmem, size = 0x12000, scoped, tag = 'internal scratch']
  #allocation2 [shape = 'bf16[256,128]{1,0:T(16,128)(2,1)}', space=vmem, size = 0x10000, scoped, tag = 'scratch operand']
  %s0 = inlined_call_operand.vmem [shape: bf16[2,4,16,256], index: 0, kind: input, shape index: {}]
  %s1 = inlined_call_operand.vmem [shape: bf16[32,256], index: 1, kind: input, shape index: {}]
  %s2 = inlined_call_operand.vmem [shape: f32[32,1], index: 2, kind: input, shape index: {}]
  %s3 = inlined_call_operand.vmem [shape: f32[1,128], index: 3, kind: input, shape index: {}]
  %s4 = inlined_call_operand.vmem [shape: f32[2,32,128], index: 4, kind: output, shape index: {0}]
  %s5 = inlined_call_operand.vmem [shape: f32[2,32,1], index: 5, kind: output, shape index: {1}]
  %s6 = inlined_call_operand.vmem [shape: f32[2,32,1], index: 6, kind: output, shape index: {2}]
  %7 = xla_tuple %s4, %s5, %s6
  %s8 = sld [smem:[#allocation0]]
  $region65: #{rec_discriminator_forward.6} parent=0
    _
  %s10 = ssub.s32 1, %s8
  %s11 = scalar_select 0, %s10, %s8
  loop: start=0, step=1, limit=4
  $region2: #{rec_discriminator_forward.6} parent=0 // loop_pre_header
    _
  $region3: #{rec_discriminator_forward.6} parent=0 // loop_header
    %s13 = sphi 0, %s17
    %p14 = scmp.ge.s32.totalorder %s13, 4
    %s23 = sphi 0, %s25
    %s26 = sphi 0, %s23
    %s27 = sphi 0, %s26
    %s43 = sphi 0, %s27
    %s47 = sphi 0, %s47
    %s49 = sphi 0, %s47
    %s50 = sphi 0, %s49
    %s64 = sphi 0, %s50
    %s68 = sphi 0, %s68
    %s70 = sphi 0, %s68
    %s71 = sphi 0, %s70
    %s85 = sphi 0, %s71
    %s89 = sphi 0, %s89
    %s91 = sphi 0, %s89
    %s92 = sphi 0, %s91
    %s106 = sphi 0, %s92
    %s112 = sphi 0, %s114
    %s115 = sphi 0, %s112
    %s116 = sphi 0, %s115
    %s132 = sphi 0, %s116
    %s138 = sphi 0, %s140
    %s141 = sphi 0, %s138
    %s142 = sphi 0, %s141
    %s158 = sphi 0, %s142
    %s164 = sphi 0, %s166
    %s167 = sphi 0, %s164
    %s168 = sphi 0, %s167
    %s184 = sphi 0, %s168
  $region4: #{rec_discriminator_forward.6} parent=0 // loop_header_branch
    %16 = sbr.rel (%p14) target = $region8
  $region5: #{rec_discriminator_forward.6} parent=0 // loop_body
    %s18 = ssub.s32 %s13, 1
    %s19 = ssub.s32 %s13, 2
    %s20 = sadd.s32 %s13, 1
    %s21 = ssub.s32 %s13, %s20
    %p22 = scmp.eq.s32.totalorder %s21, 0
    %s24 = sadd.s32 %s23, 1
    %s25 = scalar_select %p22, %s23, %s24
    %p28 = pneg %p22
    %p29 = scmp.eq.s32.totalorder %s13, 1
    %p30 = por %p28, %p29
    %p31 = scmp.ne.s32.totalorder %s23, %s26
    %p32 = scmp.eq.s32.totalorder %s13, 0
    %p33 = por %p31, %p32
    %p34 = scmp.ne.s32.totalorder %s23, %s26
    %p35 = scmp.eq.s32.totalorder %s18, 1
    %p36 = por %p34, %p35
    %p37 = scmp.ne.s32.totalorder %s26, %s27
    %p38 = scmp.eq.s32.totalorder %s18, 0
    %p39 = por %p37, %p38
    %p40 = scmp.ne.s32.totalorder %s26, %s27
    %p41 = scmp.eq.s32.totalorder %s19, 1
    %p42 = por %p40, %p41
    %p44 = scmp.ne.s32.totalorder %s27, %s43
    %p45 = scmp.eq.s32.totalorder %s19, 0
    %p46 = por %p44, %p45
    %s48 = sadd.s32 %s47, 1
    %p51 = scmp.eq.s32.totalorder %s13, 1
    %p52 = scmp.ne.s32.totalorder %s47, %s49
    %p53 = scmp.eq.s32.totalorder %s13, 0
    %p54 = por %p52, %p53
    %p55 = scmp.ne.s32.totalorder %s47, %s49
    %p56 = scmp.eq.s32.totalorder %s18, 1
    %p57 = por %p55, %p56
    %p58 = scmp.ne.s32.totalorder %s49, %s50
    %p59 = scmp.eq.s32.totalorder %s18, 0
    %p60 = por %p58, %p59
    %p61 = scmp.ne.s32.totalorder %s49, %s50
    %p62 = scmp.eq.s32.totalorder %s19, 1
    %p63 = por %p61, %p62
    %p65 = scmp.ne.s32.totalorder %s50, %s64
    %p66 = scmp.eq.s32.totalorder %s19, 0
    %p67 = por %p65, %p66
    %s69 = sadd.s32 %s68, 1
    %p72 = scmp.eq.s32.totalorder %s13, 1
    %p73 = scmp.ne.s32.totalorder %s68, %s70
    %p74 = scmp.eq.s32.totalorder %s13, 0
    %p75 = por %p73, %p74
    %p76 = scmp.ne.s32.totalorder %s68, %s70
    %p77 = scmp.eq.s32.totalorder %s18, 1
    %p78 = por %p76, %p77
    %p79 = scmp.ne.s32.totalorder %s70, %s71
    %p80 = scmp.eq.s32.totalorder %s18, 0
    %p81 = por %p79, %p80
    %p82 = scmp.ne.s32.totalorder %s70, %s71
    %p83 = scmp.eq.s32.totalorder %s19, 1
    %p84 = por %p82, %p83
    %p86 = scmp.ne.s32.totalorder %s71, %s85
    %p87 = scmp.eq.s32.totalorder %s19, 0
    %p88 = por %p86, %p87
    %s90 = sadd.s32 %s89, 1
    %p93 = scmp.eq.s32.totalorder %s13, 1
    %p94 = scmp.ne.s32.totalorder %s89, %s91
    %p95 = scmp.eq.s32.totalorder %s13, 0
    %p96 = por %p94, %p95
    %p97 = scmp.ne.s32.totalorder %s89, %s91
    %p98 = scmp.eq.s32.totalorder %s18, 1
    %p99 = por %p97, %p98
    %p100 = scmp.ne.s32.totalorder %s91, %s92
    %p101 = scmp.eq.s32.totalorder %s18, 0
    %p102 = por %p100, %p101
    %p103 = scmp.ne.s32.totalorder %s91, %s92
    %p104 = scmp.eq.s32.totalorder %s19, 1
    %p105 = por %p103, %p104
    %p107 = scmp.ne.s32.totalorder %s92, %s106
    %p108 = scmp.eq.s32.totalorder %s19, 0
    %p109 = por %p107, %p108
    %s110 = ssub.s32 %s13, %s20
    %p111 = scmp.eq.s32.totalorder %s110, 0
    %s113 = sadd.s32 %s112, 1
    %s114 = scalar_select %p111, %s112, %s113
    %p117 = pneg %p111
    %p118 = scmp.eq.s32.totalorder %s13, 1
    %p119 = por %p117, %p118
    %p120 = scmp.ne.s32.totalorder %s112, %s115
    %p121 = scmp.eq.s32.totalorder %s13, 0
    %p122 = por %p120, %p121
    %p123 = scmp.ne.s32.totalorder %s112, %s115
    %p124 = scmp.eq.s32.totalorder %s18, 1
    %p125 = por %p123, %p124
    %p126 = scmp.ne.s32.totalorder %s115, %s116
    %p127 = scmp.eq.s32.totalorder %s18, 0
    %p128 = por %p126, %p127
    %p129 = scmp.ne.s32.totalorder %s115, %s116
    %p130 = scmp.eq.s32.totalorder %s19, 1
    %p131 = por %p129, %p130
    %p133 = scmp.ne.s32.totalorder %s116, %s132
    %p134 = scmp.eq.s32.totalorder %s19, 0
    %p135 = por %p133, %p134
    %s136 = ssub.s32 %s13, %s20
    %p137 = scmp.eq.s32.totalorder %s136, 0
    %s139 = sadd.s32 %s138, 1
    %s140 = scalar_select %p137, %s138, %s139
    %p143 = pneg %p137
    %p144 = scmp.eq.s32.totalorder %s13, 1
    %p145 = por %p143, %p144
    %p146 = scmp.ne.s32.totalorder %s138, %s141
    %p147 = scmp.eq.s32.totalorder %s13, 0
    %p148 = por %p146, %p147
    %p149 = scmp.ne.s32.totalorder %s138, %s141
    %p150 = scmp.eq.s32.totalorder %s18, 1
    %p151 = por %p149, %p150
    %p152 = scmp.ne.s32.totalorder %s141, %s142
    %p153 = scmp.eq.s32.totalorder %s18, 0
    %p154 = por %p152, %p153
    %p155 = scmp.ne.s32.totalorder %s141, %s142
    %p156 = scmp.eq.s32.totalorder %s19, 1
    %p157 = por %p155, %p156
    %p159 = scmp.ne.s32.totalorder %s142, %s158
    %p160 = scmp.eq.s32.totalorder %s19, 0
    %p161 = por %p159, %p160
    %s162 = ssub.s32 %s13, %s20
    %p163 = scmp.eq.s32.totalorder %s162, 0
    %s165 = sadd.s32 %s164, 1
    %s166 = scalar_select %p163, %s164, %s165
    %p169 = pneg %p163
    %p170 = scmp.eq.s32.totalorder %s13, 1
    %p171 = por %p169, %p170
    %p172 = scmp.ne.s32.totalorder %s164, %s167
    %p173 = scmp.eq.s32.totalorder %s13, 0
    %p174 = por %p172, %p173
    %p175 = scmp.ne.s32.totalorder %s164, %s167
    %p176 = scmp.eq.s32.totalorder %s18, 1
    %p177 = por %p175, %p176
    %p178 = scmp.ne.s32.totalorder %s167, %s168
    %p179 = scmp.eq.s32.totalorder %s18, 0
    %p180 = por %p178, %p179
    %p181 = scmp.ne.s32.totalorder %s167, %s168
    %p182 = scmp.eq.s32.totalorder %s19, 1
    %p183 = por %p181, %p182
    %p185 = scmp.ne.s32.totalorder %s168, %s184
    %p186 = scmp.eq.s32.totalorder %s19, 0
    %p187 = por %p185, %p186
    %p188 = scmp.le.s32.totalorder 1, %s13
    %p189 = scmp.lt.s32.totalorder %s13, 3
    %p190 = pnand %p188, %p189
    %p191 = pneg %p190
    // Predicated region
    $region9: #{rec_discriminator_forward.6} parent=5 // pred_check
      _
    $region10: #{rec_discriminator_forward.6} parent=5 // pred_check_branch
      %193 = sbr.rel (%p190) target = $region12
    $region11: #{rec_discriminator_forward.6} parent=5 // pred_region
      %s194 = ssub.s32 %s13, 1
      // Predicated region
      $region13: #{rec_discriminator_forward.6} parent=11 // pred_check
        %p195 = pneg %p60
      $region14: #{rec_discriminator_forward.6} parent=11 // pred_check_branch
        %197 = sbr.rel (%p195) target = $region16
      $region15: #{rec_discriminator_forward.6} parent=11 // pred_region
        _
      $region16: #{rec_discriminator_forward.6} parent=11 // pred_fallthru
        _
      // Predicated region
      $region17: #{rec_discriminator_forward.6} parent=11 // pred_check
        %p198 = pneg %p81
      $region18: #{rec_discriminator_forward.6} parent=11 // pred_check_branch
        %200 = sbr.rel (%p198) target = $region20
      $region19: #{rec_discriminator_forward.6} parent=11 // pred_region
        _
      $region20: #{rec_discriminator_forward.6} parent=11 // pred_fallthru
        _
      // Predicated region
      $region21: #{rec_discriminator_forward.6} parent=11 // pred_check
        %p201 = pneg %p102
      $region22: #{rec_discriminator_forward.6} parent=11 // pred_check_branch
        %203 = sbr.rel (%p201) target = $region24
      $region23: #{rec_discriminator_forward.6} parent=11 // pred_region
        _
      $region24: #{rec_discriminator_forward.6} parent=11 // pred_fallthru
        _
    $region12: #{rec_discriminator_forward.6} parent=5 // pred_fallthru
      _
    %p204 = scmp.lt.s32.totalorder %s13, 2
    // Predicated region
    $region25: #{rec_discriminator_forward.6} parent=5 // pred_check
      %p205 = pneg %p204
    $region26: #{rec_discriminator_forward.6} parent=5 // pred_check_branch
      %207 = sbr.rel (%p205) target = $region28
    $region27: #{rec_discriminator_forward.6} parent=5 // pred_region
      // Predicated region
      $region29: #{rec_discriminator_forward.6} parent=27 // pred_check
        %p208 = pneg %p33
      $region30: #{rec_discriminator_forward.6} parent=27 // pred_check_branch
        %210 = sbr.rel (%p208) target = $region32
      $region31: #{rec_discriminator_forward.6} parent=27 // pred_region
        %p211 = scmp.lt.s32.totalorder %s13, 1
        %s212 = scalar_select %p211, %s13, 1
        %s213 = smul.addr %s212, 16
        %s214 = smul.addr %s213, 4
        %s215 = scalar_lea.vmem %s0, %s214
      $region32: #{rec_discriminator_forward.6} parent=27 // pred_fallthru
        _
    $region28: #{rec_discriminator_forward.6} parent=5 // pred_fallthru
      _
    %p216 = scmp.le.s32.totalorder 1, %s13
    %p217 = scmp.lt.s32.totalorder %s13, 3
    %p218 = pnand %p216, %p217
    %p219 = pneg %p218
    // Predicated region
    $region33: #{rec_discriminator_forward.6} parent=5 // pred_check
      _
    $region34: #{rec_discriminator_forward.6} parent=5 // pred_check_branch
      %221 = sbr.rel (%p218) target = $region36
    $region35: #{rec_discriminator_forward.6} parent=5 // pred_region
      %s222 = ssub.s32 %s13, 1
      %p223 = scmp.lt.s32.totalorder %s18, 1
      %s224 = scalar_select %p223, %s18, 1
      %s225 = smul.addr %s224, 16
      %s226 = smul.addr %s225, 4
      %s227 = scalar_lea.vmem %s0, %s226
      %p228 = pneg %p39
      %p229 = pneg %p36
      %p230 = pneg %p60
      %p231 = pneg %p57
      %p232 = pneg %p81
      %p233 = pneg %p78
      %p234 = pneg %p102
      %p235 = pneg %p99
      %p236 = pneg %p128
      %p237 = pneg %p125
      %p238 = scmp.lt.s32.totalorder %s18, 1
      %s239 = scalar_select %p238, %s18, 1
      %s240 = smul.addr %s239, 4
      %s241 = smul.addr %s240, 8
      %s242 = scalar_lea.vmem %s4, %s241
      %p243 = pneg %p154
      %p244 = pneg %p151
      %p245 = scmp.lt.s32.totalorder %s18, 1
      %s246 = scalar_select %p245, %s18, 1
      %s247 = smul.addr %s246, 4
      %s248 = smul.addr %s247, 8
      %s249 = scalar_lea.vmem %s5, %s248
      %p250 = pneg %p180
      %p251 = pneg %p177
      %p252 = scmp.lt.s32.totalorder %s18, 1
      %s253 = scalar_select %p252, %s18, 1
      %s254 = smul.addr %s253, 4
      %s255 = smul.addr %s254, 8
      %s256 = scalar_lea.vmem %s6, %s255
      %p257 = scmp.lt.s32.totalorder %s18, 1
      %s258 = scalar_select %p257, %s18, 1
      %s259 = smul.addr %s258, 16
      %s260 = smul.addr %s259, 4
      %s261 = scalar_lea.vmem %s0, %s260
      %p262 = scmp.lt.s32.totalorder %s18, 1
      %s263 = scalar_select %p262, %s18, 1
      %s264 = smul.addr %s263, 4
      %s265 = smul.addr %s264, 8
      %s266 = scalar_lea.vmem %s4, %s265
      %p267 = scmp.lt.s32.totalorder %s18, 1
      %s268 = scalar_select %p267, %s18, 1
      %s269 = smul.addr %s268, 4
      %s270 = smul.addr %s269, 8
      %s271 = scalar_lea.vmem %s5, %s270
      %p272 = scmp.lt.s32.totalorder %s18, 1
      %s273 = scalar_select %p272, %s18, 1
      %s274 = smul.addr %s273, 4
      %s275 = smul.addr %s274, 8
      %s276 = scalar_lea.vmem %s6, %s275
      %v278 = vld [vmem:[%s1] sm:$0xff]
      %v279 = vld [vmem:[%s1 + $0x8] sm:$0xff]
      %v280 = vld [vmem:[%s1 + $0x10] sm:$0xff]
      %v281 = vld [vmem:[%s1 + $0x18] sm:$0xff]
      %v282 = vld [vmem:[%s2] sm:$0xff]
      %v283 = vld [vmem:[%s2 + $0x8] sm:$0xff]
      %v284 = vld [vmem:[%s2 + $0x10] sm:$0xff]
      %v285 = vld [vmem:[%s2 + $0x18] sm:$0xff]
      %v286 = vld [vmem:[%s3] sm:$0x1]
      %v287 = vld [vmem:[%s261] sm:$0xff]
      %v288 = vld [vmem:[%s261 + $0x8] sm:$0xff]
      %v291 = vunpack.c.l.b16 %v287
      %v292 = vunpack.c.l.b16 %v288
      %v293 = vpack.c.b16 %v292, %v291
      %295 = vst [vmem:[#allocation2] sm:$0xff] %v293
      %v296 = vunpack.c.h.b16 %v287
      %v297 = vunpack.c.h.b16 %v288
      %v298 = vpack.c.b16 %v297, %v296
      %299 = vrot.lane.b32.xlu0 %v293, 127
      %v300 = vpop.permute.xlu0 %299
      %301 = vrot.lane.b32.xlu0 %v298, 127
      %v302 = vpop.permute.xlu0 %301
      %vm303 = vcmask 1039360
      %v304 = vsel %vm303, %v300, %v302
      %306 = vst [vmem:[#allocation2 + $0x10] sm:$0xff] %v304
      %307 = vrot.lane.b32.xlu0 %v293, 119
      %v308 = vpop.permute.xlu0 %307
      %309 = vrot.lane.b32.xlu0 %v298, 119
      %v310 = vpop.permute.xlu0 %309
      %vm311 = vcmask 973824
      %v312 = vsel %vm311, %v308, %v310
      %314 = vst [vmem:[#allocation2 + $0x40] sm:$0xff] %v312
      %315 = vrot.lane.b32.xlu0 %v293, 118
      %v316 = vpop.permute.xlu0 %315
      %317 = vrot.lane.b32.xlu0 %v298, 118
      %v318 = vpop.permute.xlu0 %317
      %vm319 = vcmask 965632
      %v320 = vsel %vm319, %v316, %v318
      %322 = vst [vmem:[#allocation2 + $0x50] sm:$0xff] %v320
      %s323 = scalar_lea.vmem %s261, 16
      %v324 = vld [vmem:[%s323] sm:$0xff]
      %v325 = vld [vmem:[%s323 + $0x8] sm:$0xff]
      %v328 = vunpack.c.l.b16 %v324
      %v329 = vunpack.c.l.b16 %v325
      %v330 = vpack.c.b16 %v329, %v328
      %332 = vst [vmem:[#allocation2 + $0x8] sm:$0xff] %v330
      %v333 = vunpack.c.h.b16 %v324
      %v334 = vunpack.c.h.b16 %v325
      %v335 = vpack.c.b16 %v334, %v333
      %336 = vrot.lane.b32.xlu0 %v330, 127
      %v337 = vpop.permute.xlu0 %336
      %338 = vrot.lane.b32.xlu0 %v335, 127
      %v339 = vpop.permute.xlu0 %338
      %v340 = vsel %vm303, %v337, %v339
      %342 = vst [vmem:[#allocation2 + $0x18] sm:$0xff] %v340
      %343 = vrot.lane.b32.xlu0 %v330, 119
      %v344 = vpop.permute.xlu0 %343
      %345 = vrot.lane.b32.xlu0 %v335, 119
      %v346 = vpop.permute.xlu0 %345
      %v347 = vsel %vm311, %v344, %v346
      %349 = vst [vmem:[#allocation2 + $0x48] sm:$0xff] %v347
      %350 = vrot.lane.b32.xlu0 %v330, 118
      %v351 = vpop.permute.xlu0 %350
      %352 = vrot.lane.b32.xlu0 %v335, 118
      %v353 = vpop.permute.xlu0 %352
      %v354 = vsel %vm319, %v351, %v353
      %356 = vst [vmem:[#allocation2 + $0x58] sm:$0xff] %v354
      %s357 = scalar_lea.vmem %s261, 32
      %v358 = vld [vmem:[%s357] sm:$0xff]
      %v359 = vld [vmem:[%s357 + $0x8] sm:$0xff]
      %v362 = vunpack.c.l.b16 %v358
      %v363 = vunpack.c.l.b16 %v359
      %v364 = vpack.c.b16 %v363, %v362
      %366 = vst [vmem:[#allocation2 + $0x20] sm:$0xff] %v364
      %v367 = vunpack.c.h.b16 %v358
      %v368 = vunpack.c.h.b16 %v359
      %v369 = vpack.c.b16 %v368, %v367
      %370 = vrot.lane.b32.xlu0 %v364, 127
      %v371 = vpop.permute.xlu0 %370
      %372 = vrot.lane.b32.xlu0 %v369, 127
      %v373 = vpop.permute.xlu0 %372
      %v374 = vsel %vm303, %v371, %v373
      %376 = vst [vmem:[#allocation2 + $0x30] sm:$0xff] %v374
      %377 = vrot.lane.b32.xlu0 %v364, 119
      %v378 = vpop.permute.xlu0 %377
      %379 = vrot.lane.b32.xlu0 %v369, 119
      %v380 = vpop.permute.xlu0 %379
      %v381 = vsel %vm311, %v378, %v380
      %383 = vst [vmem:[#allocation2 + $0x60] sm:$0xff] %v381
      %384 = vrot.lane.b32.xlu0 %v364, 118
      %v385 = vpop.permute.xlu0 %384
      %386 = vrot.lane.b32.xlu0 %v369, 118
      %v387 = vpop.permute.xlu0 %386
      %v388 = vsel %vm319, %v385, %v387
      %390 = vst [vmem:[#allocation2 + $0x70] sm:$0xff] %v388
      %s391 = scalar_lea.vmem %s261, 48
      %v392 = vld [vmem:[%s391] sm:$0xff]
      %v393 = vld [vmem:[%s391 + $0x8] sm:$0xff]
      %v396 = vunpack.c.l.b16 %v392
      %v397 = vunpack.c.l.b16 %v393
      %v398 = vpack.c.b16 %v397, %v396
      %400 = vst [vmem:[#allocation2 + $0x28] sm:$0xff] %v398
      %v401 = vunpack.c.h.b16 %v392
      %v402 = vunpack.c.h.b16 %v393
      %v403 = vpack.c.b16 %v402, %v401
      %404 = vrot.lane.b32.xlu0 %v398, 127
      %v405 = vpop.permute.xlu0 %404
      %406 = vrot.lane.b32.xlu0 %v403, 127
      %v407 = vpop.permute.xlu0 %406
      %v408 = vsel %vm303, %v405, %v407
      %410 = vst [vmem:[#allocation2 + $0x38] sm:$0xff] %v408
      %411 = vrot.lane.b32.xlu0 %v398, 119
      %v412 = vpop.permute.xlu0 %411
      %413 = vrot.lane.b32.xlu0 %v403, 119
      %v414 = vpop.permute.xlu0 %413
      %v415 = vsel %vm311, %v412, %v414
      %417 = vst [vmem:[#allocation2 + $0x68] sm:$0xff] %v415
      %418 = vrot.lane.b32.xlu0 %v398, 118
      %v419 = vpop.permute.xlu0 %418
      %420 = vrot.lane.b32.xlu0 %v403, 118
      %v421 = vpop.permute.xlu0 %420
      %v422 = vsel %vm319, %v419, %v421
      %424 = vst [vmem:[#allocation2 + $0x78] sm:$0xff] %v422
      %v425 = vld [vmem:[#allocation2] sm:$0xff]
      %v426 = vld [vmem:[#allocation2 + $0x8] sm:$0xff]
      %v427 = vld [vmem:[#allocation2 + $0x10] sm:$0xff]
      %v428 = vld [vmem:[#allocation2 + $0x18] sm:$0xff]
      %v429 = vld [vmem:[#allocation2 + $0x20] sm:$0xff]
      %v430 = vld [vmem:[#allocation2 + $0x28] sm:$0xff]
      %v431 = vld [vmem:[#allocation2 + $0x30] sm:$0xff]
      %v432 = vld [vmem:[#allocation2 + $0x38] sm:$0xff]
      %v433 = vld [vmem:[#allocation2 + $0x40] sm:$0xff]
      %v434 = vld [vmem:[#allocation2 + $0x48] sm:$0xff]
      %v435 = vld [vmem:[#allocation2 + $0x50] sm:$0xff]
      %v436 = vld [vmem:[#allocation2 + $0x58] sm:$0xff]
      %v437 = vld [vmem:[#allocation2 + $0x60] sm:$0xff]
      %v438 = vld [vmem:[#allocation2 + $0x68] sm:$0xff]
      %v439 = vld [vmem:[#allocation2 + $0x70] sm:$0xff]
      %v440 = vld [vmem:[#allocation2 + $0x78] sm:$0xff]
      %442 = vset.pattern.permute.xlu0 0
      %443 = vperm.xlu0 %442, %v282
      %v444 = vpop.permute.xlu0 %443
      %447 = vset.pattern.permute.xlu0 0
      %448 = vperm.xlu0 %447, %v283
      %v449 = vpop.permute.xlu0 %448
      %452 = vset.pattern.permute.xlu0 0
      %453 = vperm.xlu0 %452, %v284
      %v454 = vpop.permute.xlu0 %453
      %457 = vset.pattern.permute.xlu0 0
      %458 = vperm.xlu0 %457, %v285
      %v459 = vpop.permute.xlu0 %458
      %v465 = vunpack.c.l.b16 %v278
      %v466 = vunpack.c.h.b16 %v278
      %v467 = vunpack.c.l.b16 %v279
      %v468 = vunpack.c.h.b16 %v279
      %v469 = vunpack.c.l.b16 %v280
      %v470 = vunpack.c.h.b16 %v280
      %v471 = vunpack.c.l.b16 %v281
      %v472 = vunpack.c.h.b16 %v281
      %v473 = vpack.c.b16 %v467, %v465
      %v474 = vpack.c.b16 %v468, %v466
      %v475 = vpack.c.b16 %v471, %v469
      %v476 = vpack.c.b16 %v472, %v470
      %481 = vmatprep.subr.bf16.mxu0 0
      %482 = vmatpush1.bf16.msra.mxu0 %v425
      %483 = vmatprep.subr.bf16.mxu0 0
      %484 = vmatpush1.bf16.msra.mxu0 %v426
      %485 = vmatprep.subr.bf16.mxu0 0
      %486 = vmatpush1.bf16.msra.mxu0 %v427
      %487 = vmatprep.subr.bf16.mxu0 0
      %488 = vmatpush1.bf16.msra.mxu0 %v428
      %489 = vmatprep.subr.bf16.mxu0 0
      %490 = vmatpush1.bf16.msra.mxu0 %v429
      %491 = vmatprep.subr.bf16.mxu0 0
      %492 = vmatpush1.bf16.msra.mxu0 %v430
      %493 = vmatprep.subr.bf16.mxu0 0
      %494 = vmatpush1.bf16.msra.mxu0 %v431
      %495 = vmatprep.subr.bf16.mxu0 0
      %496 = vmatpush1.bf16.msra.mxu0 %v432
      %497 = vmatprep.subr.bf16.mxu0 0
      %498 = vmatpush1.bf16.msra.mxu0 %v433
      %499 = vmatprep.subr.bf16.mxu0 0
      %500 = vmatpush1.bf16.msra.mxu0 %v434
      %501 = vmatprep.subr.bf16.mxu0 0
      %502 = vmatpush1.bf16.msra.mxu0 %v435
      %503 = vmatprep.subr.bf16.mxu0 0
      %504 = vmatpush1.bf16.msra.mxu0 %v436
      %505 = vmatprep.subr.bf16.mxu0 0
      %506 = vmatpush1.bf16.msra.mxu0 %v437
      %507 = vmatprep.subr.bf16.mxu0 0
      %508 = vmatpush1.bf16.msra.mxu0 %v438
      %509 = vmatprep.subr.bf16.mxu0 0
      %510 = vmatpush1.bf16.msra.mxu0 %v439
      %511 = vmatprep.subr.bf16.mxu0 0
      %512 = vmatpush1.bf16.msra.mxu0 %v440
      %513 = vmatprep.mubr.bf16.mxu0 %v474
      %514 = vmatmul.mubr.bf16.gmra.mrb[0].mxu0 %v473
      %v515 = vpop.f32.mrb[0].mxu0
      %v516 = vadd.f32 %v444, %v515
      %v517 = vpop.f32.mrb[0].mxu0
      %v518 = vpop.f32.mrb[0].mxu0
      %v519 = vadd.f32 %v449, %v518
      %v520 = vpop.f32.mrb[0].mxu0
      %521 = vmatprep.mubr.bf16.mxu0 %v476
      %522 = vmatmul.mubr.bf16.gmra.mrb[0].mxu0 %v475
      %v523 = vpop.f32.mrb[0].mxu0
      %v524 = vadd.f32 %v454, %v523
      %v525 = vpop.f32.mrb[0].mxu0
      %v526 = vpop.f32.mrb[0].mxu0
      %v527 = vadd.f32 %v459, %v526
      %v528 = vpop.f32.mrb[0].mxu0
      %529 = vdwg.mxu0
      %530 = vst [vmem:[%s266] sm:$0xff] %v516
      %531 = vst [vmem:[%s266 + $0x8] sm:$0xff] %v519
      %532 = vst [vmem:[%s266 + $0x10] sm:$0xff] %v524
      %533 = vst [vmem:[%s266 + $0x18] sm:$0xff] %v527
      %v535 = vlaneseq
      %v536 = vshrl.u32 %v535, 7
      %v537 = vsub.s32 0, %v536
      %v538 = vrot.slane %v286, %v537
      %v540 = vmul.f32 %v516, %v538
      %v541 = vmul.f32 %v519, %v538
      %v542 = vmul.f32 %v524, %v538
      %v543 = vmul.f32 %v527, %v538
      %544 = vadd.xlane.f32.xlu0 %v540
      %v545 = vpop.xlane.xlu0 %544
      %546 = vadd.xlane.f32.xlu0 %v541
      %v547 = vpop.xlane.xlu0 %546
      %548 = vadd.xlane.f32.xlu0 %v542
      %v549 = vpop.xlane.xlu0 %548
      %550 = vadd.xlane.f32.xlu0 %v543
      %v551 = vpop.xlane.xlu0 %550
      %v552 = vadd.f32 %v545, 0.0
      %v553 = vadd.f32 %v547, 0.0
      %v554 = vadd.f32 %v549, 0.0
      %v555 = vadd.f32 %v551, 0.0
      %v556 = vmul.f32 %v540, %v540
      %v557 = vmul.f32 %v541, %v541
      %v558 = vmul.f32 %v542, %v542
      %v559 = vmul.f32 %v543, %v543
      %560 = vadd.xlane.f32.xlu0 %v556
      %v561 = vpop.xlane.xlu0 %560
      %562 = vadd.xlane.f32.xlu0 %v557
      %v563 = vpop.xlane.xlu0 %562
      %564 = vadd.xlane.f32.xlu0 %v558
      %v565 = vpop.xlane.xlu0 %564
      %566 = vadd.xlane.f32.xlu0 %v559
      %v567 = vpop.xlane.xlu0 %566
      %v568 = vadd.f32 %v561, 0.0
      %v569 = vadd.f32 %v563, 0.0
      %v570 = vadd.f32 %v565, 0.0
      %v571 = vadd.f32 %v567, 0.0
      %vm572 = vcmask 7168
      %573 = vst.msk [vmem:[%s271] sm:$0xff] %vm572, %v552
      %574 = vst.msk [vmem:[%s271 + $0x8] sm:$0xff] %vm572, %v553
      %575 = vst.msk [vmem:[%s271 + $0x10] sm:$0xff] %vm572, %v554
      %576 = vst.msk [vmem:[%s271 + $0x18] sm:$0xff] %vm572, %v555
      %577 = vst.msk [vmem:[%s276] sm:$0xff] %vm572, %v568
      %578 = vst.msk [vmem:[%s276 + $0x8] sm:$0xff] %vm572, %v569
      %579 = vst.msk [vmem:[%s276 + $0x10] sm:$0xff] %vm572, %v570
      %580 = vst.msk [vmem:[%s276 + $0x18] sm:$0xff] %vm572, %v571
      %p581 = scmp.lt.s32.totalorder %s18, 1
      %s582 = scalar_select %p581, %s18, 1
      %s583 = smul.addr %s582, 4
      %s584 = smul.addr %s583, 8
      %s585 = scalar_lea.vmem %s4, %s584
      %p586 = scmp.lt.s32.totalorder %s18, 1
      %s587 = scalar_select %p586, %s18, 1
      %s588 = smul.addr %s587, 4
      %s589 = smul.addr %s588, 8
      %s590 = scalar_lea.vmem %s5, %s589
      %p591 = scmp.lt.s32.totalorder %s18, 1
      %s592 = scalar_select %p591, %s18, 1
      %s593 = smul.addr %s592, 4
      %s594 = smul.addr %s593, 8
      %s595 = scalar_lea.vmem %s6, %s594
      // Predicated region
      $region37: #{rec_discriminator_forward.6} parent=35 // pred_check
        %p596 = pneg %p125
      $region38: #{rec_discriminator_forward.6} parent=35 // pred_check_branch
        %598 = sbr.rel (%p596) target = $region40
      $region39: #{rec_discriminator_forward.6} parent=35 // pred_region
        _
      $region40: #{rec_discriminator_forward.6} parent=35 // pred_fallthru
        _
      // Predicated region
      $region41: #{rec_discriminator_forward.6} parent=35 // pred_check
        %p599 = pneg %p151
      $region42: #{rec_discriminator_forward.6} parent=35 // pred_check_branch
        %601 = sbr.rel (%p599) target = $region44
      $region43: #{rec_discriminator_forward.6} parent=35 // pred_region
        _
      $region44: #{rec_discriminator_forward.6} parent=35 // pred_fallthru
        _
      // Predicated region
      $region45: #{rec_discriminator_forward.6} parent=35 // pred_check
        %p602 = pneg %p177
      $region46: #{rec_discriminator_forward.6} parent=35 // pred_check_branch
        %604 = sbr.rel (%p602) target = $region48
      $region47: #{rec_discriminator_forward.6} parent=35 // pred_region
        _
      $region48: #{rec_discriminator_forward.6} parent=35 // pred_fallthru
        _
    $region36: #{rec_discriminator_forward.6} parent=5 // pred_fallthru
      _
    %p605 = scmp.le.s32.totalorder 2, %s13
    // Predicated region
    $region49: #{rec_discriminator_forward.6} parent=5 // pred_check
      %p606 = pneg %p605
    $region50: #{rec_discriminator_forward.6} parent=5 // pred_check_branch
      %608 = sbr.rel (%p606) target = $region52
    $region51: #{rec_discriminator_forward.6} parent=5 // pred_region
      %s609 = ssub.s32 %s13, 2
      // Predicated region
      $region53: #{rec_discriminator_forward.6} parent=51 // pred_check
        %p610 = pneg %p131
      $region54: #{rec_discriminator_forward.6} parent=51 // pred_check_branch
        %612 = sbr.rel (%p610) target = $region56
      $region55: #{rec_discriminator_forward.6} parent=51 // pred_region
        %p613 = scmp.lt.s32.totalorder %s19, 1
        %s614 = scalar_select %p613, %s19, 1
        %s615 = smul.addr %s614, 4
        %s616 = smul.addr %s615, 8
        %s617 = scalar_lea.vmem %s4, %s616
      $region56: #{rec_discriminator_forward.6} parent=51 // pred_fallthru
        _
      // Predicated region
      $region57: #{rec_discriminator_forward.6} parent=51 // pred_check
        %p618 = pneg %p157
      $region58: #{rec_discriminator_forward.6} parent=51 // pred_check_branch
        %620 = sbr.rel (%p618) target = $region60
      $region59: #{rec_discriminator_forward.6} parent=51 // pred_region
        %p621 = scmp.lt.s32.totalorder %s19, 1
        %s622 = scalar_select %p621, %s19, 1
        %s623 = smul.addr %s622, 4
        %s624 = smul.addr %s623, 8
        %s625 = scalar_lea.vmem %s5, %s624
      $region60: #{rec_discriminator_forward.6} parent=51 // pred_fallthru
        _
      // Predicated region
      $region61: #{rec_discriminator_forward.6} parent=51 // pred_check
        %p626 = pneg %p183
      $region62: #{rec_discriminator_forward.6} parent=51 // pred_check_branch
        %628 = sbr.rel (%p626) target = $region64
      $region63: #{rec_discriminator_forward.6} parent=51 // pred_region
        %p629 = scmp.lt.s32.totalorder %s19, 1
        %s630 = scalar_select %p629, %s19, 1
        %s631 = smul.addr %s630, 4
        %s632 = smul.addr %s631, 8
        %s633 = scalar_lea.vmem %s6, %s632
      $region64: #{rec_discriminator_forward.6} parent=51 // pred_fallthru
        _
    $region52: #{rec_discriminator_forward.6} parent=5 // pred_fallthru
      _
  $region6: #{rec_discriminator_forward.6} parent=0 // loop_footer
    %s17 = sadd.s32 1, %s13
  $region7: #{rec_discriminator_forward.6} parent=0 // loop_footer_branch
    %12 = sbr.rel target = $region3
  $region8: #{rec_discriminator_forward.6} parent=0 // loop_exit
    _

// kernel: rec_discriminator_forward.7
$region0: #{rec_discriminator_forward.7}
  #allocation0 [shape = 'u32[]', space=smem, size = 0x4, offset = 0x4, fixed_abs, tag = 'smem constant byte address 0x4 - core index']
  #allocation1 [shape = 'u32[144,128]{1,0:T(1,128)}', space=vmem, size = 0x12000, scoped, tag = 'internal scratch']
  #allocation2 [shape = 'bf16[512,128]{1,0:T(16,128)(2,1)}', space=vmem, size = 0x20000, scoped, tag = 'scratch operand']
  %s0 = inlined_call_operand.vmem [shape: bf16[2,4,32,256], index: 0, kind: input, shape index: {}]
  %s1 = inlined_call_operand.vmem [shape: bf16[64,512], index: 1, kind: input, shape index: {}]
  %s2 = inlined_call_operand.vmem [shape: f32[64,1], index: 2, kind: input, shape index: {}]
  %s3 = inlined_call_operand.vmem [shape: f32[1,128], index: 3, kind: input, shape index: {}]
  %s4 = inlined_call_operand.vmem [shape: f32[2,64,128], index: 4, kind: output, shape index: {0}]
  %s5 = inlined_call_operand.vmem [shape: f32[2,64,1], index: 5, kind: output, shape index: {1}]
  %s6 = inlined_call_operand.vmem [shape: f32[2,64,1], index: 6, kind: output, shape index: {2}]
  %7 = xla_tuple %s4, %s5, %s6
  %s8 = sld [smem:[#allocation0]]
  $region65: #{rec_discriminator_forward.7} parent=0
    _
  %s10 = ssub.s32 1, %s8
  %s11 = scalar_select 0, %s10, %s8
  loop: start=0, step=1, limit=4
  $region2: #{rec_discriminator_forward.7} parent=0 // loop_pre_header
    _
  $region3: #{rec_discriminator_forward.7} parent=0 // loop_header
    %s13 = sphi 0, %s17
    %p14 = scmp.ge.s32.totalorder %s13, 4
    %s23 = sphi 0, %s25
    %s26 = sphi 0, %s23
    %s27 = sphi 0, %s26
    %s43 = sphi 0, %s27
    %s47 = sphi 0, %s47
    %s49 = sphi 0, %s47
    %s50 = sphi 0, %s49
    %s64 = sphi 0, %s50
    %s68 = sphi 0, %s68
    %s70 = sphi 0, %s68
    %s71 = sphi 0, %s70
    %s85 = sphi 0, %s71
    %s89 = sphi 0, %s89
    %s91 = sphi 0, %s89
    %s92 = sphi 0, %s91
    %s106 = sphi 0, %s92
    %s112 = sphi 0, %s114
    %s115 = sphi 0, %s112
    %s116 = sphi 0, %s115
    %s132 = sphi 0, %s116
    %s138 = sphi 0, %s140
    %s141 = sphi 0, %s138
    %s142 = sphi 0, %s141
    %s158 = sphi 0, %s142
    %s164 = sphi 0, %s166
    %s167 = sphi 0, %s164
    %s168 = sphi 0, %s167
    %s184 = sphi 0, %s168
  $region4: #{rec_discriminator_forward.7} parent=0 // loop_header_branch
    %16 = sbr.rel (%p14) target = $region8
  $region5: #{rec_discriminator_forward.7} parent=0 // loop_body
    %s18 = ssub.s32 %s13, 1
    %s19 = ssub.s32 %s13, 2
    %s20 = sadd.s32 %s13, 1
    %s21 = ssub.s32 %s13, %s20
    %p22 = scmp.eq.s32.totalorder %s21, 0
    %s24 = sadd.s32 %s23, 1
    %s25 = scalar_select %p22, %s23, %s24
    %p28 = pneg %p22
    %p29 = scmp.eq.s32.totalorder %s13, 1
    %p30 = por %p28, %p29
    %p31 = scmp.ne.s32.totalorder %s23, %s26
    %p32 = scmp.eq.s32.totalorder %s13, 0
    %p33 = por %p31, %p32
    %p34 = scmp.ne.s32.totalorder %s23, %s26
    %p35 = scmp.eq.s32.totalorder %s18, 1
    %p36 = por %p34, %p35
    %p37 = scmp.ne.s32.totalorder %s26, %s27
    %p38 = scmp.eq.s32.totalorder %s18, 0
    %p39 = por %p37, %p38
    %p40 = scmp.ne.s32.totalorder %s26, %s27
    %p41 = scmp.eq.s32.totalorder %s19, 1
    %p42 = por %p40, %p41
    %p44 = scmp.ne.s32.totalorder %s27, %s43
    %p45 = scmp.eq.s32.totalorder %s19, 0
    %p46 = por %p44, %p45
    %s48 = sadd.s32 %s47, 1
    %p51 = scmp.eq.s32.totalorder %s13, 1
    %p52 = scmp.ne.s32.totalorder %s47, %s49
    %p53 = scmp.eq.s32.totalorder %s13, 0
    %p54 = por %p52, %p53
    %p55 = scmp.ne.s32.totalorder %s47, %s49
    %p56 = scmp.eq.s32.totalorder %s18, 1
    %p57 = por %p55, %p56
    %p58 = scmp.ne.s32.totalorder %s49, %s50
    %p59 = scmp.eq.s32.totalorder %s18, 0
    %p60 = por %p58, %p59
    %p61 = scmp.ne.s32.totalorder %s49, %s50
    %p62 = scmp.eq.s32.totalorder %s19, 1
    %p63 = por %p61, %p62
    %p65 = scmp.ne.s32.totalorder %s50, %s64
    %p66 = scmp.eq.s32.totalorder %s19, 0
    %p67 = por %p65, %p66
    %s69 = sadd.s32 %s68, 1
    %p72 = scmp.eq.s32.totalorder %s13, 1
    %p73 = scmp.ne.s32.totalorder %s68, %s70
    %p74 = scmp.eq.s32.totalorder %s13, 0
    %p75 = por %p73, %p74
    %p76 = scmp.ne.s32.totalorder %s68, %s70
    %p77 = scmp.eq.s32.totalorder %s18, 1
    %p78 = por %p76, %p77
    %p79 = scmp.ne.s32.totalorder %s70, %s71
    %p80 = scmp.eq.s32.totalorder %s18, 0
    %p81 = por %p79, %p80
    %p82 = scmp.ne.s32.totalorder %s70, %s71
    %p83 = scmp.eq.s32.totalorder %s19, 1
    %p84 = por %p82, %p83
    %p86 = scmp.ne.s32.totalorder %s71, %s85
    %p87 = scmp.eq.s32.totalorder %s19, 0
    %p88 = por %p86, %p87
    %s90 = sadd.s32 %s89, 1
    %p93 = scmp.eq.s32.totalorder %s13, 1
    %p94 = scmp.ne.s32.totalorder %s89, %s91
    %p95 = scmp.eq.s32.totalorder %s13, 0
    %p96 = por %p94, %p95
    %p97 = scmp.ne.s32.totalorder %s89, %s91
    %p98 = scmp.eq.s32.totalorder %s18, 1
    %p99 = por %p97, %p98
    %p100 = scmp.ne.s32.totalorder %s91, %s92
    %p101 = scmp.eq.s32.totalorder %s18, 0
    %p102 = por %p100, %p101
    %p103 = scmp.ne.s32.totalorder %s91, %s92
    %p104 = scmp.eq.s32.totalorder %s19, 1
    %p105 = por %p103, %p104
    %p107 = scmp.ne.s32.totalorder %s92, %s106
    %p108 = scmp.eq.s32.totalorder %s19, 0
    %p109 = por %p107, %p108
    %s110 = ssub.s32 %s13, %s20
    %p111 = scmp.eq.s32.totalorder %s110, 0
    %s113 = sadd.s32 %s112, 1
    %s114 = scalar_select %p111, %s112, %s113
    %p117 = pneg %p111
    %p118 = scmp.eq.s32.totalorder %s13, 1
    %p119 = por %p117, %p118
    %p120 = scmp.ne.s32.totalorder %s112, %s115
    %p121 = scmp.eq.s32.totalorder %s13, 0
    %p122 = por %p120, %p121
    %p123 = scmp.ne.s32.totalorder %s112, %s115
    %p124 = scmp.eq.s32.totalorder %s18, 1
    %p125 = por %p123, %p124
    %p126 = scmp.ne.s32.totalorder %s115, %s116
    %p127 = scmp.eq.s32.totalorder %s18, 0
    %p128 = por %p126, %p127
    %p129 = scmp.ne.s32.totalorder %s115, %s116
    %p130 = scmp.eq.s32.totalorder %s19, 1
    %p131 = por %p129, %p130
    %p133 = scmp.ne.s32.totalorder %s116, %s132
    %p134 = scmp.eq.s32.totalorder %s19, 0
    %p135 = por %p133, %p134
    %s136 = ssub.s32 %s13, %s20
    %p137 = scmp.eq.s32.totalorder %s136, 0
    %s139 = sadd.s32 %s138, 1
    %s140 = scalar_select %p137, %s138, %s139
    %p143 = pneg %p137
    %p144 = scmp.eq.s32.totalorder %s13, 1
    %p145 = por %p143, %p144
    %p146 = scmp.ne.s32.totalorder %s138, %s141
    %p147 = scmp.eq.s32.totalorder %s13, 0
    %p148 = por %p146, %p147
    %p149 = scmp.ne.s32.totalorder %s138, %s141
    %p150 = scmp.eq.s32.totalorder %s18, 1
    %p151 = por %p149, %p150
    %p152 = scmp.ne.s32.totalorder %s141, %s142
    %p153 = scmp.eq.s32.totalorder %s18, 0
    %p154 = por %p152, %p153
    %p155 = scmp.ne.s32.totalorder %s141, %s142
    %p156 = scmp.eq.s32.totalorder %s19, 1
    %p157 = por %p155, %p156
    %p159 = scmp.ne.s32.totalorder %s142, %s158
    %p160 = scmp.eq.s32.totalorder %s19, 0
    %p161 = por %p159, %p160
    %s162 = ssub.s32 %s13, %s20
    %p163 = scmp.eq.s32.totalorder %s162, 0
    %s165 = sadd.s32 %s164, 1
    %s166 = scalar_select %p163, %s164, %s165
    %p169 = pneg %p163
    %p170 = scmp.eq.s32.totalorder %s13, 1
    %p171 = por %p169, %p170
    %p172 = scmp.ne.s32.totalorder %s164, %s167
    %p173 = scmp.eq.s32.totalorder %s13, 0
    %p174 = por %p172, %p173
    %p175 = scmp.ne.s32.totalorder %s164, %s167
    %p176 = scmp.eq.s32.totalorder %s18, 1
    %p177 = por %p175, %p176
    %p178 = scmp.ne.s32.totalorder %s167, %s168
    %p179 = scmp.eq.s32.totalorder %s18, 0
    %p180 = por %p178, %p179
    %p181 = scmp.ne.s32.totalorder %s167, %s168
    %p182 = scmp.eq.s32.totalorder %s19, 1
    %p183 = por %p181, %p182
    %p185 = scmp.ne.s32.totalorder %s168, %s184
    %p186 = scmp.eq.s32.totalorder %s19, 0
    %p187 = por %p185, %p186
    %p188 = scmp.le.s32.totalorder 1, %s13
    %p189 = scmp.lt.s32.totalorder %s13, 3
    %p190 = pnand %p188, %p189
    %p191 = pneg %p190
    // Predicated region
    $region9: #{rec_discriminator_forward.7} parent=5 // pred_check
      _
    $region10: #{rec_discriminator_forward.7} parent=5 // pred_check_branch
      %193 = sbr.rel (%p190) target = $region12
    $region11: #{rec_discriminator_forward.7} parent=5 // pred_region
      %s194 = ssub.s32 %s13, 1
      // Predicated region
      $region13: #{rec_discriminator_forward.7} parent=11 // pred_check
        %p195 = pneg %p60
      $region14: #{rec_discriminator_forward.7} parent=11 // pred_check_branch
        %197 = sbr.rel (%p195) target = $region16
      $region15: #{rec_discriminator_forward.7} parent=11 // pred_region
        _
      $region16: #{rec_discriminator_forward.7} parent=11 // pred_fallthru
        _
      // Predicated region
      $region17: #{rec_discriminator_forward.7} parent=11 // pred_check
        %p198 = pneg %p81
      $region18: #{rec_discriminator_forward.7} parent=11 // pred_check_branch
        %200 = sbr.rel (%p198) target = $region20
      $region19: #{rec_discriminator_forward.7} parent=11 // pred_region
        _
      $region20: #{rec_discriminator_forward.7} parent=11 // pred_fallthru
        _
      // Predicated region
      $region21: #{rec_discriminator_forward.7} parent=11 // pred_check
        %p201 = pneg %p102
      $region22: #{rec_discriminator_forward.7} parent=11 // pred_check_branch
        %203 = sbr.rel (%p201) target = $region24
      $region23: #{rec_discriminator_forward.7} parent=11 // pred_region
        _
      $region24: #{rec_discriminator_forward.7} parent=11 // pred_fallthru
        _
    $region12: #{rec_discriminator_forward.7} parent=5 // pred_fallthru
      _
    %p204 = scmp.lt.s32.totalorder %s13, 2
    // Predicated region
    $region25: #{rec_discriminator_forward.7} parent=5 // pred_check
      %p205 = pneg %p204
    $region26: #{rec_discriminator_forward.7} parent=5 // pred_check_branch
      %207 = sbr.rel (%p205) target = $region28
    $region27: #{rec_discriminator_forward.7} parent=5 // pred_region
      // Predicated region
      $region29: #{rec_discriminator_forward.7} parent=27 // pred_check
        %p208 = pneg %p33
      $region30: #{rec_discriminator_forward.7} parent=27 // pred_check_branch
        %210 = sbr.rel (%p208) target = $region32
      $region31: #{rec_discriminator_forward.7} parent=27 // pred_region
        %p211 = scmp.lt.s32.totalorder %s13, 1
        %s212 = scalar_select %p211, %s13, 1
        %s213 = smul.addr %s212, 32
        %s214 = smul.addr %s213, 4
        %s215 = scalar_lea.vmem %s0, %s214
      $region32: #{rec_discriminator_forward.7} parent=27 // pred_fallthru
        _
    $region28: #{rec_discriminator_forward.7} parent=5 // pred_fallthru
      _
    %p216 = scmp.le.s32.totalorder 1, %s13
    %p217 = scmp.lt.s32.totalorder %s13, 3
    %p218 = pnand %p216, %p217
    %p219 = pneg %p218
    // Predicated region
    $region33: #{rec_discriminator_forward.7} parent=5 // pred_check
      _
    $region34: #{rec_discriminator_forward.7} parent=5 // pred_check_branch
      %221 = sbr.rel (%p218) target = $region36
    $region35: #{rec_discriminator_forward.7} parent=5 // pred_region
      %s222 = ssub.s32 %s13, 1
      %p223 = scmp.lt.s32.totalorder %s18, 1
      %s224 = scalar_select %p223, %s18, 1
      %s225 = smul.addr %s224, 32
      %s226 = smul.addr %s225, 4
      %s227 = scalar_lea.vmem %s0, %s226
      %p228 = pneg %p39
      %p229 = pneg %p36
      %p230 = pneg %p60
      %p231 = pneg %p57
      %p232 = pneg %p81
      %p233 = pneg %p78
      %p234 = pneg %p102
      %p235 = pneg %p99
      %p236 = pneg %p128
      %p237 = pneg %p125
      %p238 = scmp.lt.s32.totalorder %s18, 1
      %s239 = scalar_select %p238, %s18, 1
      %s240 = smul.addr %s239, 8
      %s241 = smul.addr %s240, 8
      %s242 = scalar_lea.vmem %s4, %s241
      %p243 = pneg %p154
      %p244 = pneg %p151
      %p245 = scmp.lt.s32.totalorder %s18, 1
      %s246 = scalar_select %p245, %s18, 1
      %s247 = smul.addr %s246, 8
      %s248 = smul.addr %s247, 8
      %s249 = scalar_lea.vmem %s5, %s248
      %p250 = pneg %p180
      %p251 = pneg %p177
      %p252 = scmp.lt.s32.totalorder %s18, 1
      %s253 = scalar_select %p252, %s18, 1
      %s254 = smul.addr %s253, 8
      %s255 = smul.addr %s254, 8
      %s256 = scalar_lea.vmem %s6, %s255
      %p257 = scmp.lt.s32.totalorder %s18, 1
      %s258 = scalar_select %p257, %s18, 1
      %s259 = smul.addr %s258, 32
      %s260 = smul.addr %s259, 4
      %s261 = scalar_lea.vmem %s0, %s260
      %p262 = scmp.lt.s32.totalorder %s18, 1
      %s263 = scalar_select %p262, %s18, 1
      %s264 = smul.addr %s263, 8
      %s265 = smul.addr %s264, 8
      %s266 = scalar_lea.vmem %s4, %s265
      %p267 = scmp.lt.s32.totalorder %s18, 1
      %s268 = scalar_select %p267, %s18, 1
      %s269 = smul.addr %s268, 8
      %s270 = smul.addr %s269, 8
      %s271 = scalar_lea.vmem %s5, %s270
      %p272 = scmp.lt.s32.totalorder %s18, 1
      %s273 = scalar_select %p272, %s18, 1
      %s274 = smul.addr %s273, 8
      %s275 = smul.addr %s274, 8
      %s276 = scalar_lea.vmem %s6, %s275
      %v278 = vld [vmem:[%s1] sm:$0xff]
      %v279 = vld [vmem:[%s1 + $0x8] sm:$0xff]
      %v280 = vld [vmem:[%s1 + $0x10] sm:$0xff]
      %v281 = vld [vmem:[%s1 + $0x18] sm:$0xff]
      %v282 = vld [vmem:[%s1 + $0x20] sm:$0xff]
      %v283 = vld [vmem:[%s1 + $0x28] sm:$0xff]
      %v284 = vld [vmem:[%s1 + $0x30] sm:$0xff]
      %v285 = vld [vmem:[%s1 + $0x38] sm:$0xff]
      %v286 = vld [vmem:[%s1 + $0x40] sm:$0xff]
      %v287 = vld [vmem:[%s1 + $0x48] sm:$0xff]
      %v288 = vld [vmem:[%s1 + $0x50] sm:$0xff]
      %v289 = vld [vmem:[%s1 + $0x58] sm:$0xff]
      %v290 = vld [vmem:[%s1 + $0x60] sm:$0xff]
      %v291 = vld [vmem:[%s1 + $0x68] sm:$0xff]
      %v292 = vld [vmem:[%s1 + $0x70] sm:$0xff]
      %v293 = vld [vmem:[%s1 + $0x78] sm:$0xff]
      %v294 = vld [vmem:[%s2] sm:$0xff]
      %v295 = vld [vmem:[%s2 + $0x8] sm:$0xff]
      %v296 = vld [vmem:[%s2 + $0x10] sm:$0xff]
      %v297 = vld [vmem:[%s2 + $0x18] sm:$0xff]
      %v298 = vld [vmem:[%s2 + $0x20] sm:$0xff]
      %v299 = vld [vmem:[%s2 + $0x28] sm:$0xff]
      %v300 = vld [vmem:[%s2 + $0x30] sm:$0xff]
      %v301 = vld [vmem:[%s2 + $0x38] sm:$0xff]
      %v302 = vld [vmem:[%s3] sm:$0x1]
      %v303 = vld [vmem:[%s261] sm:$0xff]
      %v304 = vld [vmem:[%s261 + $0x8] sm:$0xff]
      %v305 = vld [vmem:[%s261 + $0x10] sm:$0xff]
      %v306 = vld [vmem:[%s261 + $0x18] sm:$0xff]
      %v311 = vunpack.c.l.b16 %v303
      %v312 = vunpack.c.l.b16 %v304
      %v313 = vunpack.c.l.b16 %v305
      %v314 = vunpack.c.l.b16 %v306
      %v315 = vpack.c.b16 %v312, %v311
      %v316 = vpack.c.b16 %v314, %v313
      %319 = vst [vmem:[#allocation2] sm:$0xff] %v315
      %320 = vst [vmem:[#allocation2 + $0x8] sm:$0xff] %v316
      %v321 = vunpack.c.h.b16 %v303
      %v322 = vunpack.c.h.b16 %v304
      %v323 = vunpack.c.h.b16 %v305
      %v324 = vunpack.c.h.b16 %v306
      %v325 = vpack.c.b16 %v322, %v321
      %v326 = vpack.c.b16 %v324, %v323
      %327 = vrot.lane.b32.xlu0 %v315, 127
      %v328 = vpop.permute.xlu0 %327
      %329 = vrot.lane.b32.xlu0 %v325, 127
      %v330 = vpop.permute.xlu0 %329
      %331 = vrot.lane.b32.xlu0 %v316, 127
      %v332 = vpop.permute.xlu0 %331
      %333 = vrot.lane.b32.xlu0 %v326, 127
      %v334 = vpop.permute.xlu0 %333
      %vm335 = vcmask 1039360
      %v336 = vsel %vm335, %v328, %v330
      %v337 = vsel %vm335, %v332, %v334
      %340 = vst [vmem:[#allocation2 + $0x20] sm:$0xff] %v336
      %341 = vst [vmem:[#allocation2 + $0x28] sm:$0xff] %v337
      %342 = vrot.lane.b32.xlu0 %v315, 123
      %v343 = vpop.permute.xlu0 %342
      %344 = vrot.lane.b32.xlu0 %v325, 123
      %v345 = vpop.permute.xlu0 %344
      %346 = vrot.lane.b32.xlu0 %v316, 123
      %v347 = vpop.permute.xlu0 %346
      %348 = vrot.lane.b32.xlu0 %v326, 123
      %v349 = vpop.permute.xlu0 %348
      %vm350 = vcmask 1006592
      %v351 = vsel %vm350, %v343, %v345
      %v352 = vsel %vm350, %v347, %v349
      %355 = vst [vmem:[#allocation2 + $0x80] sm:$0xff] %v351
      %356 = vst [vmem:[#allocation2 + $0x88] sm:$0xff] %v352
      %357 = vrot.lane.b32.xlu0 %v315, 122
      %v358 = vpop.permute.xlu0 %357
      %359 = vrot.lane.b32.xlu0 %v325, 122
      %v360 = vpop.permute.xlu0 %359
      %361 = vrot.lane.b32.xlu0 %v316, 122
      %v362 = vpop.permute.xlu0 %361
      %363 = vrot.lane.b32.xlu0 %v326, 122
      %v364 = vpop.permute.xlu0 %363
      %vm365 = vcmask 998400
      %v366 = vsel %vm365, %v358, %v360
      %v367 = vsel %vm365, %v362, %v364
      %370 = vst [vmem:[#allocation2 + $0xa0] sm:$0xff] %v366
      %371 = vst [vmem:[#allocation2 + $0xa8] sm:$0xff] %v367
      %s372 = scalar_lea.vmem %s261, 32
      %v373 = vld [vmem:[%s372] sm:$0xff]
      %v374 = vld [vmem:[%s372 + $0x8] sm:$0xff]
      %v375 = vld [vmem:[%s372 + $0x10] sm:$0xff]
      %v376 = vld [vmem:[%s372 + $0x18] sm:$0xff]
      %v381 = vunpack.c.l.b16 %v373
      %v382 = vunpack.c.l.b16 %v374
      %v383 = vunpack.c.l.b16 %v375
      %v384 = vunpack.c.l.b16 %v376
      %v385 = vpack.c.b16 %v382, %v381
      %v386 = vpack.c.b16 %v384, %v383
      %389 = vst [vmem:[#allocation2 + $0x10] sm:$0xff] %v385
      %390 = vst [vmem:[#allocation2 + $0x18] sm:$0xff] %v386
      %v391 = vunpack.c.h.b16 %v373
      %v392 = vunpack.c.h.b16 %v374
      %v393 = vunpack.c.h.b16 %v375
      %v394 = vunpack.c.h.b16 %v376
      %v395 = vpack.c.b16 %v392, %v391
      %v396 = vpack.c.b16 %v394, %v393
      %397 = vrot.lane.b32.xlu0 %v385, 127
      %v398 = vpop.permute.xlu0 %397
      %399 = vrot.lane.b32.xlu0 %v395, 127
      %v400 = vpop.permute.xlu0 %399
      %401 = vrot.lane.b32.xlu0 %v386, 127
      %v402 = vpop.permute.xlu0 %401
      %403 = vrot.lane.b32.xlu0 %v396, 127
      %v404 = vpop.permute.xlu0 %403
      %v405 = vsel %vm335, %v398, %v400
      %v406 = vsel %vm335, %v402, %v404
      %409 = vst [vmem:[#allocation2 + $0x30] sm:$0xff] %v405
      %410 = vst [vmem:[#allocation2 + $0x38] sm:$0xff] %v406
      %411 = vrot.lane.b32.xlu0 %v385, 123
      %v412 = vpop.permute.xlu0 %411
      %413 = vrot.lane.b32.xlu0 %v395, 123
      %v414 = vpop.permute.xlu0 %413
      %415 = vrot.lane.b32.xlu0 %v386, 123
      %v416 = vpop.permute.xlu0 %415
      %417 = vrot.lane.b32.xlu0 %v396, 123
      %v418 = vpop.permute.xlu0 %417
      %v419 = vsel %vm350, %v412, %v414
      %v420 = vsel %vm350, %v416, %v418
      %423 = vst [vmem:[#allocation2 + $0x90] sm:$0xff] %v419
      %424 = vst [vmem:[#allocation2 + $0x98] sm:$0xff] %v420
      %425 = vrot.lane.b32.xlu0 %v385, 122
      %v426 = vpop.permute.xlu0 %425
      %427 = vrot.lane.b32.xlu0 %v395, 122
      %v428 = vpop.permute.xlu0 %427
      %429 = vrot.lane.b32.xlu0 %v386, 122
      %v430 = vpop.permute.xlu0 %429
      %431 = vrot.lane.b32.xlu0 %v396, 122
      %v432 = vpop.permute.xlu0 %431
      %v433 = vsel %vm365, %v426, %v428
      %v434 = vsel %vm365, %v430, %v432
      %437 = vst [vmem:[#allocation2 + $0xb0] sm:$0xff] %v433
      %438 = vst [vmem:[#allocation2 + $0xb8] sm:$0xff] %v434
      %s439 = scalar_lea.vmem %s261, 64
      %v440 = vld [vmem:[%s439] sm:$0xff]
      %v441 = vld [vmem:[%s439 + $0x8] sm:$0xff]
      %v442 = vld [vmem:[%s439 + $0x10] sm:$0xff]
      %v443 = vld [vmem:[%s439 + $0x18] sm:$0xff]
      %v448 = vunpack.c.l.b16 %v440
      %v449 = vunpack.c.l.b16 %v441
      %v450 = vunpack.c.l.b16 %v442
      %v451 = vunpack.c.l.b16 %v443
      %v452 = vpack.c.b16 %v449, %v448
      %v453 = vpack.c.b16 %v451, %v450
      %456 = vst [vmem:[#allocation2 + $0x40] sm:$0xff] %v452
      %457 = vst [vmem:[#allocation2 + $0x48] sm:$0xff] %v453
      %v458 = vunpack.c.h.b16 %v440
      %v459 = vunpack.c.h.b16 %v441
      %v460 = vunpack.c.h.b16 %v442
      %v461 = vunpack.c.h.b16 %v443
      %v462 = vpack.c.b16 %v459, %v458
      %v463 = vpack.c.b16 %v461, %v460
      %464 = vrot.lane.b32.xlu0 %v452, 127
      %v465 = vpop.permute.xlu0 %464
      %466 = vrot.lane.b32.xlu0 %v462, 127
      %v467 = vpop.permute.xlu0 %466
      %468 = vrot.lane.b32.xlu0 %v453, 127
      %v469 = vpop.permute.xlu0 %468
      %470 = vrot.lane.b32.xlu0 %v463, 127
      %v471 = vpop.permute.xlu0 %470
      %v472 = vsel %vm335, %v465, %v467
      %v473 = vsel %vm335, %v469, %v471
      %476 = vst [vmem:[#allocation2 + $0x60] sm:$0xff] %v472
      %477 = vst [vmem:[#allocation2 + $0x68] sm:$0xff] %v473
      %478 = vrot.lane.b32.xlu0 %v452, 123
      %v479 = vpop.permute.xlu0 %478
      %480 = vrot.lane.b32.xlu0 %v462, 123
      %v481 = vpop.permute.xlu0 %480
      %482 = vrot.lane.b32.xlu0 %v453, 123
      %v483 = vpop.permute.xlu0 %482
      %484 = vrot.lane.b32.xlu0 %v463, 123
      %v485 = vpop.permute.xlu0 %484
      %v486 = vsel %vm350, %v479, %v481
      %v487 = vsel %vm350, %v483, %v485
      %490 = vst [vmem:[#allocation2 + $0xc0] sm:$0xff] %v486
      %491 = vst [vmem:[#allocation2 + $0xc8] sm:$0xff] %v487
      %492 = vrot.lane.b32.xlu0 %v452, 122
      %v493 = vpop.permute.xlu0 %492
      %494 = vrot.lane.b32.xlu0 %v462, 122
      %v495 = vpop.permute.xlu0 %494
      %496 = vrot.lane.b32.xlu0 %v453, 122
      %v497 = vpop.permute.xlu0 %496
      %498 = vrot.lane.b32.xlu0 %v463, 122
      %v499 = vpop.permute.xlu0 %498
      %v500 = vsel %vm365, %v493, %v495
      %v501 = vsel %vm365, %v497, %v499
      %504 = vst [vmem:[#allocation2 + $0xe0] sm:$0xff] %v500
      %505 = vst [vmem:[#allocation2 + $0xe8] sm:$0xff] %v501
      %s506 = scalar_lea.vmem %s261, 96
      %v507 = vld [vmem:[%s506] sm:$0xff]
      %v508 = vld [vmem:[%s506 + $0x8] sm:$0xff]
      %v509 = vld [vmem:[%s506 + $0x10] sm:$0xff]
      %v510 = vld [vmem:[%s506 + $0x18] sm:$0xff]
      %v515 = vunpack.c.l.b16 %v507
      %v516 = vunpack.c.l.b16 %v508
      %v517 = vunpack.c.l.b16 %v509
      %v518 = vunpack.c.l.b16 %v510
      %v519 = vpack.c.b16 %v516, %v515
      %v520 = vpack.c.b16 %v518, %v517
      %523 = vst [vmem:[#allocation2 + $0x50] sm:$0xff] %v519
      %524 = vst [vmem:[#allocation2 + $0x58] sm:$0xff] %v520
      %v525 = vunpack.c.h.b16 %v507
      %v526 = vunpack.c.h.b16 %v508
      %v527 = vunpack.c.h.b16 %v509
      %v528 = vunpack.c.h.b16 %v510
      %v529 = vpack.c.b16 %v526, %v525
      %v530 = vpack.c.b16 %v528, %v527
      %531 = vrot.lane.b32.xlu0 %v519, 127
      %v532 = vpop.permute.xlu0 %531
      %533 = vrot.lane.b32.xlu0 %v529, 127
      %v534 = vpop.permute.xlu0 %533
      %535 = vrot.lane.b32.xlu0 %v520, 127
      %v536 = vpop.permute.xlu0 %535
      %537 = vrot.lane.b32.xlu0 %v530, 127
      %v538 = vpop.permute.xlu0 %537
      %v539 = vsel %vm335, %v532, %v534
      %v540 = vsel %vm335, %v536, %v538
      %543 = vst [vmem:[#allocation2 + $0x70] sm:$0xff] %v539
      %544 = vst [vmem:[#allocation2 + $0x78] sm:$0xff] %v540
      %545 = vrot.lane.b32.xlu0 %v519, 123
      %v546 = vpop.permute.xlu0 %545
      %547 = vrot.lane.b32.xlu0 %v529, 123
      %v548 = vpop.permute.xlu0 %547
      %549 = vrot.lane.b32.xlu0 %v520, 123
      %v550 = vpop.permute.xlu0 %549
      %551 = vrot.lane.b32.xlu0 %v530, 123
      %v552 = vpop.permute.xlu0 %551
      %v553 = vsel %vm350, %v546, %v548
      %v554 = vsel %vm350, %v550, %v552
      %557 = vst [vmem:[#allocation2 + $0xd0] sm:$0xff] %v553
      %558 = vst [vmem:[#allocation2 + $0xd8] sm:$0xff] %v554
      %559 = vrot.lane.b32.xlu0 %v519, 122
      %v560 = vpop.permute.xlu0 %559
      %561 = vrot.lane.b32.xlu0 %v529, 122
      %v562 = vpop.permute.xlu0 %561
      %563 = vrot.lane.b32.xlu0 %v520, 122
      %v564 = vpop.permute.xlu0 %563
      %565 = vrot.lane.b32.xlu0 %v530, 122
      %v566 = vpop.permute.xlu0 %565
      %v567 = vsel %vm365, %v560, %v562
      %v568 = vsel %vm365, %v564, %v566
      %571 = vst [vmem:[#allocation2 + $0xf0] sm:$0xff] %v567
      %572 = vst [vmem:[#allocation2 + $0xf8] sm:$0xff] %v568
      %v573 = vld [vmem:[#allocation2] sm:$0xff]
      %v574 = vld [vmem:[#allocation2 + $0x8] sm:$0xff]
      %v575 = vld [vmem:[#allocation2 + $0x10] sm:$0xff]
      %v576 = vld [vmem:[#allocation2 + $0x18] sm:$0xff]
      %v577 = vld [vmem:[#allocation2 + $0x20] sm:$0xff]
      %v578 = vld [vmem:[#allocation2 + $0x28] sm:$0xff]
      %v579 = vld [vmem:[#allocation2 + $0x30] sm:$0xff]
      %v580 = vld [vmem:[#allocation2 + $0x38] sm:$0xff]
      %v581 = vld [vmem:[#allocation2 + $0x40] sm:$0xff]
      %v582 = vld [vmem:[#allocation2 + $0x48] sm:$0xff]
      %v583 = vld [vmem:[#allocation2 + $0x50] sm:$0xff]
      %v584 = vld [vmem:[#allocation2 + $0x58] sm:$0xff]
      %v585 = vld [vmem:[#allocation2 + $0x60] sm:$0xff]
      %v586 = vld [vmem:[#allocation2 + $0x68] sm:$0xff]
      %v587 = vld [vmem:[#allocation2 + $0x70] sm:$0xff]
      %v588 = vld [vmem:[#allocation2 + $0x78] sm:$0xff]
      %v589 = vld [vmem:[#allocation2 + $0x80] sm:$0xff]
      %v590 = vld [vmem:[#allocation2 + $0x88] sm:$0xff]
      %v591 = vld [vmem:[#allocation2 + $0x90] sm:$0xff]
      %v592 = vld [vmem:[#allocation2 + $0x98] sm:$0xff]
      %v593 = vld [vmem:[#allocation2 + $0xa0] sm:$0xff]
      %v594 = vld [vmem:[#allocation2 + $0xa8] sm:$0xff]
      %v595 = vld [vmem:[#allocation2 + $0xb0] sm:$0xff]
      %v596 = vld [vmem:[#allocation2 + $0xb8] sm:$0xff]
      %v597 = vld [vmem:[#allocation2 + $0xc0] sm:$0xff]
      %v598 = vld [vmem:[#allocation2 + $0xc8] sm:$0xff]
      %v599 = vld [vmem:[#allocation2 + $0xd0] sm:$0xff]
      %v600 = vld [vmem:[#allocation2 + $0xd8] sm:$0xff]
      %v601 = vld [vmem:[#allocation2 + $0xe0] sm:$0xff]
      %v602 = vld [vmem:[#allocation2 + $0xe8] sm:$0xff]
      %v603 = vld [vmem:[#allocation2 + $0xf0] sm:$0xff]
      %v604 = vld [vmem:[#allocation2 + $0xf8] sm:$0xff]
      %606 = vset.pattern.permute.xlu0 0
      %607 = vperm.xlu0 %606, %v294
      %v608 = vpop.permute.xlu0 %607
      %611 = vset.pattern.permute.xlu0 0
      %612 = vperm.xlu0 %611, %v295
      %v613 = vpop.permute.xlu0 %612
      %616 = vset.pattern.permute.xlu0 0
      %617 = vperm.xlu0 %616, %v296
      %v618 = vpop.permute.xlu0 %617
      %621 = vset.pattern.permute.xlu0 0
      %622 = vperm.xlu0 %621, %v297
      %v623 = vpop.permute.xlu0 %622
      %626 = vset.pattern.permute.xlu0 0
      %627 = vperm.xlu0 %626, %v298
      %v628 = vpop.permute.xlu0 %627
      %631 = vset.pattern.permute.xlu0 0
      %632 = vperm.xlu0 %631, %v299
      %v633 = vpop.permute.xlu0 %632
      %636 = vset.pattern.permute.xlu0 0
      %637 = vperm.xlu0 %636, %v300
      %v638 = vpop.permute.xlu0 %637
      %641 = vset.pattern.permute.xlu0 0
      %642 = vperm.xlu0 %641, %v301
      %v643 = vpop.permute.xlu0 %642
      %v661 = vunpack.c.l.b16 %v278
      %v662 = vunpack.c.h.b16 %v278
      %v663 = vunpack.c.l.b16 %v279
      %v664 = vunpack.c.h.b16 %v279
      %v665 = vunpack.c.l.b16 %v280
      %v666 = vunpack.c.h.b16 %v280
      %v667 = vunpack.c.l.b16 %v281
      %v668 = vunpack.c.h.b16 %v281
      %v669 = vunpack.c.l.b16 %v282
      %v670 = vunpack.c.h.b16 %v282
      %v671 = vunpack.c.l.b16 %v283
      %v672 = vunpack.c.h.b16 %v283
      %v673 = vunpack.c.l.b16 %v284
      %v674 = vunpack.c.h.b16 %v284
      %v675 = vunpack.c.l.b16 %v285
      %v676 = vunpack.c.h.b16 %v285
      %v677 = vunpack.c.l.b16 %v286
      %v678 = vunpack.c.h.b16 %v286
      %v679 = vunpack.c.l.b16 %v287
      %v680 = vunpack.c.h.b16 %v287
      %v681 = vunpack.c.l.b16 %v288
      %v682 = vunpack.c.h.b16 %v288
      %v683 = vunpack.c.l.b16 %v289
      %v684 = vunpack.c.h.b16 %v289
      %v685 = vunpack.c.l.b16 %v290
      %v686 = vunpack.c.h.b16 %v290
      %v687 = vunpack.c.l.b16 %v291
      %v688 = vunpack.c.h.b16 %v291
      %v689 = vunpack.c.l.b16 %v292
      %v690 = vunpack.c.h.b16 %v292
      %v691 = vunpack.c.l.b16 %v293
      %v692 = vunpack.c.h.b16 %v293
      %v693 = vpack.c.b16 %v665, %v661
      %v694 = vpack.c.b16 %v666, %v662
      %v695 = vpack.c.b16 %v667, %v663
      %v696 = vpack.c.b16 %v668, %v664
      %v697 = vpack.c.b16 %v673, %v669
      %v698 = vpack.c.b16 %v674, %v670
      %v699 = vpack.c.b16 %v675, %v671
      %v700 = vpack.c.b16 %v676, %v672
      %v701 = vpack.c.b16 %v681, %v677
      %v702 = vpack.c.b16 %v682, %v678
      %v703 = vpack.c.b16 %v683, %v679
      %v704 = vpack.c.b16 %v684, %v680
      %v705 = vpack.c.b16 %v689, %v685
      %v706 = vpack.c.b16 %v690, %v686
      %v707 = vpack.c.b16 %v691, %v687
      %v708 = vpack.c.b16 %v692, %v688
      %725 = vmatprep.subr.bf16.mxu0 0
      %726 = vmatpush1.bf16.msra.mxu0 %v573
      %727 = vmatprep.subr.bf16.mxu0 0
      %728 = vmatpush1.bf16.msra.mxu0 %v574
      %729 = vmatprep.subr.bf16.mxu0 0
      %730 = vmatpush1.bf16.msra.mxu0 %v575
      %731 = vmatprep.subr.bf16.mxu0 0
      %732 = vmatpush1.bf16.msra.mxu0 %v576
      %733 = vmatprep.subr.bf16.mxu0 0
      %734 = vmatpush1.bf16.msra.mxu0 %v577
      %735 = vmatprep.subr.bf16.mxu0 0
      %736 = vmatpush1.bf16.msra.mxu0 %v578
      %737 = vmatprep.subr.bf16.mxu0 0
      %738 = vmatpush1.bf16.msra.mxu0 %v579
      %739 = vmatprep.subr.bf16.mxu0 0
      %740 = vmatpush1.bf16.msra.mxu0 %v580
      %741 = vmatprep.subr.bf16.mxu0 0
      %742 = vmatpush1.bf16.msra.mxu0 %v581
      %743 = vmatprep.subr.bf16.mxu0 0
      %744 = vmatpush1.bf16.msra.mxu0 %v582
      %745 = vmatprep.subr.bf16.mxu0 0
      %746 = vmatpush1.bf16.msra.mxu0 %v583
      %747 = vmatprep.subr.bf16.mxu0 0
      %748 = vmatpush1.bf16.msra.mxu0 %v584
      %749 = vmatprep.subr.bf16.mxu0 0
      %750 = vmatpush1.bf16.msra.mxu0 %v585
      %751 = vmatprep.subr.bf16.mxu0 0
      %752 = vmatpush1.bf16.msra.mxu0 %v586
      %753 = vmatprep.subr.bf16.mxu0 0
      %754 = vmatpush1.bf16.msra.mxu0 %v587
      %755 = vmatprep.subr.bf16.mxu0 0
      %756 = vmatpush1.bf16.msra.mxu0 %v588
      %757 = vmatprep.mubr.bf16.mxu0 %v694
      %758 = vmatmul.mubr.bf16.gmra.mrb[0].mxu0 %v693
      %v759 = vpop.f32.mrb[0].mxu0
      %v760 = vadd.f32 %v608, %v759
      %v761 = vpop.f32.mrb[0].mxu0
      %v762 = vpop.f32.mrb[0].mxu0
      %v763 = vadd.f32 %v613, %v762
      %v764 = vpop.f32.mrb[0].mxu0
      %765 = vmatprep.mubr.bf16.mxu0 %v698
      %766 = vmatmul.mubr.bf16.gmra.mrb[0].mxu0 %v697
      %v767 = vpop.f32.mrb[0].mxu0
      %v768 = vadd.f32 %v618, %v767
      %v769 = vpop.f32.mrb[0].mxu0
      %v770 = vpop.f32.mrb[0].mxu0
      %v771 = vadd.f32 %v623, %v770
      %v772 = vpop.f32.mrb[0].mxu0
      %773 = vmatprep.mubr.bf16.mxu0 %v702
      %774 = vmatmul.mubr.bf16.gmra.mrb[0].mxu0 %v701
      %v775 = vpop.f32.mrb[0].mxu0
      %v776 = vadd.f32 %v628, %v775
      %v777 = vpop.f32.mrb[0].mxu0
      %v778 = vpop.f32.mrb[0].mxu0
      %v779 = vadd.f32 %v633, %v778
      %v780 = vpop.f32.mrb[0].mxu0
      %781 = vmatprep.mubr.bf16.mxu0 %v706
      %782 = vmatmul.mubr.bf16.gmra.mrb[0].mxu0 %v705
      %v783 = vpop.f32.mrb[0].mxu0
      %v784 = vadd.f32 %v638, %v783
      %v785 = vpop.f32.mrb[0].mxu0
      %v786 = vpop.f32.mrb[0].mxu0
      %v787 = vadd.f32 %v643, %v786
      %v788 = vpop.f32.mrb[0].mxu0
      %789 = vdwg.mxu0
      %790 = vmatprep.subr.bf16.mxu0 0
      %791 = vmatpush1.bf16.msra.mxu0 %v589
      %792 = vmatprep.subr.bf16.mxu0 0
      %793 = vmatpush1.bf16.msra.mxu0 %v590
      %794 = vmatprep.subr.bf16.mxu0 0
      %795 = vmatpush1.bf16.msra.mxu0 %v591
      %796 = vmatprep.subr.bf16.mxu0 0
      %797 = vmatpush1.bf16.msra.mxu0 %v592
      %798 = vmatprep.subr.bf16.mxu0 0
      %799 = vmatpush1.bf16.msra.mxu0 %v593
      %800 = vmatprep.subr.bf16.mxu0 0
      %801 = vmatpush1.bf16.msra.mxu0 %v594
      %802 = vmatprep.subr.bf16.mxu0 0
      %803 = vmatpush1.bf16.msra.mxu0 %v595
      %804 = vmatprep.subr.bf16.mxu0 0
      %805 = vmatpush1.bf16.msra.mxu0 %v596
      %806 = vmatprep.subr.bf16.mxu0 0
      %807 = vmatpush1.bf16.msra.mxu0 %v597
      %808 = vmatprep.subr.bf16.mxu0 0
      %809 = vmatpush1.bf16.msra.mxu0 %v598
      %810 = vmatprep.subr.bf16.mxu0 0
      %811 = vmatpush1.bf16.msra.mxu0 %v599
      %812 = vmatprep.subr.bf16.mxu0 0
      %813 = vmatpush1.bf16.msra.mxu0 %v600
      %814 = vmatprep.subr.bf16.mxu0 0
      %815 = vmatpush1.bf16.msra.mxu0 %v601
      %816 = vmatprep.subr.bf16.mxu0 0
      %817 = vmatpush1.bf16.msra.mxu0 %v602
      %818 = vmatprep.subr.bf16.mxu0 0
      %819 = vmatpush1.bf16.msra.mxu0 %v603
      %820 = vmatprep.subr.bf16.mxu0 0
      %821 = vmatpush1.bf16.msra.mxu0 %v604
      %822 = vmatprep.mubr.bf16.mxu0 %v696
      %823 = vmatmul.mubr.bf16.gmra.mrb[0].mxu0 %v695
      %v824 = vpop.f32.mrb[0].mxu0
      %v825 = vadd.f32 %v760, %v824
      %v826 = vpop.f32.mrb[0].mxu0
      %v827 = vpop.f32.mrb[0].mxu0
      %v828 = vadd.f32 %v763, %v827
      %v829 = vpop.f32.mrb[0].mxu0
      %830 = vmatprep.mubr.bf16.mxu0 %v700
      %831 = vmatmul.mubr.bf16.gmra.mrb[0].mxu0 %v699
      %v832 = vpop.f32.mrb[0].mxu0
      %v833 = vadd.f32 %v768, %v832
      %v834 = vpop.f32.mrb[0].mxu0
      %v835 = vpop.f32.mrb[0].mxu0
      %v836 = vadd.f32 %v771, %v835
      %v837 = vpop.f32.mrb[0].mxu0
      %838 = vmatprep.mubr.bf16.mxu0 %v704
      %839 = vmatmul.mubr.bf16.gmra.mrb[0].mxu0 %v703
      %v840 = vpop.f32.mrb[0].mxu0
      %v841 = vadd.f32 %v776, %v840
      %v842 = vpop.f32.mrb[0].mxu0
      %v843 = vpop.f32.mrb[0].mxu0
      %v844 = vadd.f32 %v779, %v843
      %v845 = vpop.f32.mrb[0].mxu0
      %846 = vmatprep.mubr.bf16.mxu0 %v708
      %847 = vmatmul.mubr.bf16.gmra.mrb[0].mxu0 %v707
      %v848 = vpop.f32.mrb[0].mxu0
      %v849 = vadd.f32 %v784, %v848
      %v850 = vpop.f32.mrb[0].mxu0
      %v851 = vpop.f32.mrb[0].mxu0
      %v852 = vadd.f32 %v787, %v851
      %v853 = vpop.f32.mrb[0].mxu0
      %854 = vdwg.mxu0
      %855 = vst [vmem:[%s266] sm:$0xff] %v825
      %856 = vst [vmem:[%s266 + $0x8] sm:$0xff] %v828
      %857 = vst [vmem:[%s266 + $0x10] sm:$0xff] %v833
      %858 = vst [vmem:[%s266 + $0x18] sm:$0xff] %v836
      %859 = vst [vmem:[%s266 + $0x20] sm:$0xff] %v841
      %860 = vst [vmem:[%s266 + $0x28] sm:$0xff] %v844
      %861 = vst [vmem:[%s266 + $0x30] sm:$0xff] %v849
      %862 = vst [vmem:[%s266 + $0x38] sm:$0xff] %v852
      %v864 = vlaneseq
      %v865 = vshrl.u32 %v864, 7
      %v866 = vsub.s32 0, %v865
      %v867 = vrot.slane %v302, %v866
      %v869 = vmul.f32 %v825, %v867
      %v870 = vmul.f32 %v828, %v867
      %v871 = vmul.f32 %v833, %v867
      %v872 = vmul.f32 %v836, %v867
      %v873 = vmul.f32 %v841, %v867
      %v874 = vmul.f32 %v844, %v867
      %v875 = vmul.f32 %v849, %v867
      %v876 = vmul.f32 %v852, %v867
      %877 = vadd.xlane.f32.xlu0 %v869
      %v878 = vpop.xlane.xlu0 %877
      %879 = vadd.xlane.f32.xlu0 %v870
      %v880 = vpop.xlane.xlu0 %879
      %881 = vadd.xlane.f32.xlu0 %v871
      %v882 = vpop.xlane.xlu0 %881
      %883 = vadd.xlane.f32.xlu0 %v872
      %v884 = vpop.xlane.xlu0 %883
      %885 = vadd.xlane.f32.xlu0 %v873
      %v886 = vpop.xlane.xlu0 %885
      %887 = vadd.xlane.f32.xlu0 %v874
      %v888 = vpop.xlane.xlu0 %887
      %889 = vadd.xlane.f32.xlu0 %v875
      %v890 = vpop.xlane.xlu0 %889
      %891 = vadd.xlane.f32.xlu0 %v876
      %v892 = vpop.xlane.xlu0 %891
      %v893 = vadd.f32 %v878, 0.0
      %v894 = vadd.f32 %v880, 0.0
      %v895 = vadd.f32 %v882, 0.0
      %v896 = vadd.f32 %v884, 0.0
      %v897 = vadd.f32 %v886, 0.0
      %v898 = vadd.f32 %v888, 0.0
      %v899 = vadd.f32 %v890, 0.0
      %v900 = vadd.f32 %v892, 0.0
      %v901 = vmul.f32 %v869, %v869
      %v902 = vmul.f32 %v870, %v870
      %v903 = vmul.f32 %v871, %v871
      %v904 = vmul.f32 %v872, %v872
      %v905 = vmul.f32 %v873, %v873
      %v906 = vmul.f32 %v874, %v874
      %v907 = vmul.f32 %v875, %v875
      %v908 = vmul.f32 %v876, %v876
      %909 = vadd.xlane.f32.xlu0 %v901
      %v910 = vpop.xlane.xlu0 %909
      %911 = vadd.xlane.f32.xlu0 %v902
      %v912 = vpop.xlane.xlu0 %911
      %913 = vadd.xlane.f32.xlu0 %v903
      %v914 = vpop.xlane.xlu0 %913
      %915 = vadd.xlane.f32.xlu0 %v904
      %v916 = vpop.xlane.xlu0 %915
      %917 = vadd.xlane.f32.xlu0 %v905
      %v918 = vpop.xlane.xlu0 %917
      %919 = vadd.xlane.f32.xlu0 %v906
      %v920 = vpop.xlane.xlu0 %919
      %921 = vadd.xlane.f32.xlu0 %v907
      %v922 = vpop.xlane.xlu0 %921
      %923 = vadd.xlane.f32.xlu0 %v908
      %v924 = vpop.xlane.xlu0 %923
      %v925 = vadd.f32 %v910, 0.0
      %v926 = vadd.f32 %v912, 0.0
      %v927 = vadd.f32 %v914, 0.0
      %v928 = vadd.f32 %v916, 0.0
      %v929 = vadd.f32 %v918, 0.0
      %v930 = vadd.f32 %v920, 0.0
      %v931 = vadd.f32 %v922, 0.0
      %v932 = vadd.f32 %v924, 0.0
      %vm933 = vcmask 7168
      %934 = vst.msk [vmem:[%s271] sm:$0xff] %vm933, %v893
      %935 = vst.msk [vmem:[%s271 + $0x8] sm:$0xff] %vm933, %v894
      %936 = vst.msk [vmem:[%s271 + $0x10] sm:$0xff] %vm933, %v895
      %937 = vst.msk [vmem:[%s271 + $0x18] sm:$0xff] %vm933, %v896
      %938 = vst.msk [vmem:[%s271 + $0x20] sm:$0xff] %vm933, %v897
      %939 = vst.msk [vmem:[%s271 + $0x28] sm:$0xff] %vm933, %v898
      %940 = vst.msk [vmem:[%s271 + $0x30] sm:$0xff] %vm933, %v899
      %941 = vst.msk [vmem:[%s271 + $0x38] sm:$0xff] %vm933, %v900
      %942 = vst.msk [vmem:[%s276] sm:$0xff] %vm933, %v925
      %943 = vst.msk [vmem:[%s276 + $0x8] sm:$0xff] %vm933, %v926
      %944 = vst.msk [vmem:[%s276 + $0x10] sm:$0xff] %vm933, %v927
      %945 = vst.msk [vmem:[%s276 + $0x18] sm:$0xff] %vm933, %v928
      %946 = vst.msk [vmem:[%s276 + $0x20] sm:$0xff] %vm933, %v929
      %947 = vst.msk [vmem:[%s276 + $0x28] sm:$0xff] %vm933, %v930
      %948 = vst.msk [vmem:[%s276 + $0x30] sm:$0xff] %vm933, %v931
      %949 = vst.msk [vmem:[%s276 + $0x38] sm:$0xff] %vm933, %v932
      %p950 = scmp.lt.s32.totalorder %s18, 1
      %s951 = scalar_select %p950, %s18, 1
      %s952 = smul.addr %s951, 8
      %s953 = smul.addr %s952, 8
      %s954 = scalar_lea.vmem %s4, %s953
      %p955 = scmp.lt.s32.totalorder %s18, 1
      %s956 = scalar_select %p955, %s18, 1
      %s957 = smul.addr %s956, 8
      %s958 = smul.addr %s957, 8
      %s959 = scalar_lea.vmem %s5, %s958
      %p960 = scmp.lt.s32.totalorder %s18, 1
      %s961 = scalar_select %p960, %s18, 1
      %s962 = smul.addr %s961, 8
      %s963 = smul.addr %s962, 8
      %s964 = scalar_lea.vmem %s6, %s963
      // Predicated region
      $region37: #{rec_discriminator_forward.7} parent=35 // pred_check
        %p965 = pneg %p125
      $region38: #{rec_discriminator_forward.7} parent=35 // pred_check_branch
        %967 = sbr.rel (%p965) target = $region40
      $region39: #{rec_discriminator_forward.7} parent=35 // pred_region
        _
      $region40: #{rec_discriminator_forward.7} parent=35 // pred_fallthru
        _
      // Predicated region
      $region41: #{rec_discriminator_forward.7} parent=35 // pred_check
        %p968 = pneg %p151
      $region42: #{rec_discriminator_forward.7} parent=35 // pred_check_branch
        %970 = sbr.rel (%p968) target = $region44
      $region43: #{rec_discriminator_forward.7} parent=35 // pred_region
        _
      $region44: #{rec_discriminator_forward.7} parent=35 // pred_fallthru
        _
      // Predicated region
      $region45: #{rec_discriminator_forward.7} parent=35 // pred_check
        %p971 = pneg %p177
      $region46: #{rec_discriminator_forward.7} parent=35 // pred_check_branch
        %973 = sbr.rel (%p971) target = $region48
      $region47: #{rec_discriminator_forward.7} parent=35 // pred_region
        _
      $region48: #{rec_discriminator_forward.7} parent=35 // pred_fallthru
        _
    $region36: #{rec_discriminator_forward.7} parent=5 // pred_fallthru
      _
    %p974 = scmp.le.s32.totalorder 2, %s13
    // Predicated region
    $region49: #{rec_discriminator_forward.7} parent=5 // pred_check
      %p975 = pneg %p974
    $region50: #{rec_discriminator_forward.7} parent=5 // pred_check_branch
      %977 = sbr.rel (%p975) target = $region52
    $region51: #{rec_discriminator_forward.7} parent=5 // pred_region
      %s978 = ssub.s32 %s13, 2
      // Predicated region
      $region53: #{rec_discriminator_forward.7} parent=51 // pred_check
        %p979 = pneg %p131
      $region54: #{rec_discriminator_forward.7} parent=51 // pred_check_branch
        %981 = sbr.rel (%p979) target = $region56
      $region55: #{rec_discriminator_forward.7} parent=51 // pred_region
        %p982 = scmp.lt.s32.totalorder %s19, 1
        %s983 = scalar_select %p982, %s19, 1
        %s984 = smul.addr %s983, 8
        %s985 = smul.addr %s984, 8
        %s986 = scalar_lea.vmem %s4, %s985
      $region56: #{rec_discriminator_forward.7} parent=51 // pred_fallthru
        _
      // Predicated region
      $region57: #{rec_discriminator_forward.7} parent=51 // pred_check
        %p987 = pneg %p157
      $region58: #{rec_discriminator_forward.7} parent=51 // pred_check_branch
        %989 = sbr.rel (%p987) target = $region60
      $region59: #{rec_discriminator_forward.7} parent=51 // pred_region
        %p990 = scmp.lt.s32.totalorder %s19, 1
        %s991 = scalar_select %p990, %s19, 1
        %s992 = smul.addr %s991, 8
        %s993 = smul.addr %s992, 8
        %s994 = scalar_lea.vmem %s5, %s993
      $region60: #{rec_discriminator_forward.7} parent=51 // pred_fallthru
        _
      // Predicated region
      $region61: #{rec_discriminator_forward.7} parent=51 // pred_check
        %p995 = pneg %p183
      $region62: #{rec_discriminator_forward.7} parent=51 // pred_check_branch
        %997 = sbr.rel (%p995) target = $region64
      $region63: #{rec_discriminator_forward.7} parent=51 // pred_region
        %p998 = scmp.lt.s32.totalorder %s19, 1
        %s999 = scalar_select %p998, %s19, 1
        %s1000 = smul.addr %s999, 8
        %s1001 = smul.addr %s1000, 8
        %s1002 = scalar_lea.vmem %s6, %s1001
      $region64: #{rec_discriminator_forward.7} parent=51 // pred_fallthru
        _
    $region52: #{rec_discriminator_forward.7} parent=5 // pred_fallthru
      _
  $region6: #{rec_discriminator_forward.7} parent=0 // loop_footer
    %s17 = sadd.s32 1, %s13
  $region7: #{rec_discriminator_forward.7} parent=0 // loop_footer_branch
    %12 = sbr.rel target = $region3
  $region8: #{rec_discriminator_forward.7} parent=0 // loop_exit
    _

</llo_original>
